<compile_context>
chip_gen: v5e
topology: v5e:2x2
jax: 0.10.0
libtpu: 0.0.40
codegen_flags: <defaults>
</compile_context>

<pallas_src>
import math

import numpy as np
import jax
import jax.numpy as jnp
from jax import lax
from jax.experimental import pallas as pl
from jax.experimental.pallas import tpu as pltpu

# ----------------------------- configuration ---------------------------------
N_PAGES = 8           # n_samples after refold('page', 'line')
SEQ = 7               # lines per page (SEQ + 1 CLS = 8 -> clean sublane tile)
D = 32                # input_size
H = 2                 # num_heads
DH = D // H           # head_size (default: input_size // num_heads)
P = 16                # n_relative_positions
L = 2                 # n_layers
T = SEQ + 1           # sequence length including the "empty_embed" CLS token
PPB = 4               # pages per grid block (sublane batching, review item 5)
NB = N_PAGES // PPB   # grid size (page blocks, "parallel" for v7x megacore)
NT_BLK = PPB * T      # flattened rows per block (32)
INIT_RESWEIGHT = 0.5  # non-zero so residual-gated branches actually contribute
LN_EPS = 1e-5         # torch.nn.LayerNorm default
NEG_INF = -1e9


# --------------------------- in-kernel helpers --------------------------------
def _gelu(x):
    # tanh-based GELU (EUP slot).  TODO(synk): torch's default GELU is the exact
    # erf form; the tanh approximation differs by <1e-3 absolute.
    return 0.5 * x * (1.0 + jnp.tanh(0.7978845608028654 * (x + 0.044715 * x * x * x)))


def _layer_norm(x, gamma, beta):
    mu = jnp.mean(x, axis=-1, keepdims=True)
    xc = x - mu
    var = jnp.mean(xc * xc, axis=-1, keepdims=True)
    return xc * lax.rsqrt(var + LN_EPS) * gamma + beta


# ------------------------------- Pallas kernel --------------------------------
def box_transformer_kernel(
    x_ref,        # (NT_BLK, D)        CLS-augmented embeddings, PPB pages flattened
    bias_ref,     # (L, NT_BLK, 2*NT_BLK) additive mask (block-diag + key pad + head bias)
    gk_ref,       # (L, PPB, T, T, D)  PE key embeddings, head-packed along D
    gq_ref,       # (L, PPB, T, T, D)  PE query embeddings, head-packed, pre-scaled
    scat_ref,     # (H, T, 2*NT_BLK)   constant scatter of per-page pos blocks -> key axis
    wq_ref, bq_ref,       # (L, D, D), (L, 1, D)     scale folded in
    wkv_ref, bkv_ref,     # (L, D, 2D), (L, 1, 2D)
    ln1g_ref, ln1b_ref,   # (L, 1, D)
    w1_ref, b1_ref,       # (L, D, 2D), (L, 1, 2D)
    w2_ref, b2_ref,       # (L, 2D, D), (L, 1, D)
    ln2g_ref, ln2b_ref,   # (L, 1, D)
    resw_ref,             # (L, 2)  SMEM residual-gate scalars
    out_ref,              # (NT_BLK, D)
):
    x = x_ref[...]

    # constant lane masks / segment indicators, hoisted out of the layer loop
    lane_d = lax.broadcasted_iota(jnp.int32, (1, D), 1)
    hm0 = (lane_d < DH).astype(jnp.float32)                    # head-0 lanes of D
    hm1 = 1.0 - hm0
    lane_k = lax.broadcasted_iota(jnp.int32, (1, H * NT_BLK), 1)
    seg0 = (lane_k < NT_BLK).astype(jnp.float32)                # head-0 key segment
    seg1 = 1.0 - seg0

    for l in range(L):                                          # static unroll over layers
        # content projections (dropout_p = 0 -> identity dropout); Q carries 1/sqrt(DH)
        q = jnp.dot(x, wq_ref[l], preferred_element_type=jnp.float32) + bq_ref[l]
        kv = jnp.dot(x, wkv_ref[l], preferred_element_type=jnp.float32) + bkv_ref[l]
        k = kv[:, :D]
        v = kv[:, D:]

        # head-stacked keys / values: rows [0:NT) keep head-0 lanes, [NT:2NT) head-1 lanes
        k_stack = jnp.concatenate([k * hm0, k * hm1], axis=0)   # (2*NT_BLK, D)
        v_stack = jnp.concatenate([v * hm0, v * hm1], axis=0)

        # c2c for BOTH heads in a single MXU contraction: (NT_BLK, 2*NT_BLK)
        c2c = lax.dot_general(q, k_stack, (((1,), (1,)), ((), ())),
                              preferred_element_type=jnp.float32)

        # c2p + p2c fused as one per-page VPU multiply + per-head lane reduce
        # (gq already carries the 1/sqrt(DH) scale; q carries it for the c2p term).
        qp = q.reshape(PPB, T, D)
        kp = k.reshape(PPB, T, D)
        e_pos = gk_ref[l] * qp[:, :, None, :] + gq_ref[l] * kp[:, None, :, :]  # (PPB,T,T,D)
        pos_h0 = jnp.sum(e_pos[..., :DH], axis=-1).reshape(NT_BLK, T)
        pos_h1 = jnp.sum(e_pos[..., DH:], axis=-1).reshape(NT_BLK, T)
        # place per-page (T,T) blocks onto the stacked key axis; cross-page entries are
        # wrong but carry the -1e9 bias below, so they vanish in the softmax.
        pos = (jnp.dot(pos_h0, scat_ref[0], preferred_element_type=jnp.float32) +
               jnp.dot(pos_h1, scat_ref[1], preferred_element_type=jnp.float32))

        logits = c2c + pos + bias_ref[l]                        # (NT_BLK, 2*NT_BLK)
        m = jnp.max(logits, axis=-1, keepdims=True)             # joint max over both heads
        e = jnp.exp(logits - m)
        d0 = jnp.sum(e * seg0, axis=-1, keepdims=True)          # per-head denominators
        d1 = jnp.sum(e * seg1, axis=-1, keepdims=True)
        inv = (pl.reciprocal(d0, approx=True) * seg0 +
               pl.reciprocal(d1, approx=True) * seg1)
        w = e * inv

        # pooled values for both heads in one matmul; disjoint lane support sums heads.
        upd = jnp.dot(w, v_stack, preferred_element_type=jnp.float32)          # (NT_BLK, D)

        # residual gate + layernorm
        x = _layer_norm(x + upd * resw_ref[l, 0], ln1g_ref[l], ln1b_ref[l])

        # linear -> GELU -> linear
        hid = _gelu(jnp.dot(x, w1_ref[l], preferred_element_type=jnp.float32) + b1_ref[l])
        upd2 = jnp.dot(hid, w2_ref[l], preferred_element_type=jnp.float32) + b2_ref[l]

        x = _layer_norm(x + upd2 * resw_ref[l, 1], ln2g_ref[l], ln2b_ref[l])

    out_ref[...] = x


# ------------------------------ plain-JAX glue ---------------------------------
def compute_pdf_relative_positions(x0, x1, y0, y1, width, height, n_rel):
    # TODO(synk): edspdf's exact ceil/floor/offset tie-breaking heuristic is
    # approximated; result is the documented integer (dx, dy) capped to +-n_rel//2.
    dx = (x0[:, None, :] - x0[:, :, None]) / width[:, :, None] * n_rel
    dx = jnp.trunc(dx).astype(jnp.int32)
    line_h = jnp.maximum(y1 - y0, 1e-6)
    dyy = y0[:, None, :] - y0[:, :, None]
    ref_h = jnp.where(dyy >= 0, line_h[:, :, None], line_h[:, None, :])
    dy = jnp.round(dyy / ref_h).astype(jnp.int32)
    rel = jnp.stack([dx, dy], axis=-1)
    half = n_rel // 2
    return jnp.clip(rel, -half, half - 1)


def gather_position_terms(pe, wpk, bpk, wpq, bpq, rel, no_pos_mask):
    """Gather per-(query,key) relative-position key/query embeddings (glue).

    Returns (N, T, T, H, DH) tensors, summed over the 2 coordinates and zeroed
    where `no_position_mask` disables position terms (CLS rows/cols)."""
    pe_k = (pe @ wpk + bpk).reshape(P, 2, H, DH)
    pe_q = (pe @ wpq + bpq).reshape(P, 2, H, DH)
    half = P // 2
    idx_pos = jnp.clip(rel + half, 0, P - 1)       # key position relative to query
    idx_neg = jnp.clip(-rel + half, 0, P - 1)      # query position relative to key
    gk = pe_k[idx_pos[..., 0], 0] + pe_k[idx_pos[..., 1], 1]
    gq = pe_q[idx_neg[..., 0], 0] + pe_q[idx_neg[..., 1], 1]
    enable = (1.0 - no_pos_mask)[..., None, None]
    return gk * enable, gq * enable


def prepare_inputs(data, line_mask, boxes, p):
    n = data.shape[0]
    scale = 1.0 / math.sqrt(DH)

    # data_with_cls = cat([empty_embed, data]); mask_with_cls = cat([1, mask])
    cls = jnp.broadcast_to(p["empty_embed"][None, None, :], (n, 1, D))
    x = jnp.concatenate([cls, data], axis=1)                               # (N, T, D)
    mask = jnp.concatenate([jnp.ones((n, 1), jnp.float32), line_mask], 1)  # (N, T)

    rel_lines = compute_pdf_relative_positions(
        boxes["xmin"], boxes["xmax"], boxes["ymin"], boxes["ymax"],
        boxes["width"], boxes["height"], P)
    rel = jnp.zeros((n, T, T, 2), jnp.int32).at[:, 1:, 1:, :].set(rel_lines)
    no_pos = jnp.ones((n, T, T), jnp.float32).at[:, 1:, 1:].set(0.0)

    gks, gqs = [], []
    for l in range(L):
        gk, gq = gather_position_terms(p["pe"], p["wpk"][l], p["bpk"][l],
                                       p["wpq"][l], p["bpq"][l], rel, no_pos)
        gks.append(gk)
        gqs.append(gq)
    gk_all = jnp.stack(gks)    # (L, N, T, T, H, DH)  -- unscaled, for the reference
    gq_all = jnp.stack(gqs)

    # ---- kernel operands (head-packed, NOT block-diagonally expanded) ----
    gk_packed = gk_all.reshape(L, n, T, T, D)
    gq_packed = gq_all.reshape(L, n, T, T, D) * scale   # fold 1/sqrt(DH) for p2c

    xf = x.reshape(n * T, D)

    # per-block additive bias: block-diagonal over pages, key padding, head-stacked
    # along the key axis, with the per-layer/head attention bias folded in.
    validb = mask.reshape(NB, NT_BLK)
    page_in_block = jnp.repeat(jnp.arange(PPB), T)                  # (NT_BLK,)
    same = page_in_block[:, None] == page_in_block[None, :]         # (NT_BLK, NT_BLK)
    base = jnp.where(same[None, :, :] & (validb[:, None, :] > 0.0),
                     0.0, NEG_INF).astype(jnp.float32)              # (NB, NT_BLK, NT_BLK)
    bias_heads = jnp.concatenate(
        [base[:, None] + p["hbias"][None, :, h, None, None] for h in range(H)],
        axis=-1)                                                    # (NB, L, NT_BLK, 2*NT_BLK)
    bias_full = jnp.transpose(bias_heads, (1, 0, 2, 3)).reshape(L, n * T, H * NT_BLK)

    # constant scatter matrices placing per-page (T,T) position logits onto the
    # block's head-stacked key axis (tile over pages; cross-page killed by bias).
    tile_eye = jnp.tile(jnp.eye(T, dtype=jnp.float32), (1, PPB))    # (T, NT_BLK)
    zero = jnp.zeros_like(tile_eye)
    scat = jnp.stack([jnp.concatenate([tile_eye, zero], axis=1),
                      jnp.concatenate([zero, tile_eye], axis=1)])   # (H, T, 2*NT_BLK)

    return x, mask, gk_all, gq_all, xf, bias_full, gk_packed, gq_packed, scat


def pallas_forward(xf, bias_full, gk_packed, gq_packed, scat, p):
    n_rows = xf.shape[0]
    out = pl.pallas_call(
        box_transformer_kernel,
        out_shape=jax.ShapeDtypeStruct((n_rows, D), jnp.float32),
        grid=(NB,),
        in_specs=[
            pl.BlockSpec((NT_BLK, D), lambda b: (b, 0)),                    # x
            pl.BlockSpec((L, NT_BLK, H * NT_BLK), lambda b: (0, b, 0)),     # bias
            pl.BlockSpec((L, PPB, T, T, D), lambda b: (0, b, 0, 0, 0)),     # gk
            pl.BlockSpec((L, PPB, T, T, D), lambda b: (0, b, 0, 0, 0)),     # gq
            pl.BlockSpec((H, T, H * NT_BLK), lambda b: (0, 0, 0)),          # scat
            pl.BlockSpec((L, D, D), lambda b: (0, 0, 0)),                   # wq (scaled)
            pl.BlockSpec((L, 1, D), lambda b: (0, 0, 0)),                   # bq (scaled)
            pl.BlockSpec((L, D, 2 * D), lambda b: (0, 0, 0)),               # wkv
            pl.BlockSpec((L, 1, 2 * D), lambda b: (0, 0, 0)),               # bkv
            pl.BlockSpec((L, 1, D), lambda b: (0, 0, 0)),                   # ln1 gamma
            pl.BlockSpec((L, 1, D), lambda b: (0, 0, 0)),                   # ln1 beta
            pl.BlockSpec((L, D, 2 * D), lambda b: (0, 0, 0)),               # w1
            pl.BlockSpec((L, 1, 2 * D), lambda b: (0, 0, 0)),               # b1
            pl.BlockSpec((L, 2 * D, D), lambda b: (0, 0, 0)),               # w2
            pl.BlockSpec((L, 1, D), lambda b: (0, 0, 0)),                   # b2
            pl.BlockSpec((L, 1, D), lambda b: (0, 0, 0)),                   # ln2 gamma
            pl.BlockSpec((L, 1, D), lambda b: (0, 0, 0)),                   # ln2 beta
            pl.BlockSpec(memory_space=pltpu.MemorySpace.SMEM),              # resweights
        ],
        out_specs=pl.BlockSpec((NT_BLK, D), lambda b: (b, 0)),
        compiler_params=pltpu.CompilerParams(
            dimension_semantics=("parallel",)),
    )(
        xf, bias_full, gk_packed, gq_packed, scat,
        p["wq_s"], p["bq_s"], p["wkv"], p["bkv"],
        p["ln1_g"].reshape(L, 1, D), p["ln1_b"].reshape(L, 1, D),
        p["w1"], p["b1"].reshape(L, 1, 2 * D),
        p["w2"], p["b2"].reshape(L, 1, D),
        p["ln2_g"].reshape(L, 1, D), p["ln2_b"].reshape(L, 1, D),
        p["resw"],
    )
    # BoxTransformerModule returns embeds.with_data(data_with_cls[:, 1:])
    return out.reshape(N_PAGES, T, D)[:, 1:]


# -------------------------- pure-JAX reference (check) -------------------------
def reference_forward(x, mask, gk_all, gq_all, p):
    scale = 1.0 / math.sqrt(DH)
    n = x.shape[0]
    for l in range(L):
        q = (x @ p["wq"][l] + p["bq"][l]).reshape(n, T, H, DH)
        k = (x @ p["wk"][l] + p["bk"][l]).reshape(n, T, H, DH)
        v = (x @ p["wv"][l] + p["bv"][l]).reshape(n, T, H, DH)
        logits = jnp.einsum("nihd,njhd->nijh", q, k)
        logits = logits + jnp.einsum("nihd,nijhd->nijh", q, gk_all[l])
        logits = logits + jnp.einsum("nijhd,njhd->nijh", gq_all[l], k)
        logits = logits * scale + p["hbias"][l][None, None, None, :]
        logits = jnp.where(mask[:, None, :, None] > 0.0, logits, NEG_INF)
        w = jax.nn.softmax(logits, axis=2)
        upd = jnp.einsum("nijh,njhd->nihd", w, v).reshape(n, T, D)
        x = _layer_norm(x + upd * p["resw"][l, 0], p["ln1_g"][l], p["ln1_b"][l])
        hid = _gelu(x @ p["w1"][l] + p["b1"][l])
        upd2 = hid @ p["w2"][l] + p["b2"][l]
        x = _layer_norm(x + upd2 * p["resw"][l, 1], p["ln2_g"][l], p["ln2_b"][l])
    return x[:, 1:]


# ------------------------------ parameter setup --------------------------------
def init_params(key):
    ks = iter(jax.random.split(key, 24))

    def linear(fan_in, fan_out):
        w = jax.random.normal(next(ks), (L, fan_in, fan_out), jnp.float32) / math.sqrt(fan_in)
        b = jax.random.normal(next(ks), (L, fan_out), jnp.float32) * 0.02
        return w, b

    p = {}
    p["empty_embed"] = jax.random.normal(next(ks), (D,), jnp.float32)
    p["pe"] = jax.random.normal(next(ks), (P, D), jnp.float32)          # shared across layers
    p["wq"], p["bq"] = linear(D, D)          # content_query_proj
    p["wk"], p["bk"] = linear(D, D)          # content_key_proj
    p["wv"], p["bv"] = linear(D, D)          # content_value_proj
    p["wpk"], p["bpk"] = linear(D, 2 * D)    # position_key_proj   (n_coordinates * H * DH)
    p["wpq"], p["bpq"] = linear(D, 2 * D)    # position_query_proj
    p["w1"], p["b1"] = linear(D, 2 * D)      # linear1
    p["w2"], p["b2"] = linear(2 * D, D)      # linear2
    p["ln1_g"] = jnp.ones((L, D), jnp.float32)
    p["ln1_b"] = jnp.zeros((L, D), jnp.float32)
    p["ln2_g"] = jnp.ones((L, D), jnp.float32)
    p["ln2_b"] = jnp.zeros((L, D), jnp.float32)
    p["hbias"] = jnp.zeros((L, H), jnp.float32)                          # attention head bias
    p["resw"] = jnp.full((L, 2), INIT_RESWEIGHT, jnp.float32)            # resweight, resweight2
    return p


def pack_params(p):
    p = dict(p)
    scale = 1.0 / math.sqrt(DH)
    p["wq_s"] = p["wq"] * scale                                           # fold 1/sqrt(DH)
    p["bq_s"] = (p["bq"] * scale).reshape(L, 1, D)
    p["wkv"] = jnp.concatenate([p["wk"], p["wv"]], axis=-1)               # (L, D, 2D)
    p["bkv"] = jnp.concatenate([p["bk"], p["bv"]], axis=-1).reshape(L, 1, 2 * D)
    return p


# ------------------------------------ main --------------------------------------
if __name__ == "__main__":
    assert N_PAGES % PPB == 0

    key = jax.random.PRNGKey(0)
    k_data, k_box, k_par = jax.random.split(key, 3)

    # embeds refolded to ('page', 'line'): dense (N, SEQ, D) + padding mask
    data = jax.random.normal(k_data, (N_PAGES, SEQ, D), jnp.float32)
    valid_counts = jnp.array([7, 5, 7, 3, 6, 7, 2, 4], jnp.int32)
    line_mask = (jnp.arange(SEQ)[None, :] < valid_counts[:, None]).astype(jnp.float32)
    data = data * line_mask[..., None]       # FoldedTensor pads with zeros

    kb = jax.random.split(k_box, 3)
    x0 = jax.random.uniform(kb[0], (N_PAGES, SEQ), minval=0.0, maxval=0.7)
    x1 = x0 + jax.random.uniform(kb[1], (N_PAGES, SEQ), minval=0.05, maxval=0.3)
    y0 = jnp.broadcast_to(jnp.arange(SEQ, dtype=jnp.float32)[None, :] * 0.1, (N_PAGES, SEQ))
    y0 = y0 + jax.random.uniform(kb[2], (N_PAGES, SEQ), maxval=0.02)
    y1 = y0 + 0.08
    boxes = dict(xmin=x0, xmax=x1, ymin=y0, ymax=y1,
                 width=jnp.ones((N_PAGES, SEQ), jnp.float32),
                 height=jnp.ones((N_PAGES, SEQ), jnp.float32))

    params = pack_params(init_params(k_par))

    (x, mask, gk_all, gq_all,
     xf, bias_full, gk_packed, gq_packed, scat) = prepare_inputs(data, line_mask, boxes, params)

    out = pallas_forward(xf, bias_full, gk_packed, gq_packed, scat, params)
    out = jax.block_until_ready(out)

    ref = reference_forward(x, mask, gk_all, gq_all, params)
    np.testing.assert_allclose(np.asarray(out), np.asarray(ref), rtol=2e-2, atol=1e-2)
    assert out.shape == (N_PAGES, SEQ, D)
    print("KERNEL_OK")
</pallas_src>

<mosaic_0001>
module attributes {stable_mosaic.version = 11 : i64} {
  func.func @box_transformer_kernel(%arg0: i32, %arg1: memref<32x32xf32, #tpu.memory_space<vmem>>, %arg2: memref<2x32x64xf32, #tpu.memory_space<vmem>>, %arg3: memref<2x4x8x8x32xf32, #tpu.memory_space<vmem>>, %arg4: memref<2x4x8x8x32xf32, #tpu.memory_space<vmem>>, %arg5: memref<2x8x64xf32, #tpu.memory_space<vmem>>, %arg6: memref<2x32x32xf32, #tpu.memory_space<vmem>>, %arg7: memref<2x1x32xf32, #tpu.memory_space<vmem>>, %arg8: memref<2x32x64xf32, #tpu.memory_space<vmem>>, %arg9: memref<2x1x64xf32, #tpu.memory_space<vmem>>, %arg10: memref<2x1x32xf32, #tpu.memory_space<vmem>>, %arg11: memref<2x1x32xf32, #tpu.memory_space<vmem>>, %arg12: memref<2x32x64xf32, #tpu.memory_space<vmem>>, %arg13: memref<2x1x64xf32, #tpu.memory_space<vmem>>, %arg14: memref<2x64x32xf32, #tpu.memory_space<vmem>>, %arg15: memref<2x1x32xf32, #tpu.memory_space<vmem>>, %arg16: memref<2x1x32xf32, #tpu.memory_space<vmem>>, %arg17: memref<2x1x32xf32, #tpu.memory_space<vmem>>, %arg18: memref<2x2xf32, #tpu.memory_space<smem>>, %arg19: memref<32x32xf32, #tpu.memory_space<vmem>>) attributes {dimension_semantics = [#tpu.dimension_semantics<parallel>], iteration_bounds = array<i64: 2>, scalar_prefetch = 0 : i64, scratch_operands = 0 : i64, tpu.core_type = #tpu.core_type<tc>, window_params = [{transform_indices = @transform_0, window_bounds = array<i64: 32, 32>}, {transform_indices = @transform_1, window_bounds = array<i64: 2, 32, 64>}, {transform_indices = @transform_2, window_bounds = array<i64: 2, 4, 8, 8, 32>}, {transform_indices = @transform_3, window_bounds = array<i64: 2, 4, 8, 8, 32>}, {pipeline_mode = #tpu.pipeline_mode<synchronous>, transform_indices = @transform_4, window_bounds = array<i64: 2, 8, 64>}, {pipeline_mode = #tpu.pipeline_mode<synchronous>, transform_indices = @transform_5, window_bounds = array<i64: 2, 32, 32>}, {pipeline_mode = #tpu.pipeline_mode<synchronous>, transform_indices = @transform_6, window_bounds = array<i64: 2, 1, 32>}, {pipeline_mode = #tpu.pipeline_mode<synchronous>, transform_indices = @transform_7, window_bounds = array<i64: 2, 32, 64>}, {pipeline_mode = #tpu.pipeline_mode<synchronous>, transform_indices = @transform_8, window_bounds = array<i64: 2, 1, 64>}, {pipeline_mode = #tpu.pipeline_mode<synchronous>, transform_indices = @transform_9, window_bounds = array<i64: 2, 1, 32>}, {pipeline_mode = #tpu.pipeline_mode<synchronous>, transform_indices = @transform_10, window_bounds = array<i64: 2, 1, 32>}, {pipeline_mode = #tpu.pipeline_mode<synchronous>, transform_indices = @transform_11, window_bounds = array<i64: 2, 32, 64>}, {pipeline_mode = #tpu.pipeline_mode<synchronous>, transform_indices = @transform_12, window_bounds = array<i64: 2, 1, 64>}, {pipeline_mode = #tpu.pipeline_mode<synchronous>, transform_indices = @transform_13, window_bounds = array<i64: 2, 64, 32>}, {pipeline_mode = #tpu.pipeline_mode<synchronous>, transform_indices = @transform_14, window_bounds = array<i64: 2, 1, 32>}, {pipeline_mode = #tpu.pipeline_mode<synchronous>, transform_indices = @transform_15, window_bounds = array<i64: 2, 1, 32>}, {pipeline_mode = #tpu.pipeline_mode<synchronous>, transform_indices = @transform_16, window_bounds = array<i64: 2, 1, 32>}, {transform_indices = @transform_17, window_bounds = array<i64: 2, 2>}, {transform_indices = @transform_18, window_bounds = array<i64: 32, 32>}]} {
    %c0 = arith.constant 0 : index
    %c0_0 = arith.constant 0 : index
    %0 = vector.load %arg1[%c0, %c0_0] : memref<32x32xf32, #tpu.memory_space<vmem>>, vector<32x32xf32>
    %1 = tpu.iota {dimensions = array<i32: 1>} : vector<1x32xi32>
    %c16_i32 = arith.constant 16 : i32
    %2 = vector.broadcast %c16_i32 : i32 to vector<1x32xi32>
    %3 = arith.cmpi slt, %1, %2 : vector<1x32xi32>
    %4 = arith.extui %3 : vector<1x32xi1> to vector<1x32xi32>
    %5 = arith.sitofp %4 : vector<1x32xi32> to vector<1x32xf32>
    %cst = arith.constant 1.000000e+00 : f32
    %6 = vector.broadcast %cst : f32 to vector<1x32xf32>
    %7 = arith.subf %6, %5 : vector<1x32xf32>
    %8 = tpu.iota {dimensions = array<i32: 1>} : vector<1x64xi32>
    %c32_i32 = arith.constant 32 : i32
    %9 = vector.broadcast %c32_i32 : i32 to vector<1x64xi32>
    %10 = arith.cmpi slt, %8, %9 : vector<1x64xi32>
    %11 = arith.extui %10 : vector<1x64xi1> to vector<1x64xi32>
    %12 = arith.sitofp %11 : vector<1x64xi32> to vector<1x64xf32>
    %cst_1 = arith.constant 1.000000e+00 : f32
    %13 = vector.broadcast %cst_1 : f32 to vector<1x64xf32>
    %14 = arith.subf %13, %12 : vector<1x64xf32>
    %c0_2 = arith.constant 0 : index
    %c0_3 = arith.constant 0 : index
    %c0_4 = arith.constant 0 : index
    %15 = vector.load %arg6[%c0_2, %c0_3, %c0_4] : memref<2x32x32xf32, #tpu.memory_space<vmem>>, vector<1x32x32xf32>
    %16 = vector.shape_cast %15 : vector<1x32x32xf32> to vector<32x32xf32>
    %cst_5 = arith.constant dense<0.000000e+00> : vector<32x32xf32>
    %17 = tpu.matmul %0, %16, %cst_5 {dimension_numbers = #tpu.dot_dimension_numbers<[1], [0], [0], [1], [0, 0, 1, 1], [], []>} : vector<32x32xf32>, vector<32x32xf32>, vector<32x32xf32> -> vector<32x32xf32>
    %c0_6 = arith.constant 0 : index
    %c0_7 = arith.constant 0 : index
    %c0_8 = arith.constant 0 : index
    %18 = vector.load %arg7[%c0_6, %c0_7, %c0_8] : memref<2x1x32xf32, #tpu.memory_space<vmem>>, vector<1x1x32xf32>
    %19 = vector.shape_cast %18 : vector<1x1x32xf32> to vector<1x32xf32>
    %20 = vector.broadcast %19 : vector<1x32xf32> to vector<32x32xf32>
    %21 = arith.addf %17, %20 : vector<32x32xf32>
    %c0_9 = arith.constant 0 : index
    %c0_10 = arith.constant 0 : index
    %c0_11 = arith.constant 0 : index
    %22 = vector.load %arg8[%c0_9, %c0_10, %c0_11] : memref<2x32x64xf32, #tpu.memory_space<vmem>>, vector<1x32x64xf32>
    %23 = vector.shape_cast %22 : vector<1x32x64xf32> to vector<32x64xf32>
    %cst_12 = arith.constant dense<0.000000e+00> : vector<32x64xf32>
    %24 = tpu.matmul %0, %23, %cst_12 {dimension_numbers = #tpu.dot_dimension_numbers<[1], [0], [0], [1], [0, 0, 1, 1], [], []>} : vector<32x32xf32>, vector<32x64xf32>, vector<32x64xf32> -> vector<32x64xf32>
    %c0_13 = arith.constant 0 : index
    %c0_14 = arith.constant 0 : index
    %c0_15 = arith.constant 0 : index
    %25 = vector.load %arg9[%c0_13, %c0_14, %c0_15] : memref<2x1x64xf32, #tpu.memory_space<vmem>>, vector<1x1x64xf32>
    %26 = vector.shape_cast %25 : vector<1x1x64xf32> to vector<1x64xf32>
    %27 = vector.broadcast %26 : vector<1x64xf32> to vector<32x64xf32>
    %28 = arith.addf %24, %27 : vector<32x64xf32>
    %29 = vector.extract_strided_slice %28 {offsets = [0, 0], sizes = [32, 32], strides = [1, 1]} : vector<32x64xf32> to vector<32x32xf32>
    %30 = vector.extract_strided_slice %28 {offsets = [0, 32], sizes = [32, 32], strides = [1, 1]} : vector<32x64xf32> to vector<32x32xf32>
    %31 = vector.broadcast %5 : vector<1x32xf32> to vector<32x32xf32>
    %32 = arith.mulf %29, %31 : vector<32x32xf32>
    %33 = vector.broadcast %7 : vector<1x32xf32> to vector<32x32xf32>
    %34 = arith.mulf %29, %33 : vector<32x32xf32>
    %35 = tpu.concatenate %32, %34 in 0 : vector<32x32xf32>, vector<32x32xf32> -> vector<64x32xf32>
    %36 = vector.broadcast %5 : vector<1x32xf32> to vector<32x32xf32>
    %37 = arith.mulf %30, %36 : vector<32x32xf32>
    %38 = vector.broadcast %7 : vector<1x32xf32> to vector<32x32xf32>
    %39 = arith.mulf %30, %38 : vector<32x32xf32>
    %40 = tpu.concatenate %37, %39 in 0 : vector<32x32xf32>, vector<32x32xf32> -> vector<64x32xf32>
    %cst_16 = arith.constant dense<0.000000e+00> : vector<32x64xf32>
    %41 = tpu.matmul %21, %35, %cst_16 {dimension_numbers = #tpu.dot_dimension_numbers<[1], [1], [0], [0], [0, 0, 1, 0], [], []>} : vector<32x32xf32>, vector<64x32xf32>, vector<32x64xf32> -> vector<32x64xf32>
    %42 = vector.shape_cast %21 : vector<32x32xf32> to vector<4x8x32xf32>
    %43 = vector.shape_cast %29 : vector<32x32xf32> to vector<4x8x32xf32>
    %c0_17 = arith.constant 0 : index
    %c0_18 = arith.constant 0 : index
    %c0_19 = arith.constant 0 : index
    %c0_20 = arith.constant 0 : index
    %c0_21 = arith.constant 0 : index
    %44 = vector.load %arg3[%c0_17, %c0_18, %c0_19, %c0_20, %c0_21] : memref<2x4x8x8x32xf32, #tpu.memory_space<vmem>>, vector<1x4x8x8x32xf32>
    %45 = vector.shape_cast %44 : vector<1x4x8x8x32xf32> to vector<4x8x8x32xf32>
    %46 = vector.shape_cast %42 : vector<4x8x32xf32> to vector<4x8x1x32xf32>
    %47 = vector.broadcast %46 : vector<4x8x1x32xf32> to vector<4x8x8x32xf32>
    %48 = arith.mulf %45, %47 : vector<4x8x8x32xf32>
    %c0_22 = arith.constant 0 : index
    %c0_23 = arith.constant 0 : index
    %c0_24 = arith.constant 0 : index
    %c0_25 = arith.constant 0 : index
    %c0_26 = arith.constant 0 : index
    %49 = vector.load %arg4[%c0_22, %c0_23, %c0_24, %c0_25, %c0_26] : memref<2x4x8x8x32xf32, #tpu.memory_space<vmem>>, vector<1x4x8x8x32xf32>
    %50 = vector.shape_cast %49 : vector<1x4x8x8x32xf32> to vector<4x8x8x32xf32>
    %51 = vector.shape_cast %43 : vector<4x8x32xf32> to vector<4x1x8x32xf32>
    %52 = vector.broadcast %51 : vector<4x1x8x32xf32> to vector<4x8x8x32xf32>
    %53 = arith.mulf %50, %52 : vector<4x8x8x32xf32>
    %54 = arith.addf %48, %53 : vector<4x8x8x32xf32>
    %55 = vector.extract_strided_slice %54 {offsets = [0, 0, 0, 0], sizes = [4, 8, 8, 16], strides = [1, 1, 1, 1]} : vector<4x8x8x32xf32> to vector<4x8x8x16xf32>
    %cst_27 = arith.constant dense<0.000000e+00> : vector<4x8x8xf32>
    %56 = vector.multi_reduction <add>, %55, %cst_27 [3] : vector<4x8x8x16xf32> to vector<4x8x8xf32>
    %57 = vector.shape_cast %56 : vector<4x8x8xf32> to vector<32x8xf32>
    %58 = vector.extract_strided_slice %54 {offsets = [0, 0, 0, 16], sizes = [4, 8, 8, 16], strides = [1, 1, 1, 1]} : vector<4x8x8x32xf32> to vector<4x8x8x16xf32>
    %cst_28 = arith.constant dense<0.000000e+00> : vector<4x8x8xf32>
    %59 = vector.multi_reduction <add>, %58, %cst_28 [3] : vector<4x8x8x16xf32> to vector<4x8x8xf32>
    %60 = vector.shape_cast %59 : vector<4x8x8xf32> to vector<32x8xf32>
    %c0_29 = arith.constant 0 : index
    %c0_30 = arith.constant 0 : index
    %c0_31 = arith.constant 0 : index
    %61 = vector.load %arg5[%c0_29, %c0_30, %c0_31] : memref<2x8x64xf32, #tpu.memory_space<vmem>>, vector<1x8x64xf32>
    %62 = vector.shape_cast %61 : vector<1x8x64xf32> to vector<8x64xf32>
    %cst_32 = arith.constant dense<0.000000e+00> : vector<32x64xf32>
    %63 = tpu.matmul %57, %62, %cst_32 {dimension_numbers = #tpu.dot_dimension_numbers<[1], [0], [0], [1], [0, 0, 1, 1], [], []>} : vector<32x8xf32>, vector<8x64xf32>, vector<32x64xf32> -> vector<32x64xf32>
    %c1 = arith.constant 1 : index
    %c0_33 = arith.constant 0 : index
    %c0_34 = arith.constant 0 : index
    %64 = vector.load %arg5[%c1, %c0_33, %c0_34] : memref<2x8x64xf32, #tpu.memory_space<vmem>>, vector<1x8x64xf32>
    %65 = vector.shape_cast %64 : vector<1x8x64xf32> to vector<8x64xf32>
    %cst_35 = arith.constant dense<0.000000e+00> : vector<32x64xf32>
    %66 = tpu.matmul %60, %65, %cst_35 {dimension_numbers = #tpu.dot_dimension_numbers<[1], [0], [0], [1], [0, 0, 1, 1], [], []>} : vector<32x8xf32>, vector<8x64xf32>, vector<32x64xf32> -> vector<32x64xf32>
    %67 = arith.addf %63, %66 : vector<32x64xf32>
    %68 = arith.addf %41, %67 : vector<32x64xf32>
    %c0_36 = arith.constant 0 : index
    %c0_37 = arith.constant 0 : index
    %c0_38 = arith.constant 0 : index
    %69 = vector.load %arg2[%c0_36, %c0_37, %c0_38] : memref<2x32x64xf32, #tpu.memory_space<vmem>>, vector<1x32x64xf32>
    %70 = vector.shape_cast %69 : vector<1x32x64xf32> to vector<32x64xf32>
    %71 = arith.addf %68, %70 : vector<32x64xf32>
    %cst_39 = arith.constant dense<0xFF800000> : vector<32xf32>
    %72 = vector.multi_reduction <maximumf>, %71, %cst_39 [1] : vector<32x64xf32> to vector<32xf32>
    %73 = vector.shape_cast %72 : vector<32xf32> to vector<32x1xf32>
    %74 = vector.broadcast %73 : vector<32x1xf32> to vector<32x64xf32>
    %75 = arith.subf %71, %74 : vector<32x64xf32>
    %76 = math.exp %75 : vector<32x64xf32>
    %77 = vector.broadcast %12 : vector<1x64xf32> to vector<32x64xf32>
    %78 = arith.mulf %76, %77 : vector<32x64xf32>
    %cst_40 = arith.constant dense<0.000000e+00> : vector<32xf32>
    %79 = vector.multi_reduction <add>, %78, %cst_40 [1] : vector<32x64xf32> to vector<32xf32>
    %80 = vector.shape_cast %79 : vector<32xf32> to vector<32x1xf32>
    %81 = vector.broadcast %14 : vector<1x64xf32> to vector<32x64xf32>
    %82 = arith.mulf %76, %81 : vector<32x64xf32>
    %cst_41 = arith.constant dense<0.000000e+00> : vector<32xf32>
    %83 = vector.multi_reduction <add>, %82, %cst_41 [1] : vector<32x64xf32> to vector<32xf32>
    %84 = vector.shape_cast %83 : vector<32xf32> to vector<32x1xf32>
    %85 = tpu.reciprocal %80 {approx = true} : vector<32x1xf32> -> vector<32x1xf32>
    %86 = vector.broadcast %85 : vector<32x1xf32> to vector<32x64xf32>
    %87 = vector.broadcast %12 : vector<1x64xf32> to vector<32x64xf32>
    %88 = arith.mulf %86, %87 : vector<32x64xf32>
    %89 = tpu.reciprocal %84 {approx = true} : vector<32x1xf32> -> vector<32x1xf32>
    %90 = vector.broadcast %89 : vector<32x1xf32> to vector<32x64xf32>
    %91 = vector.broadcast %14 : vector<1x64xf32> to vector<32x64xf32>
    %92 = arith.mulf %90, %91 : vector<32x64xf32>
    %93 = arith.addf %88, %92 : vector<32x64xf32>
    %94 = arith.mulf %76, %93 : vector<32x64xf32>
    %cst_42 = arith.constant dense<0.000000e+00> : vector<32x32xf32>
    %95 = tpu.matmul %94, %40, %cst_42 {dimension_numbers = #tpu.dot_dimension_numbers<[1], [0], [0], [1], [0, 0, 1, 1], [], []>} : vector<32x64xf32>, vector<64x32xf32>, vector<32x32xf32> -> vector<32x32xf32>
    %c0_43 = arith.constant 0 : index
    %c0_44 = arith.constant 0 : index
    %96 = memref.load %arg18[%c0_43, %c0_44] : memref<2x2xf32, #tpu.memory_space<smem>>
    %97 = vector.broadcast %96 : f32 to vector<32x32xf32>
    %98 = arith.mulf %95, %97 : vector<32x32xf32>
    %99 = arith.addf %0, %98 : vector<32x32xf32>
    %c0_45 = arith.constant 0 : index
    %c0_46 = arith.constant 0 : index
    %c0_47 = arith.constant 0 : index
    %100 = vector.load %arg10[%c0_45, %c0_46, %c0_47] : memref<2x1x32xf32, #tpu.memory_space<vmem>>, vector<1x1x32xf32>
    %101 = vector.shape_cast %100 : vector<1x1x32xf32> to vector<1x32xf32>
    %c0_48 = arith.constant 0 : index
    %c0_49 = arith.constant 0 : index
    %c0_50 = arith.constant 0 : index
    %102 = vector.load %arg11[%c0_48, %c0_49, %c0_50] : memref<2x1x32xf32, #tpu.memory_space<vmem>>, vector<1x1x32xf32>
    %103 = vector.shape_cast %102 : vector<1x1x32xf32> to vector<1x32xf32>
    %cst_51 = arith.constant dense<0.000000e+00> : vector<32xf32>
    %104 = vector.multi_reduction <add>, %99, %cst_51 [1] : vector<32x32xf32> to vector<32xf32>
    %105 = vector.shape_cast %104 : vector<32xf32> to vector<32x1xf32>
    %cst_52 = arith.constant 3.200000e+01 : f32
    %106 = vector.broadcast %cst_52 : f32 to vector<32x1xf32>
    %107 = arith.divf %105, %106 : vector<32x1xf32>
    %108 = vector.broadcast %107 : vector<32x1xf32> to vector<32x32xf32>
    %109 = arith.subf %99, %108 : vector<32x32xf32>
    %110 = arith.mulf %109, %109 : vector<32x32xf32>
    %cst_53 = arith.constant dense<0.000000e+00> : vector<32xf32>
    %111 = vector.multi_reduction <add>, %110, %cst_53 [1] : vector<32x32xf32> to vector<32xf32>
    %112 = vector.shape_cast %111 : vector<32xf32> to vector<32x1xf32>
    %cst_54 = arith.constant 3.200000e+01 : f32
    %113 = vector.broadcast %cst_54 : f32 to vector<32x1xf32>
    %114 = arith.divf %112, %113 : vector<32x1xf32>
    %cst_55 = arith.constant 9.99999974E-6 : f32
    %115 = vector.broadcast %cst_55 : f32 to vector<32x1xf32>
    %116 = arith.addf %114, %115 : vector<32x1xf32>
    %117 = math.rsqrt %116 : vector<32x1xf32>
    %118 = vector.broadcast %117 : vector<32x1xf32> to vector<32x32xf32>
    %119 = arith.mulf %109, %118 : vector<32x32xf32>
    %120 = vector.broadcast %101 : vector<1x32xf32> to vector<32x32xf32>
    %121 = arith.mulf %119, %120 : vector<32x32xf32>
    %122 = vector.broadcast %103 : vector<1x32xf32> to vector<32x32xf32>
    %123 = arith.addf %121, %122 : vector<32x32xf32>
    %c0_56 = arith.constant 0 : index
    %c0_57 = arith.constant 0 : index
    %c0_58 = arith.constant 0 : index
    %124 = vector.load %arg12[%c0_56, %c0_57, %c0_58] : memref<2x32x64xf32, #tpu.memory_space<vmem>>, vector<1x32x64xf32>
    %125 = vector.shape_cast %124 : vector<1x32x64xf32> to vector<32x64xf32>
    %cst_59 = arith.constant dense<0.000000e+00> : vector<32x64xf32>
    %126 = tpu.matmul %123, %125, %cst_59 {dimension_numbers = #tpu.dot_dimension_numbers<[1], [0], [0], [1], [0, 0, 1, 1], [], []>} : vector<32x32xf32>, vector<32x64xf32>, vector<32x64xf32> -> vector<32x64xf32>
    %c0_60 = arith.constant 0 : index
    %c0_61 = arith.constant 0 : index
    %c0_62 = arith.constant 0 : index
    %127 = vector.load %arg13[%c0_60, %c0_61, %c0_62] : memref<2x1x64xf32, #tpu.memory_space<vmem>>, vector<1x1x64xf32>
    %128 = vector.shape_cast %127 : vector<1x1x64xf32> to vector<1x64xf32>
    %129 = vector.broadcast %128 : vector<1x64xf32> to vector<32x64xf32>
    %130 = arith.addf %126, %129 : vector<32x64xf32>
    %cst_63 = arith.constant 5.000000e-01 : f32
    %131 = vector.broadcast %cst_63 : f32 to vector<32x64xf32>
    %132 = arith.mulf %131, %130 : vector<32x64xf32>
    %cst_64 = arith.constant 4.471500e-02 : f32
    %133 = vector.broadcast %cst_64 : f32 to vector<32x64xf32>
    %134 = arith.mulf %133, %130 : vector<32x64xf32>
    %135 = arith.mulf %134, %130 : vector<32x64xf32>
    %136 = arith.mulf %135, %130 : vector<32x64xf32>
    %137 = arith.addf %130, %136 : vector<32x64xf32>
    %cst_65 = arith.constant 0.797884583 : f32
    %138 = vector.broadcast %cst_65 : f32 to vector<32x64xf32>
    %139 = arith.mulf %138, %137 : vector<32x64xf32>
    %140 = math.tanh %139 : vector<32x64xf32>
    %cst_66 = arith.constant 1.000000e+00 : f32
    %141 = vector.broadcast %cst_66 : f32 to vector<32x64xf32>
    %142 = arith.addf %141, %140 : vector<32x64xf32>
    %143 = arith.mulf %132, %142 : vector<32x64xf32>
    %c0_67 = arith.constant 0 : index
    %c0_68 = arith.constant 0 : index
    %c0_69 = arith.constant 0 : index
    %144 = vector.load %arg14[%c0_67, %c0_68, %c0_69] : memref<2x64x32xf32, #tpu.memory_space<vmem>>, vector<1x64x32xf32>
    %145 = vector.shape_cast %144 : vector<1x64x32xf32> to vector<64x32xf32>
    %cst_70 = arith.constant dense<0.000000e+00> : vector<32x32xf32>
    %146 = tpu.matmul %143, %145, %cst_70 {dimension_numbers = #tpu.dot_dimension_numbers<[1], [0], [0], [1], [0, 0, 1, 1], [], []>} : vector<32x64xf32>, vector<64x32xf32>, vector<32x32xf32> -> vector<32x32xf32>
    %c0_71 = arith.constant 0 : index
    %c0_72 = arith.constant 0 : index
    %c0_73 = arith.constant 0 : index
    %147 = vector.load %arg15[%c0_71, %c0_72, %c0_73] : memref<2x1x32xf32, #tpu.memory_space<vmem>>, vector<1x1x32xf32>
    %148 = vector.shape_cast %147 : vector<1x1x32xf32> to vector<1x32xf32>
    %149 = vector.broadcast %148 : vector<1x32xf32> to vector<32x32xf32>
    %150 = arith.addf %146, %149 : vector<32x32xf32>
    %c0_74 = arith.constant 0 : index
    %c1_75 = arith.constant 1 : index
    %151 = memref.load %arg18[%c0_74, %c1_75] : memref<2x2xf32, #tpu.memory_space<smem>>
    %152 = vector.broadcast %151 : f32 to vector<32x32xf32>
    %153 = arith.mulf %150, %152 : vector<32x32xf32>
    %154 = arith.addf %123, %153 : vector<32x32xf32>
    %c0_76 = arith.constant 0 : index
    %c0_77 = arith.constant 0 : index
    %c0_78 = arith.constant 0 : index
    %155 = vector.load %arg16[%c0_76, %c0_77, %c0_78] : memref<2x1x32xf32, #tpu.memory_space<vmem>>, vector<1x1x32xf32>
    %156 = vector.shape_cast %155 : vector<1x1x32xf32> to vector<1x32xf32>
    %c0_79 = arith.constant 0 : index
    %c0_80 = arith.constant 0 : index
    %c0_81 = arith.constant 0 : index
    %157 = vector.load %arg17[%c0_79, %c0_80, %c0_81] : memref<2x1x32xf32, #tpu.memory_space<vmem>>, vector<1x1x32xf32>
    %158 = vector.shape_cast %157 : vector<1x1x32xf32> to vector<1x32xf32>
    %cst_82 = arith.constant dense<0.000000e+00> : vector<32xf32>
    %159 = vector.multi_reduction <add>, %154, %cst_82 [1] : vector<32x32xf32> to vector<32xf32>
    %160 = vector.shape_cast %159 : vector<32xf32> to vector<32x1xf32>
    %cst_83 = arith.constant 3.200000e+01 : f32
    %161 = vector.broadcast %cst_83 : f32 to vector<32x1xf32>
    %162 = arith.divf %160, %161 : vector<32x1xf32>
    %163 = vector.broadcast %162 : vector<32x1xf32> to vector<32x32xf32>
    %164 = arith.subf %154, %163 : vector<32x32xf32>
    %165 = arith.mulf %164, %164 : vector<32x32xf32>
    %cst_84 = arith.constant dense<0.000000e+00> : vector<32xf32>
    %166 = vector.multi_reduction <add>, %165, %cst_84 [1] : vector<32x32xf32> to vector<32xf32>
    %167 = vector.shape_cast %166 : vector<32xf32> to vector<32x1xf32>
    %cst_85 = arith.constant 3.200000e+01 : f32
    %168 = vector.broadcast %cst_85 : f32 to vector<32x1xf32>
    %169 = arith.divf %167, %168 : vector<32x1xf32>
    %cst_86 = arith.constant 9.99999974E-6 : f32
    %170 = vector.broadcast %cst_86 : f32 to vector<32x1xf32>
    %171 = arith.addf %169, %170 : vector<32x1xf32>
    %172 = math.rsqrt %171 : vector<32x1xf32>
    %173 = vector.broadcast %172 : vector<32x1xf32> to vector<32x32xf32>
    %174 = arith.mulf %164, %173 : vector<32x32xf32>
    %175 = vector.broadcast %156 : vector<1x32xf32> to vector<32x32xf32>
    %176 = arith.mulf %174, %175 : vector<32x32xf32>
    %177 = vector.broadcast %158 : vector<1x32xf32> to vector<32x32xf32>
    %178 = arith.addf %176, %177 : vector<32x32xf32>
    %c1_87 = arith.constant 1 : index
    %c0_88 = arith.constant 0 : index
    %c0_89 = arith.constant 0 : index
    %179 = vector.load %arg6[%c1_87, %c0_88, %c0_89] : memref<2x32x32xf32, #tpu.memory_space<vmem>>, vector<1x32x32xf32>
    %180 = vector.shape_cast %179 : vector<1x32x32xf32> to vector<32x32xf32>
    %cst_90 = arith.constant dense<0.000000e+00> : vector<32x32xf32>
    %181 = tpu.matmul %178, %180, %cst_90 {dimension_numbers = #tpu.dot_dimension_numbers<[1], [0], [0], [1], [0, 0, 1, 1], [], []>} : vector<32x32xf32>, vector<32x32xf32>, vector<32x32xf32> -> vector<32x32xf32>
    %c1_91 = arith.constant 1 : index
    %c0_92 = arith.constant 0 : index
    %c0_93 = arith.constant 0 : index
    %182 = vector.load %arg7[%c1_91, %c0_92, %c0_93] : memref<2x1x32xf32, #tpu.memory_space<vmem>>, vector<1x1x32xf32>
    %183 = vector.shape_cast %182 : vector<1x1x32xf32> to vector<1x32xf32>
    %184 = vector.broadcast %183 : vector<1x32xf32> to vector<32x32xf32>
    %185 = arith.addf %181, %184 : vector<32x32xf32>
    %c1_94 = arith.constant 1 : index
    %c0_95 = arith.constant 0 : index
    %c0_96 = arith.constant 0 : index
    %186 = vector.load %arg8[%c1_94, %c0_95, %c0_96] : memref<2x32x64xf32, #tpu.memory_space<vmem>>, vector<1x32x64xf32>
    %187 = vector.shape_cast %186 : vector<1x32x64xf32> to vector<32x64xf32>
    %cst_97 = arith.constant dense<0.000000e+00> : vector<32x64xf32>
    %188 = tpu.matmul %178, %187, %cst_97 {dimension_numbers = #tpu.dot_dimension_numbers<[1], [0], [0], [1], [0, 0, 1, 1], [], []>} : vector<32x32xf32>, vector<32x64xf32>, vector<32x64xf32> -> vector<32x64xf32>
    %c1_98 = arith.constant 1 : index
    %c0_99 = arith.constant 0 : index
    %c0_100 = arith.constant 0 : index
    %189 = vector.load %arg9[%c1_98, %c0_99, %c0_100] : memref<2x1x64xf32, #tpu.memory_space<vmem>>, vector<1x1x64xf32>
    %190 = vector.shape_cast %189 : vector<1x1x64xf32> to vector<1x64xf32>
    %191 = vector.broadcast %190 : vector<1x64xf32> to vector<32x64xf32>
    %192 = arith.addf %188, %191 : vector<32x64xf32>
    %193 = vector.extract_strided_slice %192 {offsets = [0, 0], sizes = [32, 32], strides = [1, 1]} : vector<32x64xf32> to vector<32x32xf32>
    %194 = vector.extract_strided_slice %192 {offsets = [0, 32], sizes = [32, 32], strides = [1, 1]} : vector<32x64xf32> to vector<32x32xf32>
    %195 = vector.broadcast %5 : vector<1x32xf32> to vector<32x32xf32>
    %196 = arith.mulf %193, %195 : vector<32x32xf32>
    %197 = vector.broadcast %7 : vector<1x32xf32> to vector<32x32xf32>
    %198 = arith.mulf %193, %197 : vector<32x32xf32>
    %199 = tpu.concatenate %196, %198 in 0 : vector<32x32xf32>, vector<32x32xf32> -> vector<64x32xf32>
    %200 = vector.broadcast %5 : vector<1x32xf32> to vector<32x32xf32>
    %201 = arith.mulf %194, %200 : vector<32x32xf32>
    %202 = vector.broadcast %7 : vector<1x32xf32> to vector<32x32xf32>
    %203 = arith.mulf %194, %202 : vector<32x32xf32>
    %204 = tpu.concatenate %201, %203 in 0 : vector<32x32xf32>, vector<32x32xf32> -> vector<64x32xf32>
    %cst_101 = arith.constant dense<0.000000e+00> : vector<32x64xf32>
    %205 = tpu.matmul %185, %199, %cst_101 {dimension_numbers = #tpu.dot_dimension_numbers<[1], [1], [0], [0], [0, 0, 1, 0], [], []>} : vector<32x32xf32>, vector<64x32xf32>, vector<32x64xf32> -> vector<32x64xf32>
    %206 = vector.shape_cast %185 : vector<32x32xf32> to vector<4x8x32xf32>
    %207 = vector.shape_cast %193 : vector<32x32xf32> to vector<4x8x32xf32>
    %c1_102 = arith.constant 1 : index
    %c0_103 = arith.constant 0 : index
    %c0_104 = arith.constant 0 : index
    %c0_105 = arith.constant 0 : index
    %c0_106 = arith.constant 0 : index
    %208 = vector.load %arg3[%c1_102, %c0_103, %c0_104, %c0_105, %c0_106] : memref<2x4x8x8x32xf32, #tpu.memory_space<vmem>>, vector<1x4x8x8x32xf32>
    %209 = vector.shape_cast %208 : vector<1x4x8x8x32xf32> to vector<4x8x8x32xf32>
    %210 = vector.shape_cast %206 : vector<4x8x32xf32> to vector<4x8x1x32xf32>
    %211 = vector.broadcast %210 : vector<4x8x1x32xf32> to vector<4x8x8x32xf32>
    %212 = arith.mulf %209, %211 : vector<4x8x8x32xf32>
    %c1_107 = arith.constant 1 : index
    %c0_108 = arith.constant 0 : index
    %c0_109 = arith.constant 0 : index
    %c0_110 = arith.constant 0 : index
    %c0_111 = arith.constant 0 : index
    %213 = vector.load %arg4[%c1_107, %c0_108, %c0_109, %c0_110, %c0_111] : memref<2x4x8x8x32xf32, #tpu.memory_space<vmem>>, vector<1x4x8x8x32xf32>
    %214 = vector.shape_cast %213 : vector<1x4x8x8x32xf32> to vector<4x8x8x32xf32>
    %215 = vector.shape_cast %207 : vector<4x8x32xf32> to vector<4x1x8x32xf32>
    %216 = vector.broadcast %215 : vector<4x1x8x32xf32> to vector<4x8x8x32xf32>
    %217 = arith.mulf %214, %216 : vector<4x8x8x32xf32>
    %218 = arith.addf %212, %217 : vector<4x8x8x32xf32>
    %219 = vector.extract_strided_slice %218 {offsets = [0, 0, 0, 0], sizes = [4, 8, 8, 16], strides = [1, 1, 1, 1]} : vector<4x8x8x32xf32> to vector<4x8x8x16xf32>
    %cst_112 = arith.constant dense<0.000000e+00> : vector<4x8x8xf32>
    %220 = vector.multi_reduction <add>, %219, %cst_112 [3] : vector<4x8x8x16xf32> to vector<4x8x8xf32>
    %221 = vector.shape_cast %220 : vector<4x8x8xf32> to vector<32x8xf32>
    %222 = vector.extract_strided_slice %218 {offsets = [0, 0, 0, 16], sizes = [4, 8, 8, 16], strides = [1, 1, 1, 1]} : vector<4x8x8x32xf32> to vector<4x8x8x16xf32>
    %cst_113 = arith.constant dense<0.000000e+00> : vector<4x8x8xf32>
    %223 = vector.multi_reduction <add>, %222, %cst_113 [3] : vector<4x8x8x16xf32> to vector<4x8x8xf32>
    %224 = vector.shape_cast %223 : vector<4x8x8xf32> to vector<32x8xf32>
    %c0_114 = arith.constant 0 : index
    %c0_115 = arith.constant 0 : index
    %c0_116 = arith.constant 0 : index
    %225 = vector.load %arg5[%c0_114, %c0_115, %c0_116] : memref<2x8x64xf32, #tpu.memory_space<vmem>>, vector<1x8x64xf32>
    %226 = vector.shape_cast %225 : vector<1x8x64xf32> to vector<8x64xf32>
    %cst_117 = arith.constant dense<0.000000e+00> : vector<32x64xf32>
    %227 = tpu.matmul %221, %226, %cst_117 {dimension_numbers = #tpu.dot_dimension_numbers<[1], [0], [0], [1], [0, 0, 1, 1], [], []>} : vector<32x8xf32>, vector<8x64xf32>, vector<32x64xf32> -> vector<32x64xf32>
    %c1_118 = arith.constant 1 : index
    %c0_119 = arith.constant 0 : index
    %c0_120 = arith.constant 0 : index
    %228 = vector.load %arg5[%c1_118, %c0_119, %c0_120] : memref<2x8x64xf32, #tpu.memory_space<vmem>>, vector<1x8x64xf32>
    %229 = vector.shape_cast %228 : vector<1x8x64xf32> to vector<8x64xf32>
    %cst_121 = arith.constant dense<0.000000e+00> : vector<32x64xf32>
    %230 = tpu.matmul %224, %229, %cst_121 {dimension_numbers = #tpu.dot_dimension_numbers<[1], [0], [0], [1], [0, 0, 1, 1], [], []>} : vector<32x8xf32>, vector<8x64xf32>, vector<32x64xf32> -> vector<32x64xf32>
    %231 = arith.addf %227, %230 : vector<32x64xf32>
    %232 = arith.addf %205, %231 : vector<32x64xf32>
    %c1_122 = arith.constant 1 : index
    %c0_123 = arith.constant 0 : index
    %c0_124 = arith.constant 0 : index
    %233 = vector.load %arg2[%c1_122, %c0_123, %c0_124] : memref<2x32x64xf32, #tpu.memory_space<vmem>>, vector<1x32x64xf32>
    %234 = vector.shape_cast %233 : vector<1x32x64xf32> to vector<32x64xf32>
    %235 = arith.addf %232, %234 : vector<32x64xf32>
    %cst_125 = arith.constant dense<0xFF800000> : vector<32xf32>
    %236 = vector.multi_reduction <maximumf>, %235, %cst_125 [1] : vector<32x64xf32> to vector<32xf32>
    %237 = vector.shape_cast %236 : vector<32xf32> to vector<32x1xf32>
    %238 = vector.broadcast %237 : vector<32x1xf32> to vector<32x64xf32>
    %239 = arith.subf %235, %238 : vector<32x64xf32>
    %240 = math.exp %239 : vector<32x64xf32>
    %241 = vector.broadcast %12 : vector<1x64xf32> to vector<32x64xf32>
    %242 = arith.mulf %240, %241 : vector<32x64xf32>
    %cst_126 = arith.constant dense<0.000000e+00> : vector<32xf32>
    %243 = vector.multi_reduction <add>, %242, %cst_126 [1] : vector<32x64xf32> to vector<32xf32>
    %244 = vector.shape_cast %243 : vector<32xf32> to vector<32x1xf32>
    %245 = vector.broadcast %14 : vector<1x64xf32> to vector<32x64xf32>
    %246 = arith.mulf %240, %245 : vector<32x64xf32>
    %cst_127 = arith.constant dense<0.000000e+00> : vector<32xf32>
    %247 = vector.multi_reduction <add>, %246, %cst_127 [1] : vector<32x64xf32> to vector<32xf32>
    %248 = vector.shape_cast %247 : vector<32xf32> to vector<32x1xf32>
    %249 = tpu.reciprocal %244 {approx = true} : vector<32x1xf32> -> vector<32x1xf32>
    %250 = vector.broadcast %249 : vector<32x1xf32> to vector<32x64xf32>
    %251 = vector.broadcast %12 : vector<1x64xf32> to vector<32x64xf32>
    %252 = arith.mulf %250, %251 : vector<32x64xf32>
    %253 = tpu.reciprocal %248 {approx = true} : vector<32x1xf32> -> vector<32x1xf32>
    %254 = vector.broadcast %253 : vector<32x1xf32> to vector<32x64xf32>
    %255 = vector.broadcast %14 : vector<1x64xf32> to vector<32x64xf32>
    %256 = arith.mulf %254, %255 : vector<32x64xf32>
    %257 = arith.addf %252, %256 : vector<32x64xf32>
    %258 = arith.mulf %240, %257 : vector<32x64xf32>
    %cst_128 = arith.constant dense<0.000000e+00> : vector<32x32xf32>
    %259 = tpu.matmul %258, %204, %cst_128 {dimension_numbers = #tpu.dot_dimension_numbers<[1], [0], [0], [1], [0, 0, 1, 1], [], []>} : vector<32x64xf32>, vector<64x32xf32>, vector<32x32xf32> -> vector<32x32xf32>
    %c1_129 = arith.constant 1 : index
    %c0_130 = arith.constant 0 : index
    %260 = memref.load %arg18[%c1_129, %c0_130] : memref<2x2xf32, #tpu.memory_space<smem>>
    %261 = vector.broadcast %260 : f32 to vector<32x32xf32>
    %262 = arith.mulf %259, %261 : vector<32x32xf32>
    %263 = arith.addf %178, %262 : vector<32x32xf32>
    %c1_131 = arith.constant 1 : index
    %c0_132 = arith.constant 0 : index
    %c0_133 = arith.constant 0 : index
    %264 = vector.load %arg10[%c1_131, %c0_132, %c0_133] : memref<2x1x32xf32, #tpu.memory_space<vmem>>, vector<1x1x32xf32>
    %265 = vector.shape_cast %264 : vector<1x1x32xf32> to vector<1x32xf32>
    %c1_134 = arith.constant 1 : index
    %c0_135 = arith.constant 0 : index
    %c0_136 = arith.constant 0 : index
    %266 = vector.load %arg11[%c1_134, %c0_135, %c0_136] : memref<2x1x32xf32, #tpu.memory_space<vmem>>, vector<1x1x32xf32>
    %267 = vector.shape_cast %266 : vector<1x1x32xf32> to vector<1x32xf32>
    %cst_137 = arith.constant dense<0.000000e+00> : vector<32xf32>
    %268 = vector.multi_reduction <add>, %263, %cst_137 [1] : vector<32x32xf32> to vector<32xf32>
    %269 = vector.shape_cast %268 : vector<32xf32> to vector<32x1xf32>
    %cst_138 = arith.constant 3.200000e+01 : f32
    %270 = vector.broadcast %cst_138 : f32 to vector<32x1xf32>
    %271 = arith.divf %269, %270 : vector<32x1xf32>
    %272 = vector.broadcast %271 : vector<32x1xf32> to vector<32x32xf32>
    %273 = arith.subf %263, %272 : vector<32x32xf32>
    %274 = arith.mulf %273, %273 : vector<32x32xf32>
    %cst_139 = arith.constant dense<0.000000e+00> : vector<32xf32>
    %275 = vector.multi_reduction <add>, %274, %cst_139 [1] : vector<32x32xf32> to vector<32xf32>
    %276 = vector.shape_cast %275 : vector<32xf32> to vector<32x1xf32>
    %cst_140 = arith.constant 3.200000e+01 : f32
    %277 = vector.broadcast %cst_140 : f32 to vector<32x1xf32>
    %278 = arith.divf %276, %277 : vector<32x1xf32>
    %cst_141 = arith.constant 9.99999974E-6 : f32
    %279 = vector.broadcast %cst_141 : f32 to vector<32x1xf32>
    %280 = arith.addf %278, %279 : vector<32x1xf32>
    %281 = math.rsqrt %280 : vector<32x1xf32>
    %282 = vector.broadcast %281 : vector<32x1xf32> to vector<32x32xf32>
    %283 = arith.mulf %273, %282 : vector<32x32xf32>
    %284 = vector.broadcast %265 : vector<1x32xf32> to vector<32x32xf32>
    %285 = arith.mulf %283, %284 : vector<32x32xf32>
    %286 = vector.broadcast %267 : vector<1x32xf32> to vector<32x32xf32>
    %287 = arith.addf %285, %286 : vector<32x32xf32>
    %c1_142 = arith.constant 1 : index
    %c0_143 = arith.constant 0 : index
    %c0_144 = arith.constant 0 : index
    %288 = vector.load %arg12[%c1_142, %c0_143, %c0_144] : memref<2x32x64xf32, #tpu.memory_space<vmem>>, vector<1x32x64xf32>
    %289 = vector.shape_cast %288 : vector<1x32x64xf32> to vector<32x64xf32>
    %cst_145 = arith.constant dense<0.000000e+00> : vector<32x64xf32>
    %290 = tpu.matmul %287, %289, %cst_145 {dimension_numbers = #tpu.dot_dimension_numbers<[1], [0], [0], [1], [0, 0, 1, 1], [], []>} : vector<32x32xf32>, vector<32x64xf32>, vector<32x64xf32> -> vector<32x64xf32>
    %c1_146 = arith.constant 1 : index
    %c0_147 = arith.constant 0 : index
    %c0_148 = arith.constant 0 : index
    %291 = vector.load %arg13[%c1_146, %c0_147, %c0_148] : memref<2x1x64xf32, #tpu.memory_space<vmem>>, vector<1x1x64xf32>
    %292 = vector.shape_cast %291 : vector<1x1x64xf32> to vector<1x64xf32>
    %293 = vector.broadcast %292 : vector<1x64xf32> to vector<32x64xf32>
    %294 = arith.addf %290, %293 : vector<32x64xf32>
    %cst_149 = arith.constant 5.000000e-01 : f32
    %295 = vector.broadcast %cst_149 : f32 to vector<32x64xf32>
    %296 = arith.mulf %295, %294 : vector<32x64xf32>
    %cst_150 = arith.constant 4.471500e-02 : f32
    %297 = vector.broadcast %cst_150 : f32 to vector<32x64xf32>
    %298 = arith.mulf %297, %294 : vector<32x64xf32>
    %299 = arith.mulf %298, %294 : vector<32x64xf32>
    %300 = arith.mulf %299, %294 : vector<32x64xf32>
    %301 = arith.addf %294, %300 : vector<32x64xf32>
    %cst_151 = arith.constant 0.797884583 : f32
    %302 = vector.broadcast %cst_151 : f32 to vector<32x64xf32>
    %303 = arith.mulf %302, %301 : vector<32x64xf32>
    %304 = math.tanh %303 : vector<32x64xf32>
    %cst_152 = arith.constant 1.000000e+00 : f32
    %305 = vector.broadcast %cst_152 : f32 to vector<32x64xf32>
    %306 = arith.addf %305, %304 : vector<32x64xf32>
    %307 = arith.mulf %296, %306 : vector<32x64xf32>
    %c1_153 = arith.constant 1 : index
    %c0_154 = arith.constant 0 : index
    %c0_155 = arith.constant 0 : index
    %308 = vector.load %arg14[%c1_153, %c0_154, %c0_155] : memref<2x64x32xf32, #tpu.memory_space<vmem>>, vector<1x64x32xf32>
    %309 = vector.shape_cast %308 : vector<1x64x32xf32> to vector<64x32xf32>
    %cst_156 = arith.constant dense<0.000000e+00> : vector<32x32xf32>
    %310 = tpu.matmul %307, %309, %cst_156 {dimension_numbers = #tpu.dot_dimension_numbers<[1], [0], [0], [1], [0, 0, 1, 1], [], []>} : vector<32x64xf32>, vector<64x32xf32>, vector<32x32xf32> -> vector<32x32xf32>
    %c1_157 = arith.constant 1 : index
    %c0_158 = arith.constant 0 : index
    %c0_159 = arith.constant 0 : index
    %311 = vector.load %arg15[%c1_157, %c0_158, %c0_159] : memref<2x1x32xf32, #tpu.memory_space<vmem>>, vector<1x1x32xf32>
    %312 = vector.shape_cast %311 : vector<1x1x32xf32> to vector<1x32xf32>
    %313 = vector.broadcast %312 : vector<1x32xf32> to vector<32x32xf32>
    %314 = arith.addf %310, %313 : vector<32x32xf32>
    %c1_160 = arith.constant 1 : index
    %c1_161 = arith.constant 1 : index
    %315 = memref.load %arg18[%c1_160, %c1_161] : memref<2x2xf32, #tpu.memory_space<smem>>
    %316 = vector.broadcast %315 : f32 to vector<32x32xf32>
    %317 = arith.mulf %314, %316 : vector<32x32xf32>
    %318 = arith.addf %287, %317 : vector<32x32xf32>
    %c1_162 = arith.constant 1 : index
    %c0_163 = arith.constant 0 : index
    %c0_164 = arith.constant 0 : index
    %319 = vector.load %arg16[%c1_162, %c0_163, %c0_164] : memref<2x1x32xf32, #tpu.memory_space<vmem>>, vector<1x1x32xf32>
    %320 = vector.shape_cast %319 : vector<1x1x32xf32> to vector<1x32xf32>
    %c1_165 = arith.constant 1 : index
    %c0_166 = arith.constant 0 : index
    %c0_167 = arith.constant 0 : index
    %321 = vector.load %arg17[%c1_165, %c0_166, %c0_167] : memref<2x1x32xf32, #tpu.memory_space<vmem>>, vector<1x1x32xf32>
    %322 = vector.shape_cast %321 : vector<1x1x32xf32> to vector<1x32xf32>
    %cst_168 = arith.constant dense<0.000000e+00> : vector<32xf32>
    %323 = vector.multi_reduction <add>, %318, %cst_168 [1] : vector<32x32xf32> to vector<32xf32>
    %324 = vector.shape_cast %323 : vector<32xf32> to vector<32x1xf32>
    %cst_169 = arith.constant 3.200000e+01 : f32
    %325 = vector.broadcast %cst_169 : f32 to vector<32x1xf32>
    %326 = arith.divf %324, %325 : vector<32x1xf32>
    %327 = vector.broadcast %326 : vector<32x1xf32> to vector<32x32xf32>
    %328 = arith.subf %318, %327 : vector<32x32xf32>
    %329 = arith.mulf %328, %328 : vector<32x32xf32>
    %cst_170 = arith.constant dense<0.000000e+00> : vector<32xf32>
    %330 = vector.multi_reduction <add>, %329, %cst_170 [1] : vector<32x32xf32> to vector<32xf32>
    %331 = vector.shape_cast %330 : vector<32xf32> to vector<32x1xf32>
    %cst_171 = arith.constant 3.200000e+01 : f32
    %332 = vector.broadcast %cst_171 : f32 to vector<32x1xf32>
    %333 = arith.divf %331, %332 : vector<32x1xf32>
    %cst_172 = arith.constant 9.99999974E-6 : f32
    %334 = vector.broadcast %cst_172 : f32 to vector<32x1xf32>
    %335 = arith.addf %333, %334 : vector<32x1xf32>
    %336 = math.rsqrt %335 : vector<32x1xf32>
    %337 = vector.broadcast %336 : vector<32x1xf32> to vector<32x32xf32>
    %338 = arith.mulf %328, %337 : vector<32x32xf32>
    %339 = vector.broadcast %320 : vector<1x32xf32> to vector<32x32xf32>
    %340 = arith.mulf %338, %339 : vector<32x32xf32>
    %341 = vector.broadcast %322 : vector<1x32xf32> to vector<32x32xf32>
    %342 = arith.addf %340, %341 : vector<32x32xf32>
    %c0_173 = arith.constant 0 : index
    %c0_174 = arith.constant 0 : index
    %343 = vector.load %arg19[%c0_173, %c0_174] : memref<32x32xf32, #tpu.memory_space<vmem>>, vector<32x32xf32>
    tpu.vector_store %arg19[%c0_173, %c0_174], %342 {strides = array<i32>} : memref<32x32xf32, #tpu.memory_space<vmem>>, vector<32x32xf32>,
    return
  }
  func.func @transform_0(%arg0: i32) -> (i32, i32) {
    %c0_i32 = arith.constant 0 : i32
    %c0_i32_0 = arith.constant 0 : i32
    return %arg0, %c0_i32 : i32, i32
  }
  func.func @transform_1(%arg0: i32) -> (i32, i32, i32) {
    %c0_i32 = arith.constant 0 : i32
    %c0_i32_0 = arith.constant 0 : i32
    %c0_i32_1 = arith.constant 0 : i32
    return %c0_i32, %arg0, %c0_i32_0 : i32, i32, i32
  }
  func.func @transform_2(%arg0: i32) -> (i32, i32, i32, i32, i32) {
    %c0_i32 = arith.constant 0 : i32
    %c0_i32_0 = arith.constant 0 : i32
    %c0_i32_1 = arith.constant 0 : i32
    %c0_i32_2 = arith.constant 0 : i32
    %c0_i32_3 = arith.constant 0 : i32
    return %c0_i32, %arg0, %c0_i32_0, %c0_i32_1, %c0_i32_2 : i32, i32, i32, i32, i32
  }
  func.func @transform_3(%arg0: i32) -> (i32, i32, i32, i32, i32) {
    %c0_i32 = arith.constant 0 : i32
    %c0_i32_0 = arith.constant 0 : i32
    %c0_i32_1 = arith.constant 0 : i32
    %c0_i32_2 = arith.constant 0 : i32
    %c0_i32_3 = arith.constant 0 : i32
    return %c0_i32, %arg0, %c0_i32_0, %c0_i32_1, %c0_i32_2 : i32, i32, i32, i32, i32
  }
  func.func @transform_4(%arg0: i32) -> (i32, i32, i32) {
    %c0_i32 = arith.constant 0 : i32
    %c0_i32_0 = arith.constant 0 : i32
    %c0_i32_1 = arith.constant 0 : i32
    %c0_i32_2 = arith.constant 0 : i32
    return %c0_i32, %c0_i32_0, %c0_i32_1 : i32, i32, i32
  }
  func.func @transform_5(%arg0: i32) -> (i32, i32, i32) {
    %c0_i32 = arith.constant 0 : i32
    %c0_i32_0 = arith.constant 0 : i32
    %c0_i32_1 = arith.constant 0 : i32
    %c0_i32_2 = arith.constant 0 : i32
    return %c0_i32, %c0_i32_0, %c0_i32_1 : i32, i32, i32
  }
  func.func @transform_6(%arg0: i32) -> (i32, i32, i32) {
    %c0_i32 = arith.constant 0 : i32
    %c0_i32_0 = arith.constant 0 : i32
    %c0_i32_1 = arith.constant 0 : i32
    %c0_i32_2 = arith.constant 0 : i32
    return %c0_i32, %c0_i32_0, %c0_i32_1 : i32, i32, i32
  }
  func.func @transform_7(%arg0: i32) -> (i32, i32, i32) {
    %c0_i32 = arith.constant 0 : i32
    %c0_i32_0 = arith.constant 0 : i32
    %c0_i32_1 = arith.constant 0 : i32
    %c0_i32_2 = arith.constant 0 : i32
    return %c0_i32, %c0_i32_0, %c0_i32_1 : i32, i32, i32
  }
  func.func @transform_8(%arg0: i32) -> (i32, i32, i32) {
    %c0_i32 = arith.constant 0 : i32
    %c0_i32_0 = arith.constant 0 : i32
    %c0_i32_1 = arith.constant 0 : i32
    %c0_i32_2 = arith.constant 0 : i32
    return %c0_i32, %c0_i32_0, %c0_i32_1 : i32, i32, i32
  }
  func.func @transform_9(%arg0: i32) -> (i32, i32, i32) {
    %c0_i32 = arith.constant 0 : i32
    %c0_i32_0 = arith.constant 0 : i32
    %c0_i32_1 = arith.constant 0 : i32
    %c0_i32_2 = arith.constant 0 : i32
    return %c0_i32, %c0_i32_0, %c0_i32_1 : i32, i32, i32
  }
  func.func @transform_10(%arg0: i32) -> (i32, i32, i32) {
    %c0_i32 = arith.constant 0 : i32
    %c0_i32_0 = arith.constant 0 : i32
    %c0_i32_1 = arith.constant 0 : i32
    %c0_i32_2 = arith.constant 0 : i32
    return %c0_i32, %c0_i32_0, %c0_i32_1 : i32, i32, i32
  }
  func.func @transform_11(%arg0: i32) -> (i32, i32, i32) {
    %c0_i32 = arith.constant 0 : i32
    %c0_i32_0 = arith.constant 0 : i32
    %c0_i32_1 = arith.constant 0 : i32
    %c0_i32_2 = arith.constant 0 : i32
    return %c0_i32, %c0_i32_0, %c0_i32_1 : i32, i32, i32
  }
  func.func @transform_12(%arg0: i32) -> (i32, i32, i32) {
    %c0_i32 = arith.constant 0 : i32
    %c0_i32_0 = arith.constant 0 : i32
    %c0_i32_1 = arith.constant 0 : i32
    %c0_i32_2 = arith.constant 0 : i32
    return %c0_i32, %c0_i32_0, %c0_i32_1 : i32, i32, i32
  }
  func.func @transform_13(%arg0: i32) -> (i32, i32, i32) {
    %c0_i32 = arith.constant 0 : i32
    %c0_i32_0 = arith.constant 0 : i32
    %c0_i32_1 = arith.constant 0 : i32
    %c0_i32_2 = arith.constant 0 : i32
    return %c0_i32, %c0_i32_0, %c0_i32_1 : i32, i32, i32
  }
  func.func @transform_14(%arg0: i32) -> (i32, i32, i32) {
    %c0_i32 = arith.constant 0 : i32
    %c0_i32_0 = arith.constant 0 : i32
    %c0_i32_1 = arith.constant 0 : i32
    %c0_i32_2 = arith.constant 0 : i32
    return %c0_i32, %c0_i32_0, %c0_i32_1 : i32, i32, i32
  }
  func.func @transform_15(%arg0: i32) -> (i32, i32, i32) {
    %c0_i32 = arith.constant 0 : i32
    %c0_i32_0 = arith.constant 0 : i32
    %c0_i32_1 = arith.constant 0 : i32
    %c0_i32_2 = arith.constant 0 : i32
    return %c0_i32, %c0_i32_0, %c0_i32_1 : i32, i32, i32
  }
  func.func @transform_16(%arg0: i32) -> (i32, i32, i32) {
    %c0_i32 = arith.constant 0 : i32
    %c0_i32_0 = arith.constant 0 : i32
    %c0_i32_1 = arith.constant 0 : i32
    %c0_i32_2 = arith.constant 0 : i32
    return %c0_i32, %c0_i32_0, %c0_i32_1 : i32, i32, i32
  }
  func.func @transform_17(%arg0: i32) -> (i32, i32) {
    %c0_i32 = arith.constant 0 : i32
    %c0_i32_0 = arith.constant 0 : i32
    %c0_i32_1 = arith.constant 0 : i32
    return %c0_i32, %c0_i32_0 : i32, i32
  }
  func.func @transform_18(%arg0: i32) -> (i32, i32) {
    %c0_i32 = arith.constant 0 : i32
    %c0_i32_0 = arith.constant 0 : i32
    return %arg0, %c0_i32 : i32, i32
  }
}

</mosaic_0001>

<llo_original>
// kernel: tpu_custom_call.1
$region0: #{tpu_custom_call.1}
  #allocation0 [shape = 'u32[]', space=smem, size = 0x4, offset = 0x4, fixed_abs, tag = 'smem constant byte address 0x4 - core index']
  #allocation1 [shape = 'u32[72,128]{1,0:T(1,128)}', space=vmem, size = 0x9000, scoped, tag = 'internal scratch']
  #allocation12 [shape = 's32[]', space=sflag, size = 0x4, offset = 0, fixed_abs, tag = 'sflag constant byte address 0x0 - dummy sync flag']
  #allocation14 [shape = 's32[]', space=sflag, size = 0x4, offset = 0, fixed_abs, tag = 'sflag constant byte address 0x0 - dummy sync flag']
  %s0 = inlined_call_operand.vmem [shape: f32[64,32], index: 0, kind: input, shape index: {}]
  %s1 = inlined_call_operand.vmem [shape: f32[2,64,64], index: 1, kind: input, shape index: {}]
  %s2 = inlined_call_operand.hbm [shape: f32[2,8,8,8,32], index: 2, kind: input, shape index: {}]
  %s3 = inlined_call_operand.hbm [shape: f32[2,8,8,8,32], index: 3, kind: input, shape index: {}]
  %s4 = inlined_call_operand.vmem [shape: f32[2,8,64], index: 4, kind: input, shape index: {}]
  %s5 = inlined_call_operand.vmem [shape: f32[2,32,32], index: 5, kind: input, shape index: {}]
  %s6 = inlined_call_operand.vmem [shape: f32[2,1,32], index: 6, kind: input, shape index: {}]
  %s7 = inlined_call_operand.hbm [shape: f32[2,32,64], index: 7, kind: input, shape index: {}]
  %s8 = inlined_call_operand.vmem [shape: f32[2,1,64], index: 8, kind: input, shape index: {}]
  %s9 = inlined_call_operand.vmem [shape: f32[2,1,32], index: 9, kind: input, shape index: {}]
  %s10 = inlined_call_operand.vmem [shape: f32[2,1,32], index: 10, kind: input, shape index: {}]
  %s11 = inlined_call_operand.hbm [shape: f32[2,32,64], index: 11, kind: input, shape index: {}]
  %s12 = inlined_call_operand.vmem [shape: f32[2,1,64], index: 12, kind: input, shape index: {}]
  %s13 = inlined_call_operand.vmem [shape: f32[2,64,32], index: 13, kind: input, shape index: {}]
  %s14 = inlined_call_operand.vmem [shape: f32[2,1,32], index: 14, kind: input, shape index: {}]
  %s15 = inlined_call_operand.vmem [shape: f32[2,1,32], index: 15, kind: input, shape index: {}]
  %s16 = inlined_call_operand.vmem [shape: f32[2,1,32], index: 16, kind: input, shape index: {}]
  %s17 = inlined_call_operand.vmem [shape: f32[2,2], index: 17, kind: input, shape index: {}]
  %s18 = inlined_call_operand.vmem [shape: f32[64,32], index: 18, kind: output, shape index: {}]
  %s19 = sld [smem:[#allocation0]]
  $region163: #{tpu_custom_call.1} parent=0
    _
  %s21 = ssub.s32 1, %s19
  %s22 = scalar_select 0, %s21, %s19
  $region1: #{tpu_custom_call.1} parent=0
    #allocation2 [shape = 'u8[65536]{0}', space=vmem, size = 0x10000, scoped, tag = 'input window, operand 1']
    #allocation3 [shape = 'u8[524288]{0}', space=vmem, size = 0x80000, scoped, tag = 'input window, operand 2']
    #allocation4 [shape = 's32[2]{0}', space=sflag, size = 0x8, scoped, tag = 'scoped memory for tpu_custom_call.1']
    #allocation5 [shape = 's32[2]{0}', space=sflag, size = 0x8, scoped, tag = 'scoped memory for tpu_custom_call.1']
    #allocation6 [shape = 'u8[524288]{0}', space=vmem, size = 0x80000, scoped, tag = 'input window, operand 3']
    #allocation7 [shape = 's32[2]{0}', space=sflag, size = 0x8, scoped, tag = 'scoped memory for tpu_custom_call.1']
    #allocation8 [shape = 'u8[32768]{0}', space=vmem, size = 0x8000, scoped, tag = 'input window, operand 7, single buffered']
    #allocation9 [shape = 'u8[32768]{0}', space=vmem, size = 0x8000, scoped, tag = 'input window, operand 11, single buffered']
    #allocation10 [shape = 's32[1]{0}', space=sflag, size = 0x4, scoped, tag = 'scoped memory for tpu_custom_call.1']
    #allocation11 [shape = 'u8[1024]{0}', space=smem, size = 0x400, scoped, tag = 'input window, operand 17, single buffered']
    %23 = vsyncpa [#allocation4], 0
    %s24 = scalar_lea.sflag [#allocation4], 1
    %25 = vsyncpa %s24, 0
    %26 = vsyncpa [#allocation7], 0
    %s27 = scalar_lea.sflag [#allocation7], 1
    %28 = vsyncpa %s27, 0
    %29 = vsyncpa [#allocation10], 0
    %30 = vsyncpa [#allocation5], 0
    loop: start=0, step=1, limit=4
    $region2: #{tpu_custom_call.1} parent=1 // loop_pre_header
      _
    $region3: #{tpu_custom_call.1} parent=1 // loop_header
      %s32 = sphi 0, %s36
      %p33 = scmp.ge.s32.totalorder %s32, 4
      %s42 = sphi 0, %s44
      %s45 = sphi 0, %s42
      %s46 = sphi 0, %s45
      %s62 = sphi 0, %s46
      %s68 = sphi 0, %s70
      %s71 = sphi 0, %s68
      %s72 = sphi 0, %s71
      %s88 = sphi 0, %s72
      %s94 = sphi 0, %s96
      %s97 = sphi 0, %s94
      %s98 = sphi 0, %s97
      %s114 = sphi 0, %s98
      %s120 = sphi 0, %s122
      %s123 = sphi 0, %s120
      %s124 = sphi 0, %s123
      %s140 = sphi 0, %s124
      %s144 = sphi 0, %s144
      %s146 = sphi 0, %s144
      %s147 = sphi 0, %s146
      %s161 = sphi 0, %s147
      %s165 = sphi 0, %s165
      %s167 = sphi 0, %s165
      %s168 = sphi 0, %s167
      %s182 = sphi 0, %s168
      %s186 = sphi 0, %s186
      %s188 = sphi 0, %s186
      %s189 = sphi 0, %s188
      %s203 = sphi 0, %s189
      %s207 = sphi 0, %s207
      %s209 = sphi 0, %s207
      %s210 = sphi 0, %s209
      %s224 = sphi 0, %s210
      %s228 = sphi 0, %s228
      %s230 = sphi 0, %s228
      %s231 = sphi 0, %s230
      %s245 = sphi 0, %s231
      %s249 = sphi 0, %s249
      %s251 = sphi 0, %s249
      %s252 = sphi 0, %s251
      %s266 = sphi 0, %s252
      %s270 = sphi 0, %s270
      %s272 = sphi 0, %s270
      %s273 = sphi 0, %s272
      %s287 = sphi 0, %s273
      %s291 = sphi 0, %s291
      %s293 = sphi 0, %s291
      %s294 = sphi 0, %s293
      %s308 = sphi 0, %s294
      %s312 = sphi 0, %s312
      %s314 = sphi 0, %s312
      %s315 = sphi 0, %s314
      %s329 = sphi 0, %s315
      %s333 = sphi 0, %s333
      %s335 = sphi 0, %s333
      %s336 = sphi 0, %s335
      %s350 = sphi 0, %s336
      %s354 = sphi 0, %s354
      %s356 = sphi 0, %s354
      %s357 = sphi 0, %s356
      %s371 = sphi 0, %s357
      %s375 = sphi 0, %s375
      %s377 = sphi 0, %s375
      %s378 = sphi 0, %s377
      %s392 = sphi 0, %s378
      %s396 = sphi 0, %s396
      %s398 = sphi 0, %s396
      %s399 = sphi 0, %s398
      %s413 = sphi 0, %s399
      %s417 = sphi 0, %s417
      %s419 = sphi 0, %s417
      %s420 = sphi 0, %s419
      %s434 = sphi 0, %s420
      %s440 = sphi 0, %s442
      %s443 = sphi 0, %s440
      %s444 = sphi 0, %s443
      %s460 = sphi 0, %s444
    $region4: #{tpu_custom_call.1} parent=1 // loop_header_branch
      %35 = sbr.rel (%p33) target = $region8
    $region5: #{tpu_custom_call.1} parent=1 // loop_body
      %s37 = ssub.s32 %s32, 1
      %s38 = ssub.s32 %s32, 2
      %s39 = sadd.s32 %s32, 1
      %s40 = ssub.s32 %s32, %s39
      %p41 = scmp.eq.s32.totalorder %s40, 0
      %s43 = sadd.s32 %s42, 1
      %s44 = scalar_select %p41, %s42, %s43
      %p47 = pneg %p41
      %p48 = scmp.eq.s32.totalorder %s32, 1
      %p49 = por %p47, %p48
      %p50 = scmp.ne.s32.totalorder %s42, %s45
      %p51 = scmp.eq.s32.totalorder %s32, 0
      %p52 = por %p50, %p51
      %p53 = scmp.ne.s32.totalorder %s42, %s45
      %p54 = scmp.eq.s32.totalorder %s37, 1
      %p55 = por %p53, %p54
      %p56 = scmp.ne.s32.totalorder %s45, %s46
      %p57 = scmp.eq.s32.totalorder %s37, 0
      %p58 = por %p56, %p57
      %p59 = scmp.ne.s32.totalorder %s45, %s46
      %p60 = scmp.eq.s32.totalorder %s38, 1
      %p61 = por %p59, %p60
      %p63 = scmp.ne.s32.totalorder %s46, %s62
      %p64 = scmp.eq.s32.totalorder %s38, 0
      %p65 = por %p63, %p64
      %s66 = ssub.s32 %s32, %s39
      %p67 = scmp.eq.s32.totalorder %s66, 0
      %s69 = sadd.s32 %s68, 1
      %s70 = scalar_select %p67, %s68, %s69
      %p73 = pneg %p67
      %p74 = scmp.eq.s32.totalorder %s32, 1
      %p75 = por %p73, %p74
      %p76 = scmp.ne.s32.totalorder %s68, %s71
      %p77 = scmp.eq.s32.totalorder %s32, 0
      %p78 = por %p76, %p77
      %p79 = scmp.ne.s32.totalorder %s68, %s71
      %p80 = scmp.eq.s32.totalorder %s37, 1
      %p81 = por %p79, %p80
      %p82 = scmp.ne.s32.totalorder %s71, %s72
      %p83 = scmp.eq.s32.totalorder %s37, 0
      %p84 = por %p82, %p83
      %p85 = scmp.ne.s32.totalorder %s71, %s72
      %p86 = scmp.eq.s32.totalorder %s38, 1
      %p87 = por %p85, %p86
      %p89 = scmp.ne.s32.totalorder %s72, %s88
      %p90 = scmp.eq.s32.totalorder %s38, 0
      %p91 = por %p89, %p90
      %s92 = ssub.s32 %s32, %s39
      %p93 = scmp.eq.s32.totalorder %s92, 0
      %s95 = sadd.s32 %s94, 1
      %s96 = scalar_select %p93, %s94, %s95
      %p99 = pneg %p93
      %p100 = scmp.eq.s32.totalorder %s32, 1
      %p101 = por %p99, %p100
      %p102 = scmp.ne.s32.totalorder %s94, %s97
      %p103 = scmp.eq.s32.totalorder %s32, 0
      %p104 = por %p102, %p103
      %p105 = scmp.ne.s32.totalorder %s94, %s97
      %p106 = scmp.eq.s32.totalorder %s37, 1
      %p107 = por %p105, %p106
      %p108 = scmp.ne.s32.totalorder %s97, %s98
      %p109 = scmp.eq.s32.totalorder %s37, 0
      %p110 = por %p108, %p109
      %p111 = scmp.ne.s32.totalorder %s97, %s98
      %p112 = scmp.eq.s32.totalorder %s38, 1
      %p113 = por %p111, %p112
      %p115 = scmp.ne.s32.totalorder %s98, %s114
      %p116 = scmp.eq.s32.totalorder %s38, 0
      %p117 = por %p115, %p116
      %s118 = ssub.s32 %s32, %s39
      %p119 = scmp.eq.s32.totalorder %s118, 0
      %s121 = sadd.s32 %s120, 1
      %s122 = scalar_select %p119, %s120, %s121
      %p125 = pneg %p119
      %p126 = scmp.eq.s32.totalorder %s32, 1
      %p127 = por %p125, %p126
      %p128 = scmp.ne.s32.totalorder %s120, %s123
      %p129 = scmp.eq.s32.totalorder %s32, 0
      %p130 = por %p128, %p129
      %p131 = scmp.ne.s32.totalorder %s120, %s123
      %p132 = scmp.eq.s32.totalorder %s37, 1
      %p133 = por %p131, %p132
      %p134 = scmp.ne.s32.totalorder %s123, %s124
      %p135 = scmp.eq.s32.totalorder %s37, 0
      %p136 = por %p134, %p135
      %p137 = scmp.ne.s32.totalorder %s123, %s124
      %p138 = scmp.eq.s32.totalorder %s38, 1
      %p139 = por %p137, %p138
      %p141 = scmp.ne.s32.totalorder %s124, %s140
      %p142 = scmp.eq.s32.totalorder %s38, 0
      %p143 = por %p141, %p142
      %s145 = sadd.s32 %s144, 1
      %p148 = scmp.eq.s32.totalorder %s32, 1
      %p149 = scmp.ne.s32.totalorder %s144, %s146
      %p150 = scmp.eq.s32.totalorder %s32, 0
      %p151 = por %p149, %p150
      %p152 = scmp.ne.s32.totalorder %s144, %s146
      %p153 = scmp.eq.s32.totalorder %s37, 1
      %p154 = por %p152, %p153
      %p155 = scmp.ne.s32.totalorder %s146, %s147
      %p156 = scmp.eq.s32.totalorder %s37, 0
      %p157 = por %p155, %p156
      %p158 = scmp.ne.s32.totalorder %s146, %s147
      %p159 = scmp.eq.s32.totalorder %s38, 1
      %p160 = por %p158, %p159
      %p162 = scmp.ne.s32.totalorder %s147, %s161
      %p163 = scmp.eq.s32.totalorder %s38, 0
      %p164 = por %p162, %p163
      %s166 = sadd.s32 %s165, 1
      %p169 = scmp.eq.s32.totalorder %s32, 1
      %p170 = scmp.ne.s32.totalorder %s165, %s167
      %p171 = scmp.eq.s32.totalorder %s32, 0
      %p172 = por %p170, %p171
      %p173 = scmp.ne.s32.totalorder %s165, %s167
      %p174 = scmp.eq.s32.totalorder %s37, 1
      %p175 = por %p173, %p174
      %p176 = scmp.ne.s32.totalorder %s167, %s168
      %p177 = scmp.eq.s32.totalorder %s37, 0
      %p178 = por %p176, %p177
      %p179 = scmp.ne.s32.totalorder %s167, %s168
      %p180 = scmp.eq.s32.totalorder %s38, 1
      %p181 = por %p179, %p180
      %p183 = scmp.ne.s32.totalorder %s168, %s182
      %p184 = scmp.eq.s32.totalorder %s38, 0
      %p185 = por %p183, %p184
      %s187 = sadd.s32 %s186, 1
      %p190 = scmp.eq.s32.totalorder %s32, 1
      %p191 = scmp.ne.s32.totalorder %s186, %s188
      %p192 = scmp.eq.s32.totalorder %s32, 0
      %p193 = por %p191, %p192
      %p194 = scmp.ne.s32.totalorder %s186, %s188
      %p195 = scmp.eq.s32.totalorder %s37, 1
      %p196 = por %p194, %p195
      %p197 = scmp.ne.s32.totalorder %s188, %s189
      %p198 = scmp.eq.s32.totalorder %s37, 0
      %p199 = por %p197, %p198
      %p200 = scmp.ne.s32.totalorder %s188, %s189
      %p201 = scmp.eq.s32.totalorder %s38, 1
      %p202 = por %p200, %p201
      %p204 = scmp.ne.s32.totalorder %s189, %s203
      %p205 = scmp.eq.s32.totalorder %s38, 0
      %p206 = por %p204, %p205
      %s208 = sadd.s32 %s207, 1
      %p211 = scmp.eq.s32.totalorder %s32, 1
      %p212 = scmp.ne.s32.totalorder %s207, %s209
      %p213 = scmp.eq.s32.totalorder %s32, 0
      %p214 = por %p212, %p213
      %p215 = scmp.ne.s32.totalorder %s207, %s209
      %p216 = scmp.eq.s32.totalorder %s37, 1
      %p217 = por %p215, %p216
      %p218 = scmp.ne.s32.totalorder %s209, %s210
      %p219 = scmp.eq.s32.totalorder %s37, 0
      %p220 = por %p218, %p219
      %p221 = scmp.ne.s32.totalorder %s209, %s210
      %p222 = scmp.eq.s32.totalorder %s38, 1
      %p223 = por %p221, %p222
      %p225 = scmp.ne.s32.totalorder %s210, %s224
      %p226 = scmp.eq.s32.totalorder %s38, 0
      %p227 = por %p225, %p226
      %s229 = sadd.s32 %s228, 1
      %p232 = scmp.eq.s32.totalorder %s32, 1
      %p233 = scmp.ne.s32.totalorder %s228, %s230
      %p234 = scmp.eq.s32.totalorder %s32, 0
      %p235 = por %p233, %p234
      %p236 = scmp.ne.s32.totalorder %s228, %s230
      %p237 = scmp.eq.s32.totalorder %s37, 1
      %p238 = por %p236, %p237
      %p239 = scmp.ne.s32.totalorder %s230, %s231
      %p240 = scmp.eq.s32.totalorder %s37, 0
      %p241 = por %p239, %p240
      %p242 = scmp.ne.s32.totalorder %s230, %s231
      %p243 = scmp.eq.s32.totalorder %s38, 1
      %p244 = por %p242, %p243
      %p246 = scmp.ne.s32.totalorder %s231, %s245
      %p247 = scmp.eq.s32.totalorder %s38, 0
      %p248 = por %p246, %p247
      %s250 = sadd.s32 %s249, 1
      %p253 = scmp.eq.s32.totalorder %s32, 1
      %p254 = scmp.ne.s32.totalorder %s249, %s251
      %p255 = scmp.eq.s32.totalorder %s32, 0
      %p256 = por %p254, %p255
      %p257 = scmp.ne.s32.totalorder %s249, %s251
      %p258 = scmp.eq.s32.totalorder %s37, 1
      %p259 = por %p257, %p258
      %p260 = scmp.ne.s32.totalorder %s251, %s252
      %p261 = scmp.eq.s32.totalorder %s37, 0
      %p262 = por %p260, %p261
      %p263 = scmp.ne.s32.totalorder %s251, %s252
      %p264 = scmp.eq.s32.totalorder %s38, 1
      %p265 = por %p263, %p264
      %p267 = scmp.ne.s32.totalorder %s252, %s266
      %p268 = scmp.eq.s32.totalorder %s38, 0
      %p269 = por %p267, %p268
      %s271 = sadd.s32 %s270, 1
      %p274 = scmp.eq.s32.totalorder %s32, 1
      %p275 = scmp.ne.s32.totalorder %s270, %s272
      %p276 = scmp.eq.s32.totalorder %s32, 0
      %p277 = por %p275, %p276
      %p278 = scmp.ne.s32.totalorder %s270, %s272
      %p279 = scmp.eq.s32.totalorder %s37, 1
      %p280 = por %p278, %p279
      %p281 = scmp.ne.s32.totalorder %s272, %s273
      %p282 = scmp.eq.s32.totalorder %s37, 0
      %p283 = por %p281, %p282
      %p284 = scmp.ne.s32.totalorder %s272, %s273
      %p285 = scmp.eq.s32.totalorder %s38, 1
      %p286 = por %p284, %p285
      %p288 = scmp.ne.s32.totalorder %s273, %s287
      %p289 = scmp.eq.s32.totalorder %s38, 0
      %p290 = por %p288, %p289
      %s292 = sadd.s32 %s291, 1
      %p295 = scmp.eq.s32.totalorder %s32, 1
      %p296 = scmp.ne.s32.totalorder %s291, %s293
      %p297 = scmp.eq.s32.totalorder %s32, 0
      %p298 = por %p296, %p297
      %p299 = scmp.ne.s32.totalorder %s291, %s293
      %p300 = scmp.eq.s32.totalorder %s37, 1
      %p301 = por %p299, %p300
      %p302 = scmp.ne.s32.totalorder %s293, %s294
      %p303 = scmp.eq.s32.totalorder %s37, 0
      %p304 = por %p302, %p303
      %p305 = scmp.ne.s32.totalorder %s293, %s294
      %p306 = scmp.eq.s32.totalorder %s38, 1
      %p307 = por %p305, %p306
      %p309 = scmp.ne.s32.totalorder %s294, %s308
      %p310 = scmp.eq.s32.totalorder %s38, 0
      %p311 = por %p309, %p310
      %s313 = sadd.s32 %s312, 1
      %p316 = scmp.eq.s32.totalorder %s32, 1
      %p317 = scmp.ne.s32.totalorder %s312, %s314
      %p318 = scmp.eq.s32.totalorder %s32, 0
      %p319 = por %p317, %p318
      %p320 = scmp.ne.s32.totalorder %s312, %s314
      %p321 = scmp.eq.s32.totalorder %s37, 1
      %p322 = por %p320, %p321
      %p323 = scmp.ne.s32.totalorder %s314, %s315
      %p324 = scmp.eq.s32.totalorder %s37, 0
      %p325 = por %p323, %p324
      %p326 = scmp.ne.s32.totalorder %s314, %s315
      %p327 = scmp.eq.s32.totalorder %s38, 1
      %p328 = por %p326, %p327
      %p330 = scmp.ne.s32.totalorder %s315, %s329
      %p331 = scmp.eq.s32.totalorder %s38, 0
      %p332 = por %p330, %p331
      %s334 = sadd.s32 %s333, 1
      %p337 = scmp.eq.s32.totalorder %s32, 1
      %p338 = scmp.ne.s32.totalorder %s333, %s335
      %p339 = scmp.eq.s32.totalorder %s32, 0
      %p340 = por %p338, %p339
      %p341 = scmp.ne.s32.totalorder %s333, %s335
      %p342 = scmp.eq.s32.totalorder %s37, 1
      %p343 = por %p341, %p342
      %p344 = scmp.ne.s32.totalorder %s335, %s336
      %p345 = scmp.eq.s32.totalorder %s37, 0
      %p346 = por %p344, %p345
      %p347 = scmp.ne.s32.totalorder %s335, %s336
      %p348 = scmp.eq.s32.totalorder %s38, 1
      %p349 = por %p347, %p348
      %p351 = scmp.ne.s32.totalorder %s336, %s350
      %p352 = scmp.eq.s32.totalorder %s38, 0
      %p353 = por %p351, %p352
      %s355 = sadd.s32 %s354, 1
      %p358 = scmp.eq.s32.totalorder %s32, 1
      %p359 = scmp.ne.s32.totalorder %s354, %s356
      %p360 = scmp.eq.s32.totalorder %s32, 0
      %p361 = por %p359, %p360
      %p362 = scmp.ne.s32.totalorder %s354, %s356
      %p363 = scmp.eq.s32.totalorder %s37, 1
      %p364 = por %p362, %p363
      %p365 = scmp.ne.s32.totalorder %s356, %s357
      %p366 = scmp.eq.s32.totalorder %s37, 0
      %p367 = por %p365, %p366
      %p368 = scmp.ne.s32.totalorder %s356, %s357
      %p369 = scmp.eq.s32.totalorder %s38, 1
      %p370 = por %p368, %p369
      %p372 = scmp.ne.s32.totalorder %s357, %s371
      %p373 = scmp.eq.s32.totalorder %s38, 0
      %p374 = por %p372, %p373
      %s376 = sadd.s32 %s375, 1
      %p379 = scmp.eq.s32.totalorder %s32, 1
      %p380 = scmp.ne.s32.totalorder %s375, %s377
      %p381 = scmp.eq.s32.totalorder %s32, 0
      %p382 = por %p380, %p381
      %p383 = scmp.ne.s32.totalorder %s375, %s377
      %p384 = scmp.eq.s32.totalorder %s37, 1
      %p385 = por %p383, %p384
      %p386 = scmp.ne.s32.totalorder %s377, %s378
      %p387 = scmp.eq.s32.totalorder %s37, 0
      %p388 = por %p386, %p387
      %p389 = scmp.ne.s32.totalorder %s377, %s378
      %p390 = scmp.eq.s32.totalorder %s38, 1
      %p391 = por %p389, %p390
      %p393 = scmp.ne.s32.totalorder %s378, %s392
      %p394 = scmp.eq.s32.totalorder %s38, 0
      %p395 = por %p393, %p394
      %s397 = sadd.s32 %s396, 1
      %p400 = scmp.eq.s32.totalorder %s32, 1
      %p401 = scmp.ne.s32.totalorder %s396, %s398
      %p402 = scmp.eq.s32.totalorder %s32, 0
      %p403 = por %p401, %p402
      %p404 = scmp.ne.s32.totalorder %s396, %s398
      %p405 = scmp.eq.s32.totalorder %s37, 1
      %p406 = por %p404, %p405
      %p407 = scmp.ne.s32.totalorder %s398, %s399
      %p408 = scmp.eq.s32.totalorder %s37, 0
      %p409 = por %p407, %p408
      %p410 = scmp.ne.s32.totalorder %s398, %s399
      %p411 = scmp.eq.s32.totalorder %s38, 1
      %p412 = por %p410, %p411
      %p414 = scmp.ne.s32.totalorder %s399, %s413
      %p415 = scmp.eq.s32.totalorder %s38, 0
      %p416 = por %p414, %p415
      %s418 = sadd.s32 %s417, 1
      %p421 = scmp.eq.s32.totalorder %s32, 1
      %p422 = scmp.ne.s32.totalorder %s417, %s419
      %p423 = scmp.eq.s32.totalorder %s32, 0
      %p424 = por %p422, %p423
      %p425 = scmp.ne.s32.totalorder %s417, %s419
      %p426 = scmp.eq.s32.totalorder %s37, 1
      %p427 = por %p425, %p426
      %p428 = scmp.ne.s32.totalorder %s419, %s420
      %p429 = scmp.eq.s32.totalorder %s37, 0
      %p430 = por %p428, %p429
      %p431 = scmp.ne.s32.totalorder %s419, %s420
      %p432 = scmp.eq.s32.totalorder %s38, 1
      %p433 = por %p431, %p432
      %p435 = scmp.ne.s32.totalorder %s420, %s434
      %p436 = scmp.eq.s32.totalorder %s38, 0
      %p437 = por %p435, %p436
      %s438 = ssub.s32 %s32, %s39
      %p439 = scmp.eq.s32.totalorder %s438, 0
      %s441 = sadd.s32 %s440, 1
      %s442 = scalar_select %p439, %s440, %s441
      %p445 = pneg %p439
      %p446 = scmp.eq.s32.totalorder %s32, 1
      %p447 = por %p445, %p446
      %p448 = scmp.ne.s32.totalorder %s440, %s443
      %p449 = scmp.eq.s32.totalorder %s32, 0
      %p450 = por %p448, %p449
      %p451 = scmp.ne.s32.totalorder %s440, %s443
      %p452 = scmp.eq.s32.totalorder %s37, 1
      %p453 = por %p451, %p452
      %p454 = scmp.ne.s32.totalorder %s443, %s444
      %p455 = scmp.eq.s32.totalorder %s37, 0
      %p456 = por %p454, %p455
      %p457 = scmp.ne.s32.totalorder %s443, %s444
      %p458 = scmp.eq.s32.totalorder %s38, 1
      %p459 = por %p457, %p458
      %p461 = scmp.ne.s32.totalorder %s444, %s460
      %p462 = scmp.eq.s32.totalorder %s38, 0
      %p463 = por %p461, %p462
      %p464 = scmp.le.s32.totalorder 1, %s32
      %p465 = scmp.lt.s32.totalorder %s32, 3
      %p466 = pnand %p464, %p465
      %p467 = pneg %p466
      // Predicated region
      $region9: #{tpu_custom_call.1} parent=5 // pred_check
        _
      $region10: #{tpu_custom_call.1} parent=5 // pred_check_branch
        %469 = sbr.rel (%p466) target = $region12
      $region11: #{tpu_custom_call.1} parent=5 // pred_region
        %s470 = ssub.s32 %s32, 1
        // Predicated region
        $region13: #{tpu_custom_call.1} parent=11 // pred_check
          %p471 = pneg %p157
        $region14: #{tpu_custom_call.1} parent=11 // pred_check_branch
          %473 = sbr.rel (%p471) target = $region16
        $region15: #{tpu_custom_call.1} parent=11 // pred_region
          _
        $region16: #{tpu_custom_call.1} parent=11 // pred_fallthru
          _
        // Predicated region
        $region17: #{tpu_custom_call.1} parent=11 // pred_check
          %p474 = pneg %p178
        $region18: #{tpu_custom_call.1} parent=11 // pred_check_branch
          %476 = sbr.rel (%p474) target = $region20
        $region19: #{tpu_custom_call.1} parent=11 // pred_region
          _
        $region20: #{tpu_custom_call.1} parent=11 // pred_fallthru
          _
        // Predicated region
        $region21: #{tpu_custom_call.1} parent=11 // pred_check
          %p477 = pneg %p199
        $region22: #{tpu_custom_call.1} parent=11 // pred_check_branch
          %479 = sbr.rel (%p477) target = $region24
        $region23: #{tpu_custom_call.1} parent=11 // pred_region
          _
        $region24: #{tpu_custom_call.1} parent=11 // pred_fallthru
          _
        // Predicated region
        $region25: #{tpu_custom_call.1} parent=11 // pred_check
          %p480 = pneg %p220
        $region26: #{tpu_custom_call.1} parent=11 // pred_check_branch
          %482 = sbr.rel (%p480) target = $region28
        $region27: #{tpu_custom_call.1} parent=11 // pred_region
          %484 = vsyncadd [#allocation7], 0
          %s485 = sshll.u32 %s7, 4
          %s486 = int_to_ptr.hbm [resolvable:$true] %s485
          %s487 = sshll.u32 [#allocation8], 4
          %s488 = int_to_ptr.vmem [resolvable:$true] %s487
          %493 = dma.hbm_to_vmem [thread:$0]  %s486, 1024, %s488, [#allocation7], 128, 128, 8
        $region28: #{tpu_custom_call.1} parent=11 // pred_fallthru
          _
        // Predicated region
        $region29: #{tpu_custom_call.1} parent=11 // pred_check
          %p494 = pneg %p241
        $region30: #{tpu_custom_call.1} parent=11 // pred_check_branch
          %496 = sbr.rel (%p494) target = $region32
        $region31: #{tpu_custom_call.1} parent=11 // pred_region
          _
        $region32: #{tpu_custom_call.1} parent=11 // pred_fallthru
          _
        // Predicated region
        $region33: #{tpu_custom_call.1} parent=11 // pred_check
          %p497 = pneg %p262
        $region34: #{tpu_custom_call.1} parent=11 // pred_check_branch
          %499 = sbr.rel (%p497) target = $region36
        $region35: #{tpu_custom_call.1} parent=11 // pred_region
          _
        $region36: #{tpu_custom_call.1} parent=11 // pred_fallthru
          _
        // Predicated region
        $region37: #{tpu_custom_call.1} parent=11 // pred_check
          %p500 = pneg %p283
        $region38: #{tpu_custom_call.1} parent=11 // pred_check_branch
          %502 = sbr.rel (%p500) target = $region40
        $region39: #{tpu_custom_call.1} parent=11 // pred_region
          _
        $region40: #{tpu_custom_call.1} parent=11 // pred_fallthru
          _
        // Predicated region
        $region41: #{tpu_custom_call.1} parent=11 // pred_check
          %p503 = pneg %p304
        $region42: #{tpu_custom_call.1} parent=11 // pred_check_branch
          %505 = sbr.rel (%p503) target = $region44
        $region43: #{tpu_custom_call.1} parent=11 // pred_region
          %507 = vsyncadd [#allocation10], 0
          %s508 = sshll.u32 %s11, 4
          %s509 = int_to_ptr.hbm [resolvable:$true] %s508
          %s510 = sshll.u32 [#allocation9], 4
          %s511 = int_to_ptr.vmem [resolvable:$true] %s510
          %516 = dma.hbm_to_vmem [thread:$0]  %s509, 1024, %s511, [#allocation10], 128, 128, 8
        $region44: #{tpu_custom_call.1} parent=11 // pred_fallthru
          _
        // Predicated region
        $region45: #{tpu_custom_call.1} parent=11 // pred_check
          %p517 = pneg %p325
        $region46: #{tpu_custom_call.1} parent=11 // pred_check_branch
          %519 = sbr.rel (%p517) target = $region48
        $region47: #{tpu_custom_call.1} parent=11 // pred_region
          _
        $region48: #{tpu_custom_call.1} parent=11 // pred_fallthru
          _
        // Predicated region
        $region49: #{tpu_custom_call.1} parent=11 // pred_check
          %p520 = pneg %p346
        $region50: #{tpu_custom_call.1} parent=11 // pred_check_branch
          %522 = sbr.rel (%p520) target = $region52
        $region51: #{tpu_custom_call.1} parent=11 // pred_region
          _
        $region52: #{tpu_custom_call.1} parent=11 // pred_fallthru
          _
        // Predicated region
        $region53: #{tpu_custom_call.1} parent=11 // pred_check
          %p523 = pneg %p367
        $region54: #{tpu_custom_call.1} parent=11 // pred_check_branch
          %525 = sbr.rel (%p523) target = $region56
        $region55: #{tpu_custom_call.1} parent=11 // pred_region
          _
        $region56: #{tpu_custom_call.1} parent=11 // pred_fallthru
          _
        // Predicated region
        $region57: #{tpu_custom_call.1} parent=11 // pred_check
          %p526 = pneg %p388
        $region58: #{tpu_custom_call.1} parent=11 // pred_check_branch
          %528 = sbr.rel (%p526) target = $region60
        $region59: #{tpu_custom_call.1} parent=11 // pred_region
          _
        $region60: #{tpu_custom_call.1} parent=11 // pred_fallthru
          _
        // Predicated region
        $region61: #{tpu_custom_call.1} parent=11 // pred_check
          %p529 = pneg %p409
        $region62: #{tpu_custom_call.1} parent=11 // pred_check_branch
          %531 = sbr.rel (%p529) target = $region64
        $region63: #{tpu_custom_call.1} parent=11 // pred_region
          _
        $region64: #{tpu_custom_call.1} parent=11 // pred_fallthru
          _
        // Predicated region
        $region65: #{tpu_custom_call.1} parent=11 // pred_check
          %p532 = pneg %p430
        $region66: #{tpu_custom_call.1} parent=11 // pred_check_branch
          %534 = sbr.rel (%p532) target = $region68
        $region67: #{tpu_custom_call.1} parent=11 // pred_region
          %536 = vsyncadd [#allocation5], 0
          %s538 = sshll.u32 %s17, 4
          %s539 = int_to_ptr.vmem [resolvable:$true] %s538
          %541 = dma.vmem_to_smem %s539, 32, [#allocation11], [#allocation5]
        $region68: #{tpu_custom_call.1} parent=11 // pred_fallthru
          _
      $region12: #{tpu_custom_call.1} parent=5 // pred_fallthru
        _
      %p542 = scmp.lt.s32.totalorder %s32, 2
      // Predicated region
      $region69: #{tpu_custom_call.1} parent=5 // pred_check
        %p543 = pneg %p542
      $region70: #{tpu_custom_call.1} parent=5 // pred_check_branch
        %545 = sbr.rel (%p543) target = $region72
      $region71: #{tpu_custom_call.1} parent=5 // pred_region
        // Predicated region
        $region73: #{tpu_custom_call.1} parent=71 // pred_check
          %p546 = pneg %p52
        $region74: #{tpu_custom_call.1} parent=71 // pred_check_branch
          %548 = sbr.rel (%p546) target = $region76
        $region75: #{tpu_custom_call.1} parent=71 // pred_region
          %s549 = smul.u32 4, %s32
          %p550 = scmp.lt.s32.totalorder %s549, 7
          %s551 = scalar_select %p550, %s549, 7
          %s552 = smul.addr %s551, 8
          %s553 = scalar_lea.vmem %s0, %s552
          %s554 = smul.u32 4, %s32
        $region76: #{tpu_custom_call.1} parent=71 // pred_fallthru
          _
        // Predicated region
        $region77: #{tpu_custom_call.1} parent=71 // pred_check
          %p555 = pneg %p78
        $region78: #{tpu_custom_call.1} parent=71 // pred_check_branch
          %557 = sbr.rel (%p555) target = $region80
        $region79: #{tpu_custom_call.1} parent=71 // pred_region
          %s558 = sand.u32 %s68, 1
          %s559 = sand.u32 %s68, 1
          %s560 = smul.addr %s559, 64
          %s561 = scalar_lea.vmem [#allocation2], %s560
          %s562 = smul.u32 4, %s32
          %s563 = smul.addr %s562, 8
          %s564 = scalar_lea.vmem %s1, %s563
          // Predicated region
          $region81: #{tpu_custom_call.1} parent=79 // pred_check
            _
          $region82: #{tpu_custom_call.1} parent=79 // pred_check_branch
            %566 = sbr.rel (0) target = $region84
          $region83: #{tpu_custom_call.1} parent=79 // pred_region
            // Predicated region
            $region85: #{tpu_custom_call.1} parent=83 // pred_check
              _
            $region86: #{tpu_custom_call.1} parent=83 // pred_check_branch
              %568 = sbr.rel (0) target = $region88
            $region87: #{tpu_custom_call.1} parent=83 // pred_region
              // Predicated region
              $region100: #{tpu_custom_call.1} parent=87 // pred_check
                _
              $region101: #{tpu_custom_call.1} parent=87 // pred_check_branch
                %598 = sbr.rel (0) target = $region103
              $region102: #{tpu_custom_call.1} parent=87 // pred_region
                loop: start=0, step=1, limit=1
                $region104: #{tpu_custom_call.1} parent=102 // loop_pre_header
                  _
                $region105: #{tpu_custom_call.1} parent=102 // loop_header
                  %s600 = sphi 0, %s604
                  %p601 = scmp.ge.s32.totalorder %s600, 1
                  %s605 = sphi %s564, %s564
                  %s606 = sphi %s561, %s561
                $region106: #{tpu_custom_call.1} parent=102 // loop_header_branch
                  %603 = sbr.rel (%p601) target = $region110
                $region107: #{tpu_custom_call.1} parent=102 // loop_body
                  %v607 = vld [vmem:[%s605] sm:$0xff]
                  %608 = vst [vmem:[%s606] sm:$0xff] %v607
                  %v609 = vld [vmem:[%s605 + $0x8] sm:$0xff]
                  %610 = vst [vmem:[%s606 + $0x8] sm:$0xff] %v609
                  %v611 = vld [vmem:[%s605 + $0x10] sm:$0xff]
                  %612 = vst [vmem:[%s606 + $0x10] sm:$0xff] %v611
                  %v613 = vld [vmem:[%s605 + $0x18] sm:$0xff]
                  %614 = vst [vmem:[%s606 + $0x18] sm:$0xff] %v613
                  %v615 = vld [vmem:[%s605 + $0x40] sm:$0xff]
                  %616 = vst [vmem:[%s606 + $0x20] sm:$0xff] %v615
                  %v617 = vld [vmem:[%s605 + $0x48] sm:$0xff]
                  %618 = vst [vmem:[%s606 + $0x28] sm:$0xff] %v617
                  %v619 = vld [vmem:[%s605 + $0x50] sm:$0xff]
                  %620 = vst [vmem:[%s606 + $0x30] sm:$0xff] %v619
                  %v621 = vld [vmem:[%s605 + $0x58] sm:$0xff]
                  %622 = vst [vmem:[%s606 + $0x38] sm:$0xff] %v621
                $region108: #{tpu_custom_call.1} parent=102 // loop_footer
                  %s604 = sadd.s32 1, %s600
                $region109: #{tpu_custom_call.1} parent=102 // loop_footer_branch
                  %599 = sbr.rel target = $region105
                $region110: #{tpu_custom_call.1} parent=102 // loop_exit
                  _
              $region103: #{tpu_custom_call.1} parent=87 // pred_fallthru
                _
              // Predicated region
              $region111: #{tpu_custom_call.1} parent=87 // pred_check
                _
              $region112: #{tpu_custom_call.1} parent=87 // pred_check_branch
                %624 = sbr.rel target = $region114
              $region113: #{tpu_custom_call.1} parent=87 // pred_region
                _
              $region114: #{tpu_custom_call.1} parent=87 // pred_fallthru
                _
            $region88: #{tpu_custom_call.1} parent=83 // pred_fallthru
              _
            // Predicated region
            $region89: #{tpu_custom_call.1} parent=83 // pred_check
              _
            $region90: #{tpu_custom_call.1} parent=83 // pred_check_branch
              %570 = sbr.rel target = $region92
            $region91: #{tpu_custom_call.1} parent=83 // pred_region
              %s572 = ssub.s32 256, 1
              loop: start=0, step=1, limit=1
              $region93: #{tpu_custom_call.1} parent=91 // loop_pre_header
                _
              $region94: #{tpu_custom_call.1} parent=91 // loop_header
                %s574 = sphi 0, %s578
                %p575 = scmp.ge.s32.totalorder %s574, 1
                %s579 = sphi %s564, %s564
                %s580 = sphi %s561, %s561
              $region95: #{tpu_custom_call.1} parent=91 // loop_header_branch
                %577 = sbr.rel (%p575) target = $region99
              $region96: #{tpu_custom_call.1} parent=91 // loop_body
                %v581 = vld [vmem:[%s579] sm:%s572]
                %582 = vst [vmem:[%s580] sm:%s572] %v581
                %v583 = vld [vmem:[%s579 + $0x8] sm:%s572]
                %584 = vst [vmem:[%s580 + $0x8] sm:%s572] %v583
                %v585 = vld [vmem:[%s579 + $0x10] sm:%s572]
                %586 = vst [vmem:[%s580 + $0x10] sm:%s572] %v585
                %v587 = vld [vmem:[%s579 + $0x18] sm:%s572]
                %588 = vst [vmem:[%s580 + $0x18] sm:%s572] %v587
                %v589 = vld [vmem:[%s579 + $0x40] sm:%s572]
                %590 = vst [vmem:[%s580 + $0x20] sm:%s572] %v589
                %v591 = vld [vmem:[%s579 + $0x48] sm:%s572]
                %592 = vst [vmem:[%s580 + $0x28] sm:%s572] %v591
                %v593 = vld [vmem:[%s579 + $0x50] sm:%s572]
                %594 = vst [vmem:[%s580 + $0x30] sm:%s572] %v593
                %v595 = vld [vmem:[%s579 + $0x58] sm:%s572]
                %596 = vst [vmem:[%s580 + $0x38] sm:%s572] %v595
              $region97: #{tpu_custom_call.1} parent=91 // loop_footer
                %s578 = sadd.s32 1, %s574
              $region98: #{tpu_custom_call.1} parent=91 // loop_footer_branch
                %573 = sbr.rel target = $region94
              $region99: #{tpu_custom_call.1} parent=91 // loop_exit
                _
            $region92: #{tpu_custom_call.1} parent=83 // pred_fallthru
              _
          $region84: #{tpu_custom_call.1} parent=79 // pred_fallthru
            _
          %625 = vnop
        $region80: #{tpu_custom_call.1} parent=71 // pred_fallthru
          _
        // Predicated region
        $region115: #{tpu_custom_call.1} parent=71 // pred_check
          %p626 = pneg %p104
        $region116: #{tpu_custom_call.1} parent=71 // pred_check_branch
          %628 = sbr.rel (%p626) target = $region118
        $region117: #{tpu_custom_call.1} parent=71 // pred_region
          #allocation13 [shape = 'u32[6]{0}', space=smem, size = 0x18, scoped, tag = 'DMA stride descriptor']
          %s629 = sand.u32 %s94, 1
          %s630 = scalar_lea.sflag [#allocation4], %s629
          %s631 = sand.u32 %s94, 1
          %s632 = smul.addr %s631, 512
          %s633 = scalar_lea.vmem [#allocation3], %s632
          %s634 = smul.u32 4, %s32
          %636 = vsyncadd %s630, 0
          %s637 = smul.addr %s634, 8
          %s638 = smul.addr %s637, 8
          %s639 = scalar_lea.hbm %s2, %s638
          %s641 = sshll.u32 1, 14
          %s642 = sxor.u32 4294967295, %s641
          %s644 = sld [smem:[#allocation0]]
          %s645 = sadd.s32 2, %s644
          %s647 = sshll.u32 7, 26
          %s648 = sxor.u32 4294967295, %s647
          %s649 = sand.u32 0, %s648
          %s650 = sshll.u32 %s645, 26
          %s651 = sor.u32 %s649, %s650
          %s652 = sshll.u32 %s639, 4
          %s653 = int_to_ptr.hbm [resolvable:$true] %s652
          %s654 = sshll.u32 %s633, 4
          %s655 = int_to_ptr.vmem [resolvable:$true] %s654
          %661 = sst [smem:[#allocation13]] 8192
          %s662 = scalar_lea.smem [#allocation13], 1
          %663 = sst [smem:[%s662]] 4096
          %s664 = scalar_lea.smem [#allocation13], 2
          %665 = sst [smem:[%s664]] 32
          %s666 = scalar_lea.smem [#allocation13], 3
          %667 = sst [smem:[%s666]] 128
          %s668 = scalar_lea.smem [#allocation13], 4
          %669 = sst [smem:[%s668]] 128
          %s670 = scalar_lea.smem [#allocation13], 5
          %671 = sst [smem:[%s670]] 8
          %673 = dma.general %s653, 8192, %s655, %s630, [#allocation12], [#allocation13], %s651, 0
        $region118: #{tpu_custom_call.1} parent=71 // pred_fallthru
          _
        // Predicated region
        $region119: #{tpu_custom_call.1} parent=71 // pred_check
          %p674 = pneg %p130
        $region120: #{tpu_custom_call.1} parent=71 // pred_check_branch
          %676 = sbr.rel (%p674) target = $region122
        $region121: #{tpu_custom_call.1} parent=71 // pred_region
          #allocation15 [shape = 'u32[6]{0}', space=smem, size = 0x18, scoped, tag = 'DMA stride descriptor']
          %s677 = sand.u32 %s32, 1
          %s678 = scalar_lea.sflag [#allocation7], %s677
          %s679 = sand.u32 %s120, 1
          %s680 = smul.addr %s679, 512
          %s681 = scalar_lea.vmem [#allocation6], %s680
          %s682 = smul.u32 4, %s32
          %684 = vsyncadd %s678, 0
          %s685 = smul.addr %s682, 8
          %s686 = smul.addr %s685, 8
          %s687 = scalar_lea.hbm %s3, %s686
          %s689 = sshll.u32 1, 14
          %s690 = sxor.u32 4294967295, %s689
          %s692 = sld [smem:[#allocation0]]
          %s693 = sadd.s32 2, %s692
          %s695 = sshll.u32 7, 26
          %s696 = sxor.u32 4294967295, %s695
          %s697 = sand.u32 0, %s696
          %s698 = sshll.u32 %s693, 26
          %s699 = sor.u32 %s697, %s698
          %s700 = sshll.u32 %s687, 4
          %s701 = int_to_ptr.hbm [resolvable:$true] %s700
          %s702 = sshll.u32 %s681, 4
          %s703 = int_to_ptr.vmem [resolvable:$true] %s702
          %709 = sst [smem:[#allocation15]] 8192
          %s710 = scalar_lea.smem [#allocation15], 1
          %711 = sst [smem:[%s710]] 4096
          %s712 = scalar_lea.smem [#allocation15], 2
          %713 = sst [smem:[%s712]] 32
          %s714 = scalar_lea.smem [#allocation15], 3
          %715 = sst [smem:[%s714]] 128
          %s716 = scalar_lea.smem [#allocation15], 4
          %717 = sst [smem:[%s716]] 128
          %s718 = scalar_lea.smem [#allocation15], 5
          %719 = sst [smem:[%s718]] 8
          %721 = dma.general %s701, 8192, %s703, %s678, [#allocation14], [#allocation15], %s699, 0
        $region122: #{tpu_custom_call.1} parent=71 // pred_fallthru
          _
      $region72: #{tpu_custom_call.1} parent=5 // pred_fallthru
        _
      %p722 = scmp.le.s32.totalorder 1, %s32
      %p723 = scmp.lt.s32.totalorder %s32, 3
      %p724 = pnand %p722, %p723
      %p725 = pneg %p724
      // Predicated region
      $region123: #{tpu_custom_call.1} parent=5 // pred_check
        _
      $region124: #{tpu_custom_call.1} parent=5 // pred_check_branch
        %727 = sbr.rel (%p724) target = $region126
      $region125: #{tpu_custom_call.1} parent=5 // pred_region
        %s728 = ssub.s32 %s32, 1
        %s729 = sand.u32 %s71, 1
        %s730 = sand.u32 %s71, 1
        %s731 = smul.addr %s730, 64
        %s732 = scalar_lea.vmem [#allocation2], %s731
        // Predicated region
        $region127: #{tpu_custom_call.1} parent=125 // pred_check
          %p733 = pneg %p84
        $region128: #{tpu_custom_call.1} parent=125 // pred_check_branch
          %735 = sbr.rel (%p733) target = $region130
        $region129: #{tpu_custom_call.1} parent=125 // pred_region
          _
        $region130: #{tpu_custom_call.1} parent=125 // pred_fallthru
          _
        %s736 = sand.u32 %s97, 1
        %s737 = scalar_lea.sflag [#allocation4], %s736
        %s738 = sand.u32 %s97, 1
        %s739 = smul.addr %s738, 512
        %s740 = scalar_lea.vmem [#allocation3], %s739
        // Predicated region
        $region131: #{tpu_custom_call.1} parent=125 // pred_check
          %p741 = pneg %p110
        $region132: #{tpu_custom_call.1} parent=125 // pred_check_branch
          %743 = sbr.rel (%p741) target = $region134
        $region133: #{tpu_custom_call.1} parent=125 // pred_region
          %745 = dma.done %s737, 8192
        $region134: #{tpu_custom_call.1} parent=125 // pred_fallthru
          _
        %s746 = sand.u32 %s37, 1
        %s747 = scalar_lea.sflag [#allocation7], %s746
        %s748 = sand.u32 %s123, 1
        %s749 = smul.addr %s748, 512
        %s750 = scalar_lea.vmem [#allocation6], %s749
        // Predicated region
        $region135: #{tpu_custom_call.1} parent=125 // pred_check
          %p751 = pneg %p136
        $region136: #{tpu_custom_call.1} parent=125 // pred_check_branch
          %753 = sbr.rel (%p751) target = $region138
        $region137: #{tpu_custom_call.1} parent=125 // pred_region
          %755 = dma.done %s747, 8192
        $region138: #{tpu_custom_call.1} parent=125 // pred_fallthru
          _
        // Predicated region
        $region139: #{tpu_custom_call.1} parent=125 // pred_check
          %p756 = pneg %p220
        $region140: #{tpu_custom_call.1} parent=125 // pred_check_branch
          %758 = sbr.rel (%p756) target = $region142
        $region141: #{tpu_custom_call.1} parent=125 // pred_region
          %760 = dma.done [#allocation7], 1024
        $region142: #{tpu_custom_call.1} parent=125 // pred_fallthru
          _
        // Predicated region
        $region143: #{tpu_custom_call.1} parent=125 // pred_check
          %p761 = pneg %p304
        $region144: #{tpu_custom_call.1} parent=125 // pred_check_branch
          %763 = sbr.rel (%p761) target = $region146
        $region145: #{tpu_custom_call.1} parent=125 // pred_region
          %765 = dma.done [#allocation10], 1024
        $region146: #{tpu_custom_call.1} parent=125 // pred_fallthru
          _
        // Predicated region
        $region147: #{tpu_custom_call.1} parent=125 // pred_check
          %p766 = pneg %p430
        $region148: #{tpu_custom_call.1} parent=125 // pred_check_branch
          %768 = sbr.rel (%p766) target = $region150
        $region149: #{tpu_custom_call.1} parent=125 // pred_region
          %770 = dma.done [#allocation5], 32
        $region150: #{tpu_custom_call.1} parent=125 // pred_fallthru
          _
        %771 = sfence
        %s772 = smul.u32 4, %s37
        %p773 = scmp.lt.s32.totalorder %s772, 7
        %s774 = scalar_select %p773, %s772, 7
        %s775 = smul.addr %s774, 8
        %s776 = scalar_lea.vmem %s0, %s775
        %p777 = pneg %p58
        %p778 = pneg %p55
        %s779 = sand.u32 %s71, 1
        %s780 = sand.u32 %s71, 1
        %s781 = smul.addr %s780, 64
        %s782 = scalar_lea.vmem [#allocation2], %s781
        %p783 = pneg %p84
        %p784 = pneg %p81
        %s785 = sand.u32 %s97, 1
        %s786 = scalar_lea.sflag [#allocation4], %s785
        %s787 = sand.u32 %s97, 1
        %s788 = smul.addr %s787, 512
        %s789 = scalar_lea.vmem [#allocation3], %s788
        %p790 = pneg %p110
        %p791 = pneg %p107
        %s792 = sand.u32 %s37, 1
        %s793 = scalar_lea.sflag [#allocation7], %s792
        %s794 = sand.u32 %s123, 1
        %s795 = smul.addr %s794, 512
        %s796 = scalar_lea.vmem [#allocation6], %s795
        %p797 = pneg %p136
        %p798 = pneg %p133
        %p799 = pneg %p157
        %p800 = pneg %p154
        %p801 = pneg %p178
        %p802 = pneg %p175
        %p803 = pneg %p199
        %p804 = pneg %p196
        %p805 = pneg %p220
        %p806 = pneg %p217
        %p807 = pneg %p241
        %p808 = pneg %p238
        %p809 = pneg %p262
        %p810 = pneg %p259
        %p811 = pneg %p283
        %p812 = pneg %p280
        %p813 = pneg %p304
        %p814 = pneg %p301
        %p815 = pneg %p325
        %p816 = pneg %p322
        %p817 = pneg %p346
        %p818 = pneg %p343
        %p819 = pneg %p367
        %p820 = pneg %p364
        %p821 = pneg %p388
        %p822 = pneg %p385
        %p823 = pneg %p409
        %p824 = pneg %p406
        %p825 = pneg %p430
        %p826 = pneg %p427
        %p827 = pneg %p456
        %p828 = pneg %p453
        %s829 = smul.u32 4, %s37
        %p830 = scmp.lt.s32.totalorder %s829, 7
        %s831 = scalar_select %p830, %s829, 7
        %s832 = smul.addr %s831, 8
        %s833 = scalar_lea.vmem %s18, %s832
        %s834 = smul.u32 4, %s37
        %p835 = scmp.lt.s32.totalorder %s834, 7
        %s836 = scalar_select %p835, %s834, 7
        %s837 = smul.addr %s836, 8
        %s838 = scalar_lea.vmem %s0, %s837
        %s839 = smul.u32 4, %s37
        %s840 = smul.u32 4, %s37
        %s841 = smul.u32 4, %s37
        %s842 = smul.u32 4, %s37
        %s843 = smul.u32 4, %s37
        %p844 = scmp.lt.s32.totalorder %s843, 7
        %s845 = scalar_select %p844, %s843, 7
        %s846 = smul.addr %s845, 8
        %s847 = scalar_lea.vmem %s18, %s846
        %s848 = smul.u32 4, %s37
        %v849 = vld [vmem:[%s838] sm:$0xff]
        %v850 = vld [vmem:[%s838 + $0x8] sm:$0xff]
        %v851 = vld [vmem:[%s838 + $0x10] sm:$0xff]
        %v852 = vld [vmem:[%s838 + $0x18] sm:$0xff]
        %v853 = vlaneseq
        %v854 = vand.u32 %v853, 127
        %vm855 = vcmp.lt.s32.totalorder %v854, 16
        %v856 = vsel %vm855, 1, 0
        %v857 = vcvt.s32.f32 %v856
        %v858 = vsub.f32 1.0, %v857
        %vm859 = vcmp.lt.s32.totalorder %v854, 32
        %v860 = vsel %vm859, 1, 0
        %v861 = vcvt.s32.f32 %v860
        %v862 = vsub.f32 1.0, %v861
        %v863 = vld [vmem:[%s5] sm:$0xff]
        %v864 = vld [vmem:[%s5 + $0x8] sm:$0xff]
        %v865 = vld [vmem:[%s5 + $0x10] sm:$0xff]
        %v866 = vld [vmem:[%s5 + $0x18] sm:$0xff]
        %v867 = vld [vmem:[%s6] sm:$0x1]
        %v869 = vperm.slane %v867, 0
        %vm871 = vcmask 261120
        %v873 = vsel %vm871, %v849, 0
        %v876 = vsel %vm871, %v850, 0
        %v879 = vsel %vm871, %v851, 0
        %v882 = vsel %vm871, %v852, 0
        %884 = vmatpush.msra.mxu0 0.0
        %885 = vmatpush.msra.mxu0 0.0
        %886 = vmatpush.msra.mxu0 0.0
        %887 = vmatpush.msra.mxu0 0.0
        %888 = vmatpush.msra.mxu0 0.0
        %889 = vmatpush.msra.mxu0 0.0
        %890 = vmatpush.msra.mxu0 0.0
        %891 = vmatpush.msra.mxu0 0.0
        %892 = vmatpush.msra.mxu0 0.0
        %893 = vmatpush.msra.mxu0 0.0
        %894 = vmatpush.msra.mxu0 0.0
        %895 = vmatpush.msra.mxu0 0.0
        %896 = vmatpush.msra.mxu0 %v866
        %897 = vmatpush.msra.mxu0 %v865
        %898 = vmatpush.msra.mxu0 %v864
        %899 = vmatpush.msra.mxu0 %v863
        %900 = vmatmul.f32.gmra.mxu0 %v873
        %v901 = vpop.f32.mrf.mxu0
        %v902 = vadd.f32 %v869, %v901
        %903 = vmatmul.f32.gmra.mxu0 %v876
        %v904 = vpop.f32.mrf.mxu0
        %v905 = vadd.f32 %v869, %v904
        %906 = vmatmul.f32.gmra.mxu0 %v879
        %v907 = vpop.f32.mrf.mxu0
        %v908 = vadd.f32 %v869, %v907
        %909 = vmatmul.f32.gmra.mxu0 %v882
        %v910 = vpop.f32.mrf.mxu0
        %v911 = vadd.f32 %v869, %v910
        %912 = vdwg.mxu0
        %v913 = vld [vmem:[#allocation8] sm:$0xff]
        %v914 = vld [vmem:[#allocation8 + $0x8] sm:$0xff]
        %v915 = vld [vmem:[#allocation8 + $0x10] sm:$0xff]
        %v916 = vld [vmem:[#allocation8 + $0x18] sm:$0xff]
        %v917 = vld [vmem:[%s8] sm:$0x1]
        %v919 = vperm.slane %v917, 0
        %921 = vmatpush.msra.mxu0 0.0
        %922 = vmatpush.msra.mxu0 0.0
        %923 = vmatpush.msra.mxu0 0.0
        %924 = vmatpush.msra.mxu0 0.0
        %925 = vmatpush.msra.mxu0 0.0
        %926 = vmatpush.msra.mxu0 0.0
        %927 = vmatpush.msra.mxu0 0.0
        %928 = vmatpush.msra.mxu0 0.0
        %929 = vmatpush.msra.mxu0 0.0
        %930 = vmatpush.msra.mxu0 0.0
        %931 = vmatpush.msra.mxu0 0.0
        %932 = vmatpush.msra.mxu0 0.0
        %933 = vmatpush.msra.mxu0 %v916
        %934 = vmatpush.msra.mxu0 %v915
        %935 = vmatpush.msra.mxu0 %v914
        %936 = vmatpush.msra.mxu0 %v913
        %937 = vmatmul.f32.gmra.mxu0 %v873
        %v938 = vpop.f32.mrf.mxu0
        %v939 = vadd.f32 %v919, %v938
        %940 = vmatmul.f32.gmra.mxu0 %v876
        %v941 = vpop.f32.mrf.mxu0
        %v942 = vadd.f32 %v919, %v941
        %943 = vmatmul.f32.gmra.mxu0 %v879
        %v944 = vpop.f32.mrf.mxu0
        %v945 = vadd.f32 %v919, %v944
        %946 = vmatmul.f32.gmra.mxu0 %v882
        %v947 = vpop.f32.mrf.mxu0
        %v948 = vadd.f32 %v919, %v947
        %949 = vdwg.mxu0
        %v950 = vmul.f32 %v939, %v857
        %v951 = vmul.f32 %v942, %v857
        %v952 = vmul.f32 %v945, %v857
        %v953 = vmul.f32 %v948, %v857
        %v954 = vmul.f32 %v939, %v858
        %v955 = vmul.f32 %v942, %v858
        %v956 = vmul.f32 %v945, %v858
        %v957 = vmul.f32 %v948, %v858
        %959 = vrot.lane.b32.xlu0 %v857, 32
        %v960 = vpop.permute.xlu0 %959
        %v962 = vmul.f32 %v939, %v960
        %v963 = vmul.f32 %v942, %v960
        %v964 = vmul.f32 %v945, %v960
        %v965 = vmul.f32 %v948, %v960
        %967 = vrot.lane.b32.xlu0 %v858, 32
        %v968 = vpop.permute.xlu0 %967
        %v970 = vmul.f32 %v939, %v968
        %v971 = vmul.f32 %v942, %v968
        %v972 = vmul.f32 %v945, %v968
        %v973 = vmul.f32 %v948, %v968
        %v974 = vld [vmem:[%s740] sm:$0xff]
        %v975 = vld [vmem:[%s740 + $0x8] sm:$0xff]
        %v976 = vld [vmem:[%s740 + $0x10] sm:$0xff]
        %v977 = vld [vmem:[%s740 + $0x18] sm:$0xff]
        %v978 = vld [vmem:[%s740 + $0x20] sm:$0xff]
        %v979 = vld [vmem:[%s740 + $0x28] sm:$0xff]
        %v980 = vld [vmem:[%s740 + $0x30] sm:$0xff]
        %v981 = vld [vmem:[%s740 + $0x38] sm:$0xff]
        %v982 = vld [vmem:[%s740 + $0x40] sm:$0xff]
        %v983 = vld [vmem:[%s740 + $0x48] sm:$0xff]
        %v984 = vld [vmem:[%s740 + $0x50] sm:$0xff]
        %v985 = vld [vmem:[%s740 + $0x58] sm:$0xff]
        %v986 = vld [vmem:[%s740 + $0x60] sm:$0xff]
        %v987 = vld [vmem:[%s740 + $0x68] sm:$0xff]
        %v988 = vld [vmem:[%s740 + $0x70] sm:$0xff]
        %v989 = vld [vmem:[%s740 + $0x78] sm:$0xff]
        %v990 = vld [vmem:[%s740 + $0x80] sm:$0xff]
        %v991 = vld [vmem:[%s740 + $0x88] sm:$0xff]
        %v992 = vld [vmem:[%s740 + $0x90] sm:$0xff]
        %v993 = vld [vmem:[%s740 + $0x98] sm:$0xff]
        %v994 = vld [vmem:[%s740 + $0xa0] sm:$0xff]
        %v995 = vld [vmem:[%s740 + $0xa8] sm:$0xff]
        %v996 = vld [vmem:[%s740 + $0xb0] sm:$0xff]
        %v997 = vld [vmem:[%s740 + $0xb8] sm:$0xff]
        %v998 = vld [vmem:[%s740 + $0xc0] sm:$0xff]
        %v999 = vld [vmem:[%s740 + $0xc8] sm:$0xff]
        %v1000 = vld [vmem:[%s740 + $0xd0] sm:$0xff]
        %v1001 = vld [vmem:[%s740 + $0xd8] sm:$0xff]
        %v1002 = vld [vmem:[%s740 + $0xe0] sm:$0xff]
        %v1003 = vld [vmem:[%s740 + $0xe8] sm:$0xff]
        %v1004 = vld [vmem:[%s740 + $0xf0] sm:$0xff]
        %v1005 = vld [vmem:[%s740 + $0xf8] sm:$0xff]
        %v1010 = vrot.slane %v902, 1
        %v1011 = vrot.slane %v902, 2
        %v1012 = vrot.slane %v902, 3
        %v1013 = vrot.slane %v902, 4
        %v1014 = vrot.slane %v902, 5
        %v1015 = vrot.slane %v902, 6
        %v1016 = vrot.slane %v902, 7
        %v1017 = vrot.slane %v905, 1
        %v1018 = vrot.slane %v905, 2
        %v1019 = vrot.slane %v905, 3
        %v1020 = vrot.slane %v905, 4
        %v1021 = vrot.slane %v905, 5
        %v1022 = vrot.slane %v905, 6
        %v1023 = vrot.slane %v905, 7
        %v1024 = vrot.slane %v908, 1
        %v1025 = vrot.slane %v908, 2
        %v1026 = vrot.slane %v908, 3
        %v1027 = vrot.slane %v908, 4
        %v1028 = vrot.slane %v908, 5
        %v1029 = vrot.slane %v908, 6
        %v1030 = vrot.slane %v908, 7
        %v1031 = vrot.slane %v911, 1
        %v1032 = vrot.slane %v911, 2
        %v1033 = vrot.slane %v911, 3
        %v1034 = vrot.slane %v911, 4
        %v1035 = vrot.slane %v911, 5
        %v1036 = vrot.slane %v911, 6
        %v1037 = vrot.slane %v911, 7
        %v1038 = vperm.slane %v902, 0
        %v1039 = vperm.slane %v1010, 0
        %v1040 = vperm.slane %v1011, 0
        %v1041 = vperm.slane %v1012, 0
        %v1042 = vperm.slane %v1013, 0
        %v1043 = vperm.slane %v1014, 0
        %v1044 = vperm.slane %v1015, 0
        %v1045 = vperm.slane %v1016, 0
        %v1046 = vperm.slane %v905, 0
        %v1047 = vperm.slane %v1017, 0
        %v1048 = vperm.slane %v1018, 0
        %v1049 = vperm.slane %v1019, 0
        %v1050 = vperm.slane %v1020, 0
        %v1051 = vperm.slane %v1021, 0
        %v1052 = vperm.slane %v1022, 0
        %v1053 = vperm.slane %v1023, 0
        %v1054 = vperm.slane %v908, 0
        %v1055 = vperm.slane %v1024, 0
        %v1056 = vperm.slane %v1025, 0
        %v1057 = vperm.slane %v1026, 0
        %v1058 = vperm.slane %v1027, 0
        %v1059 = vperm.slane %v1028, 0
        %v1060 = vperm.slane %v1029, 0
        %v1061 = vperm.slane %v1030, 0
        %v1062 = vperm.slane %v911, 0
        %v1063 = vperm.slane %v1031, 0
        %v1064 = vperm.slane %v1032, 0
        %v1065 = vperm.slane %v1033, 0
        %v1066 = vperm.slane %v1034, 0
        %v1067 = vperm.slane %v1035, 0
        %v1068 = vperm.slane %v1036, 0
        %v1069 = vperm.slane %v1037, 0
        %v1102 = vmul.f32 %v974, %v1038
        %v1103 = vmul.f32 %v975, %v1039
        %v1104 = vmul.f32 %v976, %v1040
        %v1105 = vmul.f32 %v977, %v1041
        %v1106 = vmul.f32 %v978, %v1042
        %v1107 = vmul.f32 %v979, %v1043
        %v1108 = vmul.f32 %v980, %v1044
        %v1109 = vmul.f32 %v981, %v1045
        %v1110 = vmul.f32 %v982, %v1046
        %v1111 = vmul.f32 %v983, %v1047
        %v1112 = vmul.f32 %v984, %v1048
        %v1113 = vmul.f32 %v985, %v1049
        %v1114 = vmul.f32 %v986, %v1050
        %v1115 = vmul.f32 %v987, %v1051
        %v1116 = vmul.f32 %v988, %v1052
        %v1117 = vmul.f32 %v989, %v1053
        %v1118 = vmul.f32 %v990, %v1054
        %v1119 = vmul.f32 %v991, %v1055
        %v1120 = vmul.f32 %v992, %v1056
        %v1121 = vmul.f32 %v993, %v1057
        %v1122 = vmul.f32 %v994, %v1058
        %v1123 = vmul.f32 %v995, %v1059
        %v1124 = vmul.f32 %v996, %v1060
        %v1125 = vmul.f32 %v997, %v1061
        %v1126 = vmul.f32 %v998, %v1062
        %v1127 = vmul.f32 %v999, %v1063
        %v1128 = vmul.f32 %v1000, %v1064
        %v1129 = vmul.f32 %v1001, %v1065
        %v1130 = vmul.f32 %v1002, %v1066
        %v1131 = vmul.f32 %v1003, %v1067
        %v1132 = vmul.f32 %v1004, %v1068
        %v1133 = vmul.f32 %v1005, %v1069
        %v1134 = vld [vmem:[%s750] sm:$0xff]
        %v1135 = vld [vmem:[%s750 + $0x8] sm:$0xff]
        %v1136 = vld [vmem:[%s750 + $0x10] sm:$0xff]
        %v1137 = vld [vmem:[%s750 + $0x18] sm:$0xff]
        %v1138 = vld [vmem:[%s750 + $0x20] sm:$0xff]
        %v1139 = vld [vmem:[%s750 + $0x28] sm:$0xff]
        %v1140 = vld [vmem:[%s750 + $0x30] sm:$0xff]
        %v1141 = vld [vmem:[%s750 + $0x38] sm:$0xff]
        %v1142 = vld [vmem:[%s750 + $0x40] sm:$0xff]
        %v1143 = vld [vmem:[%s750 + $0x48] sm:$0xff]
        %v1144 = vld [vmem:[%s750 + $0x50] sm:$0xff]
        %v1145 = vld [vmem:[%s750 + $0x58] sm:$0xff]
        %v1146 = vld [vmem:[%s750 + $0x60] sm:$0xff]
        %v1147 = vld [vmem:[%s750 + $0x68] sm:$0xff]
        %v1148 = vld [vmem:[%s750 + $0x70] sm:$0xff]
        %v1149 = vld [vmem:[%s750 + $0x78] sm:$0xff]
        %v1150 = vld [vmem:[%s750 + $0x80] sm:$0xff]
        %v1151 = vld [vmem:[%s750 + $0x88] sm:$0xff]
        %v1152 = vld [vmem:[%s750 + $0x90] sm:$0xff]
        %v1153 = vld [vmem:[%s750 + $0x98] sm:$0xff]
        %v1154 = vld [vmem:[%s750 + $0xa0] sm:$0xff]
        %v1155 = vld [vmem:[%s750 + $0xa8] sm:$0xff]
        %v1156 = vld [vmem:[%s750 + $0xb0] sm:$0xff]
        %v1157 = vld [vmem:[%s750 + $0xb8] sm:$0xff]
        %v1158 = vld [vmem:[%s750 + $0xc0] sm:$0xff]
        %v1159 = vld [vmem:[%s750 + $0xc8] sm:$0xff]
        %v1160 = vld [vmem:[%s750 + $0xd0] sm:$0xff]
        %v1161 = vld [vmem:[%s750 + $0xd8] sm:$0xff]
        %v1162 = vld [vmem:[%s750 + $0xe0] sm:$0xff]
        %v1163 = vld [vmem:[%s750 + $0xe8] sm:$0xff]
        %v1164 = vld [vmem:[%s750 + $0xf0] sm:$0xff]
        %v1165 = vld [vmem:[%s750 + $0xf8] sm:$0xff]
        %v1166 = vmul.f32 %v1134, %v939
        %v1167 = vmul.f32 %v1135, %v939
        %v1168 = vmul.f32 %v1136, %v939
        %v1169 = vmul.f32 %v1137, %v939
        %v1170 = vmul.f32 %v1138, %v939
        %v1171 = vmul.f32 %v1139, %v939
        %v1172 = vmul.f32 %v1140, %v939
        %v1173 = vmul.f32 %v1141, %v939
        %v1174 = vmul.f32 %v1142, %v942
        %v1175 = vmul.f32 %v1143, %v942
        %v1176 = vmul.f32 %v1144, %v942
        %v1177 = vmul.f32 %v1145, %v942
        %v1178 = vmul.f32 %v1146, %v942
        %v1179 = vmul.f32 %v1147, %v942
        %v1180 = vmul.f32 %v1148, %v942
        %v1181 = vmul.f32 %v1149, %v942
        %v1182 = vmul.f32 %v1150, %v945
        %v1183 = vmul.f32 %v1151, %v945
        %v1184 = vmul.f32 %v1152, %v945
        %v1185 = vmul.f32 %v1153, %v945
        %v1186 = vmul.f32 %v1154, %v945
        %v1187 = vmul.f32 %v1155, %v945
        %v1188 = vmul.f32 %v1156, %v945
        %v1189 = vmul.f32 %v1157, %v945
        %v1190 = vmul.f32 %v1158, %v948
        %v1191 = vmul.f32 %v1159, %v948
        %v1192 = vmul.f32 %v1160, %v948
        %v1193 = vmul.f32 %v1161, %v948
        %v1194 = vmul.f32 %v1162, %v948
        %v1195 = vmul.f32 %v1163, %v948
        %v1196 = vmul.f32 %v1164, %v948
        %v1197 = vmul.f32 %v1165, %v948
        %v1198 = vadd.f32 %v1102, %v1166
        %v1199 = vadd.f32 %v1103, %v1167
        %v1200 = vadd.f32 %v1104, %v1168
        %v1201 = vadd.f32 %v1105, %v1169
        %v1202 = vadd.f32 %v1106, %v1170
        %v1203 = vadd.f32 %v1107, %v1171
        %v1204 = vadd.f32 %v1108, %v1172
        %v1205 = vadd.f32 %v1109, %v1173
        %v1206 = vadd.f32 %v1110, %v1174
        %v1207 = vadd.f32 %v1111, %v1175
        %v1208 = vadd.f32 %v1112, %v1176
        %v1209 = vadd.f32 %v1113, %v1177
        %v1210 = vadd.f32 %v1114, %v1178
        %v1211 = vadd.f32 %v1115, %v1179
        %v1212 = vadd.f32 %v1116, %v1180
        %v1213 = vadd.f32 %v1117, %v1181
        %v1214 = vadd.f32 %v1118, %v1182
        %v1215 = vadd.f32 %v1119, %v1183
        %v1216 = vadd.f32 %v1120, %v1184
        %v1217 = vadd.f32 %v1121, %v1185
        %v1218 = vadd.f32 %v1122, %v1186
        %v1219 = vadd.f32 %v1123, %v1187
        %v1220 = vadd.f32 %v1124, %v1188
        %v1221 = vadd.f32 %v1125, %v1189
        %v1222 = vadd.f32 %v1126, %v1190
        %v1223 = vadd.f32 %v1127, %v1191
        %v1224 = vadd.f32 %v1128, %v1192
        %v1225 = vadd.f32 %v1129, %v1193
        %v1226 = vadd.f32 %v1130, %v1194
        %v1227 = vadd.f32 %v1131, %v1195
        %v1228 = vadd.f32 %v1132, %v1196
        %v1229 = vadd.f32 %v1133, %v1197
        %vm1230 = vcmask 130048
        %v1231 = vsel %vm1230, %v1198, 0.0
        %1232 = vadd.xlane.f32.xlu0 %v1231
        %v1233 = vpop.xlane.xlu0 %1232
        %v1234 = vsel %vm1230, %v1199, 0.0
        %1235 = vadd.xlane.f32.xlu0 %v1234
        %v1236 = vpop.xlane.xlu0 %1235
        %v1237 = vsel %vm1230, %v1200, 0.0
        %1238 = vadd.xlane.f32.xlu0 %v1237
        %v1239 = vpop.xlane.xlu0 %1238
        %v1240 = vsel %vm1230, %v1201, 0.0
        %1241 = vadd.xlane.f32.xlu0 %v1240
        %v1242 = vpop.xlane.xlu0 %1241
        %v1243 = vsel %vm1230, %v1202, 0.0
        %1244 = vadd.xlane.f32.xlu0 %v1243
        %v1245 = vpop.xlane.xlu0 %1244
        %v1246 = vsel %vm1230, %v1203, 0.0
        %1247 = vadd.xlane.f32.xlu0 %v1246
        %v1248 = vpop.xlane.xlu0 %1247
        %v1249 = vsel %vm1230, %v1204, 0.0
        %1250 = vadd.xlane.f32.xlu0 %v1249
        %v1251 = vpop.xlane.xlu0 %1250
        %v1252 = vsel %vm1230, %v1205, 0.0
        %1253 = vadd.xlane.f32.xlu0 %v1252
        %v1254 = vpop.xlane.xlu0 %1253
        %v1255 = vsel %vm1230, %v1206, 0.0
        %1256 = vadd.xlane.f32.xlu0 %v1255
        %v1257 = vpop.xlane.xlu0 %1256
        %v1258 = vsel %vm1230, %v1207, 0.0
        %1259 = vadd.xlane.f32.xlu0 %v1258
        %v1260 = vpop.xlane.xlu0 %1259
        %v1261 = vsel %vm1230, %v1208, 0.0
        %1262 = vadd.xlane.f32.xlu0 %v1261
        %v1263 = vpop.xlane.xlu0 %1262
        %v1264 = vsel %vm1230, %v1209, 0.0
        %1265 = vadd.xlane.f32.xlu0 %v1264
        %v1266 = vpop.xlane.xlu0 %1265
        %v1267 = vsel %vm1230, %v1210, 0.0
        %1268 = vadd.xlane.f32.xlu0 %v1267
        %v1269 = vpop.xlane.xlu0 %1268
        %v1270 = vsel %vm1230, %v1211, 0.0
        %1271 = vadd.xlane.f32.xlu0 %v1270
        %v1272 = vpop.xlane.xlu0 %1271
        %v1273 = vsel %vm1230, %v1212, 0.0
        %1274 = vadd.xlane.f32.xlu0 %v1273
        %v1275 = vpop.xlane.xlu0 %1274
        %v1276 = vsel %vm1230, %v1213, 0.0
        %1277 = vadd.xlane.f32.xlu0 %v1276
        %v1278 = vpop.xlane.xlu0 %1277
        %v1279 = vsel %vm1230, %v1214, 0.0
        %1280 = vadd.xlane.f32.xlu0 %v1279
        %v1281 = vpop.xlane.xlu0 %1280
        %v1282 = vsel %vm1230, %v1215, 0.0
        %1283 = vadd.xlane.f32.xlu0 %v1282
        %v1284 = vpop.xlane.xlu0 %1283
        %v1285 = vsel %vm1230, %v1216, 0.0
        %1286 = vadd.xlane.f32.xlu0 %v1285
        %v1287 = vpop.xlane.xlu0 %1286
        %v1288 = vsel %vm1230, %v1217, 0.0
        %1289 = vadd.xlane.f32.xlu0 %v1288
        %v1290 = vpop.xlane.xlu0 %1289
        %v1291 = vsel %vm1230, %v1218, 0.0
        %1292 = vadd.xlane.f32.xlu0 %v1291
        %v1293 = vpop.xlane.xlu0 %1292
        %v1294 = vsel %vm1230, %v1219, 0.0
        %1295 = vadd.xlane.f32.xlu0 %v1294
        %v1296 = vpop.xlane.xlu0 %1295
        %v1297 = vsel %vm1230, %v1220, 0.0
        %1298 = vadd.xlane.f32.xlu0 %v1297
        %v1299 = vpop.xlane.xlu0 %1298
        %v1300 = vsel %vm1230, %v1221, 0.0
        %1301 = vadd.xlane.f32.xlu0 %v1300
        %v1302 = vpop.xlane.xlu0 %1301
        %v1303 = vsel %vm1230, %v1222, 0.0
        %1304 = vadd.xlane.f32.xlu0 %v1303
        %v1305 = vpop.xlane.xlu0 %1304
        %v1306 = vsel %vm1230, %v1223, 0.0
        %1307 = vadd.xlane.f32.xlu0 %v1306
        %v1308 = vpop.xlane.xlu0 %1307
        %v1309 = vsel %vm1230, %v1224, 0.0
        %1310 = vadd.xlane.f32.xlu0 %v1309
        %v1311 = vpop.xlane.xlu0 %1310
        %v1312 = vsel %vm1230, %v1225, 0.0
        %1313 = vadd.xlane.f32.xlu0 %v1312
        %v1314 = vpop.xlane.xlu0 %1313
        %v1315 = vsel %vm1230, %v1226, 0.0
        %1316 = vadd.xlane.f32.xlu0 %v1315
        %v1317 = vpop.xlane.xlu0 %1316
        %v1318 = vsel %vm1230, %v1227, 0.0
        %1319 = vadd.xlane.f32.xlu0 %v1318
        %v1320 = vpop.xlane.xlu0 %1319
        %v1321 = vsel %vm1230, %v1228, 0.0
        %1322 = vadd.xlane.f32.xlu0 %v1321
        %v1323 = vpop.xlane.xlu0 %1322
        %v1324 = vsel %vm1230, %v1229, 0.0
        %1325 = vadd.xlane.f32.xlu0 %v1324
        %v1326 = vpop.xlane.xlu0 %1325
        %1359 = vrot.lane.b32.xlu0 %v1198, 112
        %v1360 = vpop.permute.xlu0 %1359
        %1361 = vrot.lane.b32.xlu0 %v1199, 112
        %v1362 = vpop.permute.xlu0 %1361
        %1363 = vrot.lane.b32.xlu0 %v1200, 112
        %v1364 = vpop.permute.xlu0 %1363
        %1365 = vrot.lane.b32.xlu0 %v1201, 112
        %v1366 = vpop.permute.xlu0 %1365
        %1367 = vrot.lane.b32.xlu0 %v1202, 112
        %v1368 = vpop.permute.xlu0 %1367
        %1369 = vrot.lane.b32.xlu0 %v1203, 112
        %v1370 = vpop.permute.xlu0 %1369
        %1371 = vrot.lane.b32.xlu0 %v1204, 112
        %v1372 = vpop.permute.xlu0 %1371
        %1373 = vrot.lane.b32.xlu0 %v1205, 112
        %v1374 = vpop.permute.xlu0 %1373
        %1375 = vrot.lane.b32.xlu0 %v1206, 112
        %v1376 = vpop.permute.xlu0 %1375
        %1377 = vrot.lane.b32.xlu0 %v1207, 112
        %v1378 = vpop.permute.xlu0 %1377
        %1379 = vrot.lane.b32.xlu0 %v1208, 112
        %v1380 = vpop.permute.xlu0 %1379
        %1381 = vrot.lane.b32.xlu0 %v1209, 112
        %v1382 = vpop.permute.xlu0 %1381
        %1383 = vrot.lane.b32.xlu0 %v1210, 112
        %v1384 = vpop.permute.xlu0 %1383
        %1385 = vrot.lane.b32.xlu0 %v1211, 112
        %v1386 = vpop.permute.xlu0 %1385
        %1387 = vrot.lane.b32.xlu0 %v1212, 112
        %v1388 = vpop.permute.xlu0 %1387
        %1389 = vrot.lane.b32.xlu0 %v1213, 112
        %v1390 = vpop.permute.xlu0 %1389
        %1391 = vrot.lane.b32.xlu0 %v1214, 112
        %v1392 = vpop.permute.xlu0 %1391
        %1393 = vrot.lane.b32.xlu0 %v1215, 112
        %v1394 = vpop.permute.xlu0 %1393
        %1395 = vrot.lane.b32.xlu0 %v1216, 112
        %v1396 = vpop.permute.xlu0 %1395
        %1397 = vrot.lane.b32.xlu0 %v1217, 112
        %v1398 = vpop.permute.xlu0 %1397
        %1399 = vrot.lane.b32.xlu0 %v1218, 112
        %v1400 = vpop.permute.xlu0 %1399
        %1401 = vrot.lane.b32.xlu0 %v1219, 112
        %v1402 = vpop.permute.xlu0 %1401
        %1403 = vrot.lane.b32.xlu0 %v1220, 112
        %v1404 = vpop.permute.xlu0 %1403
        %1405 = vrot.lane.b32.xlu0 %v1221, 112
        %v1406 = vpop.permute.xlu0 %1405
        %1407 = vrot.lane.b32.xlu0 %v1222, 112
        %v1408 = vpop.permute.xlu0 %1407
        %1409 = vrot.lane.b32.xlu0 %v1223, 112
        %v1410 = vpop.permute.xlu0 %1409
        %1411 = vrot.lane.b32.xlu0 %v1224, 112
        %v1412 = vpop.permute.xlu0 %1411
        %1413 = vrot.lane.b32.xlu0 %v1225, 112
        %v1414 = vpop.permute.xlu0 %1413
        %1415 = vrot.lane.b32.xlu0 %v1226, 112
        %v1416 = vpop.permute.xlu0 %1415
        %1417 = vrot.lane.b32.xlu0 %v1227, 112
        %v1418 = vpop.permute.xlu0 %1417
        %1419 = vrot.lane.b32.xlu0 %v1228, 112
        %v1420 = vpop.permute.xlu0 %1419
        %1421 = vrot.lane.b32.xlu0 %v1229, 112
        %v1422 = vpop.permute.xlu0 %1421
        %v1455 = vsel %vm1230, %v1360, 0.0
        %1456 = vadd.xlane.f32.xlu0 %v1455
        %v1457 = vpop.xlane.xlu0 %1456
        %v1458 = vsel %vm1230, %v1362, 0.0
        %1459 = vadd.xlane.f32.xlu0 %v1458
        %v1460 = vpop.xlane.xlu0 %1459
        %v1461 = vsel %vm1230, %v1364, 0.0
        %1462 = vadd.xlane.f32.xlu0 %v1461
        %v1463 = vpop.xlane.xlu0 %1462
        %v1464 = vsel %vm1230, %v1366, 0.0
        %1465 = vadd.xlane.f32.xlu0 %v1464
        %v1466 = vpop.xlane.xlu0 %1465
        %v1467 = vsel %vm1230, %v1368, 0.0
        %1468 = vadd.xlane.f32.xlu0 %v1467
        %v1469 = vpop.xlane.xlu0 %1468
        %v1470 = vsel %vm1230, %v1370, 0.0
        %1471 = vadd.xlane.f32.xlu0 %v1470
        %v1472 = vpop.xlane.xlu0 %1471
        %v1473 = vsel %vm1230, %v1372, 0.0
        %1474 = vadd.xlane.f32.xlu0 %v1473
        %v1475 = vpop.xlane.xlu0 %1474
        %v1476 = vsel %vm1230, %v1374, 0.0
        %1477 = vadd.xlane.f32.xlu0 %v1476
        %v1478 = vpop.xlane.xlu0 %1477
        %v1479 = vsel %vm1230, %v1376, 0.0
        %1480 = vadd.xlane.f32.xlu0 %v1479
        %v1481 = vpop.xlane.xlu0 %1480
        %v1482 = vsel %vm1230, %v1378, 0.0
        %1483 = vadd.xlane.f32.xlu0 %v1482
        %v1484 = vpop.xlane.xlu0 %1483
        %v1485 = vsel %vm1230, %v1380, 0.0
        %1486 = vadd.xlane.f32.xlu0 %v1485
        %v1487 = vpop.xlane.xlu0 %1486
        %v1488 = vsel %vm1230, %v1382, 0.0
        %1489 = vadd.xlane.f32.xlu0 %v1488
        %v1490 = vpop.xlane.xlu0 %1489
        %v1491 = vsel %vm1230, %v1384, 0.0
        %1492 = vadd.xlane.f32.xlu0 %v1491
        %v1493 = vpop.xlane.xlu0 %1492
        %v1494 = vsel %vm1230, %v1386, 0.0
        %1495 = vadd.xlane.f32.xlu0 %v1494
        %v1496 = vpop.xlane.xlu0 %1495
        %v1497 = vsel %vm1230, %v1388, 0.0
        %1498 = vadd.xlane.f32.xlu0 %v1497
        %v1499 = vpop.xlane.xlu0 %1498
        %v1500 = vsel %vm1230, %v1390, 0.0
        %1501 = vadd.xlane.f32.xlu0 %v1500
        %v1502 = vpop.xlane.xlu0 %1501
        %v1503 = vsel %vm1230, %v1392, 0.0
        %1504 = vadd.xlane.f32.xlu0 %v1503
        %v1505 = vpop.xlane.xlu0 %1504
        %v1506 = vsel %vm1230, %v1394, 0.0
        %1507 = vadd.xlane.f32.xlu0 %v1506
        %v1508 = vpop.xlane.xlu0 %1507
        %v1509 = vsel %vm1230, %v1396, 0.0
        %1510 = vadd.xlane.f32.xlu0 %v1509
        %v1511 = vpop.xlane.xlu0 %1510
        %v1512 = vsel %vm1230, %v1398, 0.0
        %1513 = vadd.xlane.f32.xlu0 %v1512
        %v1514 = vpop.xlane.xlu0 %1513
        %v1515 = vsel %vm1230, %v1400, 0.0
        %1516 = vadd.xlane.f32.xlu0 %v1515
        %v1517 = vpop.xlane.xlu0 %1516
        %v1518 = vsel %vm1230, %v1402, 0.0
        %1519 = vadd.xlane.f32.xlu0 %v1518
        %v1520 = vpop.xlane.xlu0 %1519
        %v1521 = vsel %vm1230, %v1404, 0.0
        %1522 = vadd.xlane.f32.xlu0 %v1521
        %v1523 = vpop.xlane.xlu0 %1522
        %v1524 = vsel %vm1230, %v1406, 0.0
        %1525 = vadd.xlane.f32.xlu0 %v1524
        %v1526 = vpop.xlane.xlu0 %1525
        %v1527 = vsel %vm1230, %v1408, 0.0
        %1528 = vadd.xlane.f32.xlu0 %v1527
        %v1529 = vpop.xlane.xlu0 %1528
        %v1530 = vsel %vm1230, %v1410, 0.0
        %1531 = vadd.xlane.f32.xlu0 %v1530
        %v1532 = vpop.xlane.xlu0 %1531
        %v1533 = vsel %vm1230, %v1412, 0.0
        %1534 = vadd.xlane.f32.xlu0 %v1533
        %v1535 = vpop.xlane.xlu0 %1534
        %v1536 = vsel %vm1230, %v1414, 0.0
        %1537 = vadd.xlane.f32.xlu0 %v1536
        %v1538 = vpop.xlane.xlu0 %1537
        %v1539 = vsel %vm1230, %v1416, 0.0
        %1540 = vadd.xlane.f32.xlu0 %v1539
        %v1541 = vpop.xlane.xlu0 %1540
        %v1542 = vsel %vm1230, %v1418, 0.0
        %1543 = vadd.xlane.f32.xlu0 %v1542
        %v1544 = vpop.xlane.xlu0 %1543
        %v1545 = vsel %vm1230, %v1420, 0.0
        %1546 = vadd.xlane.f32.xlu0 %v1545
        %v1547 = vpop.xlane.xlu0 %1546
        %v1548 = vsel %vm1230, %v1422, 0.0
        %1549 = vadd.xlane.f32.xlu0 %v1548
        %v1550 = vpop.xlane.xlu0 %1549
        %v1551 = vld [vmem:[%s4] sm:$0xff]
        %s1552 = scalar_lea.vmem %s4, 8
        %v1553 = vld [vmem:[%s1552] sm:$0xff]
        %v1586 = vperm.slane %v1457, %v854
        %v1587 = vperm.slane %v1460, %v854
        %v1588 = vperm.slane %v1463, %v854
        %v1589 = vperm.slane %v1466, %v854
        %v1590 = vperm.slane %v1469, %v854
        %v1591 = vperm.slane %v1472, %v854
        %v1592 = vperm.slane %v1475, %v854
        %v1593 = vperm.slane %v1478, %v854
        %v1594 = vperm.slane %v1481, %v854
        %v1595 = vperm.slane %v1484, %v854
        %v1596 = vperm.slane %v1487, %v854
        %v1597 = vperm.slane %v1490, %v854
        %v1598 = vperm.slane %v1493, %v854
        %v1599 = vperm.slane %v1496, %v854
        %v1600 = vperm.slane %v1499, %v854
        %v1601 = vperm.slane %v1502, %v854
        %v1602 = vperm.slane %v1505, %v854
        %v1603 = vperm.slane %v1508, %v854
        %v1604 = vperm.slane %v1511, %v854
        %v1605 = vperm.slane %v1514, %v854
        %v1606 = vperm.slane %v1517, %v854
        %v1607 = vperm.slane %v1520, %v854
        %v1608 = vperm.slane %v1523, %v854
        %v1609 = vperm.slane %v1526, %v854
        %v1610 = vperm.slane %v1529, %v854
        %v1611 = vperm.slane %v1532, %v854
        %v1612 = vperm.slane %v1535, %v854
        %v1613 = vperm.slane %v1538, %v854
        %v1614 = vperm.slane %v1541, %v854
        %v1615 = vperm.slane %v1544, %v854
        %v1616 = vperm.slane %v1547, %v854
        %v1617 = vperm.slane %v1550, %v854
        %vm1618 = vcmask 1041409
        %v1619 = vsel %vm1618, %v1587, %v1586
        %vm1620 = vcmask 1042434
        %v1621 = vsel %vm1620, %v1588, %v1619
        %vm1622 = vcmask 1043459
        %v1623 = vsel %vm1622, %v1589, %v1621
        %vm1624 = vcmask 1044484
        %v1625 = vsel %vm1624, %v1590, %v1623
        %vm1626 = vcmask 1045509
        %v1627 = vsel %vm1626, %v1591, %v1625
        %vm1628 = vcmask 1046534
        %v1629 = vsel %vm1628, %v1592, %v1627
        %vm1630 = vcmask 1047559
        %v1631 = vsel %vm1630, %v1593, %v1629
        %v1632 = vsel %vm1618, %v1595, %v1594
        %v1633 = vsel %vm1620, %v1596, %v1632
        %v1634 = vsel %vm1622, %v1597, %v1633
        %v1635 = vsel %vm1624, %v1598, %v1634
        %v1636 = vsel %vm1626, %v1599, %v1635
        %v1637 = vsel %vm1628, %v1600, %v1636
        %v1638 = vsel %vm1630, %v1601, %v1637
        %v1639 = vsel %vm1618, %v1603, %v1602
        %v1640 = vsel %vm1620, %v1604, %v1639
        %v1641 = vsel %vm1622, %v1605, %v1640
        %v1642 = vsel %vm1624, %v1606, %v1641
        %v1643 = vsel %vm1626, %v1607, %v1642
        %v1644 = vsel %vm1628, %v1608, %v1643
        %v1645 = vsel %vm1630, %v1609, %v1644
        %v1646 = vsel %vm1618, %v1611, %v1610
        %v1647 = vsel %vm1620, %v1612, %v1646
        %v1648 = vsel %vm1622, %v1613, %v1647
        %v1649 = vsel %vm1624, %v1614, %v1648
        %v1650 = vsel %vm1626, %v1615, %v1649
        %v1651 = vsel %vm1628, %v1616, %v1650
        %v1652 = vsel %vm1630, %v1617, %v1651
        %vm1653 = vcmask 64512
        %v1654 = vsel %vm1653, %v1631, 0
        %v1656 = vsel %vm1653, %v1638, 0
        %v1658 = vsel %vm1653, %v1645, 0
        %v1660 = vsel %vm1653, %v1652, 0
        %1662 = vmatpush.msra.mxu0 0.0
        %1663 = vmatpush.msra.mxu0 0.0
        %1664 = vmatpush.msra.mxu0 0.0
        %1665 = vmatpush.msra.mxu0 0.0
        %1666 = vmatpush.msra.mxu0 0.0
        %1667 = vmatpush.msra.mxu0 0.0
        %1668 = vmatpush.msra.mxu0 0.0
        %1669 = vmatpush.msra.mxu0 0.0
        %1670 = vmatpush.msra.mxu0 0.0
        %1671 = vmatpush.msra.mxu0 0.0
        %1672 = vmatpush.msra.mxu0 0.0
        %1673 = vmatpush.msra.mxu0 0.0
        %1674 = vmatpush.msra.mxu0 0.0
        %1675 = vmatpush.msra.mxu0 0.0
        %1676 = vmatpush.msra.mxu0 0.0
        %1677 = vmatpush.msra.mxu0 %v1553
        %1678 = vmatmul.f32.gmra.mxu0 %v1654
        %v1679 = vpop.f32.mrf.mxu0
        %v1680 = vadd.f32 0.0, %v1679
        %1681 = vmatmul.f32.gmra.mxu0 %v1656
        %v1682 = vpop.f32.mrf.mxu0
        %v1683 = vadd.f32 0.0, %v1682
        %1684 = vmatmul.f32.gmra.mxu0 %v1658
        %v1685 = vpop.f32.mrf.mxu0
        %v1686 = vadd.f32 0.0, %v1685
        %1687 = vmatmul.f32.gmra.mxu0 %v1660
        %v1688 = vpop.f32.mrf.mxu0
        %v1689 = vadd.f32 0.0, %v1688
        %1690 = vdwg.mxu0
        %v1723 = vperm.slane %v1233, %v854
        %v1724 = vperm.slane %v1236, %v854
        %v1725 = vperm.slane %v1239, %v854
        %v1726 = vperm.slane %v1242, %v854
        %v1727 = vperm.slane %v1245, %v854
        %v1728 = vperm.slane %v1248, %v854
        %v1729 = vperm.slane %v1251, %v854
        %v1730 = vperm.slane %v1254, %v854
        %v1731 = vperm.slane %v1257, %v854
        %v1732 = vperm.slane %v1260, %v854
        %v1733 = vperm.slane %v1263, %v854
        %v1734 = vperm.slane %v1266, %v854
        %v1735 = vperm.slane %v1269, %v854
        %v1736 = vperm.slane %v1272, %v854
        %v1737 = vperm.slane %v1275, %v854
        %v1738 = vperm.slane %v1278, %v854
        %v1739 = vperm.slane %v1281, %v854
        %v1740 = vperm.slane %v1284, %v854
        %v1741 = vperm.slane %v1287, %v854
        %v1742 = vperm.slane %v1290, %v854
        %v1743 = vperm.slane %v1293, %v854
        %v1744 = vperm.slane %v1296, %v854
        %v1745 = vperm.slane %v1299, %v854
        %v1746 = vperm.slane %v1302, %v854
        %v1747 = vperm.slane %v1305, %v854
        %v1748 = vperm.slane %v1308, %v854
        %v1749 = vperm.slane %v1311, %v854
        %v1750 = vperm.slane %v1314, %v854
        %v1751 = vperm.slane %v1317, %v854
        %v1752 = vperm.slane %v1320, %v854
        %v1753 = vperm.slane %v1323, %v854
        %v1754 = vperm.slane %v1326, %v854
        %v1755 = vsel %vm1618, %v1724, %v1723
        %v1756 = vsel %vm1620, %v1725, %v1755
        %v1757 = vsel %vm1622, %v1726, %v1756
        %v1758 = vsel %vm1624, %v1727, %v1757
        %v1759 = vsel %vm1626, %v1728, %v1758
        %v1760 = vsel %vm1628, %v1729, %v1759
        %v1761 = vsel %vm1630, %v1730, %v1760
        %v1762 = vsel %vm1618, %v1732, %v1731
        %v1763 = vsel %vm1620, %v1733, %v1762
        %v1764 = vsel %vm1622, %v1734, %v1763
        %v1765 = vsel %vm1624, %v1735, %v1764
        %v1766 = vsel %vm1626, %v1736, %v1765
        %v1767 = vsel %vm1628, %v1737, %v1766
        %v1768 = vsel %vm1630, %v1738, %v1767
        %v1769 = vsel %vm1618, %v1740, %v1739
        %v1770 = vsel %vm1620, %v1741, %v1769
        %v1771 = vsel %vm1622, %v1742, %v1770
        %v1772 = vsel %vm1624, %v1743, %v1771
        %v1773 = vsel %vm1626, %v1744, %v1772
        %v1774 = vsel %vm1628, %v1745, %v1773
        %v1775 = vsel %vm1630, %v1746, %v1774
        %v1776 = vsel %vm1618, %v1748, %v1747
        %v1777 = vsel %vm1620, %v1749, %v1776
        %v1778 = vsel %vm1622, %v1750, %v1777
        %v1779 = vsel %vm1624, %v1751, %v1778
        %v1780 = vsel %vm1626, %v1752, %v1779
        %v1781 = vsel %vm1628, %v1753, %v1780
        %v1782 = vsel %vm1630, %v1754, %v1781
        %v1783 = vsel %vm1653, %v1761, 0
        %v1785 = vsel %vm1653, %v1768, 0
        %v1787 = vsel %vm1653, %v1775, 0
        %v1789 = vsel %vm1653, %v1782, 0
        %1791 = vmatpush.msra.mxu0 0.0
        %1792 = vmatpush.msra.mxu0 0.0
        %1793 = vmatpush.msra.mxu0 0.0
        %1794 = vmatpush.msra.mxu0 0.0
        %1795 = vmatpush.msra.mxu0 0.0
        %1796 = vmatpush.msra.mxu0 0.0
        %1797 = vmatpush.msra.mxu0 0.0
        %1798 = vmatpush.msra.mxu0 0.0
        %1799 = vmatpush.msra.mxu0 0.0
        %1800 = vmatpush.msra.mxu0 0.0
        %1801 = vmatpush.msra.mxu0 0.0
        %1802 = vmatpush.msra.mxu0 0.0
        %1803 = vmatpush.msra.mxu0 0.0
        %1804 = vmatpush.msra.mxu0 0.0
        %1805 = vmatpush.msra.mxu0 0.0
        %1806 = vmatpush.msra.mxu0 %v1551
        %1807 = vmatmul.f32.gmra.mxu0 %v1783
        %v1808 = vpop.f32.mrf.mxu0
        %v1809 = vadd.f32 %v1680, %v1808
        %1810 = vmatmul.f32.gmra.mxu0 %v1785
        %v1811 = vpop.f32.mrf.mxu0
        %v1812 = vadd.f32 %v1683, %v1811
        %1813 = vmatmul.f32.gmra.mxu0 %v1787
        %v1814 = vpop.f32.mrf.mxu0
        %v1815 = vadd.f32 %v1686, %v1814
        %1816 = vmatmul.f32.gmra.mxu0 %v1789
        %v1817 = vpop.f32.mrf.mxu0
        %v1818 = vadd.f32 %v1689, %v1817
        %1819 = vdwg.mxu0
        %v1820 = vsel %vm871, %v902, 0
        %v1822 = vsel %vm871, %v905, 0
        %v1824 = vsel %vm871, %v908, 0
        %v1826 = vsel %vm871, %v911, 0
        %v1829 = vsel %vm871, %v950, 0
        %v1832 = vsel %vm871, %v951, 0
        %v1835 = vsel %vm871, %v952, 0
        %v1838 = vsel %vm871, %v953, 0
        %v1841 = vsel %vm871, %v954, 0
        %v1844 = vsel %vm871, %v955, 0
        %v1847 = vsel %vm871, %v956, 0
        %v1850 = vsel %vm871, %v957, 0
        %1852 = vmatpush.xpose.msra.mxu0 0.0
        %1853 = vmatpush.xpose.msra.mxu0 0.0
        %1854 = vmatpush.xpose.msra.mxu0 0.0
        %1855 = vmatpush.xpose.msra.mxu0 0.0
        %1856 = vmatpush.xpose.msra.mxu0 0.0
        %1857 = vmatpush.xpose.msra.mxu0 0.0
        %1858 = vmatpush.xpose.msra.mxu0 0.0
        %1859 = vmatpush.xpose.msra.mxu0 0.0
        %1860 = vmatpush.xpose.msra.mxu0 %v1850
        %1861 = vmatpush.xpose.msra.mxu0 %v1847
        %1862 = vmatpush.xpose.msra.mxu0 %v1844
        %1863 = vmatpush.xpose.msra.mxu0 %v1841
        %1864 = vmatpush.xpose.msra.mxu0 %v1838
        %1865 = vmatpush.xpose.msra.mxu0 %v1835
        %1866 = vmatpush.xpose.msra.mxu0 %v1832
        %1867 = vmatpush.xpose.msra.mxu0 %v1829
        %1868 = vmatmul.f32.gmra.mxu0 %v1820
        %v1869 = vpop.f32.mrf.mxu0
        %v1870 = vadd.f32 %v1809, %v1869
        %1871 = vmatmul.f32.gmra.mxu0 %v1822
        %v1872 = vpop.f32.mrf.mxu0
        %v1873 = vadd.f32 %v1812, %v1872
        %1874 = vmatmul.f32.gmra.mxu0 %v1824
        %v1875 = vpop.f32.mrf.mxu0
        %v1876 = vadd.f32 %v1815, %v1875
        %1877 = vmatmul.f32.gmra.mxu0 %v1826
        %v1878 = vpop.f32.mrf.mxu0
        %v1879 = vadd.f32 %v1818, %v1878
        %1880 = vdwg.mxu0
        %v1881 = vld [vmem:[%s732] sm:$0xff]
        %v1882 = vld [vmem:[%s732 + $0x8] sm:$0xff]
        %v1883 = vld [vmem:[%s732 + $0x10] sm:$0xff]
        %v1884 = vld [vmem:[%s732 + $0x18] sm:$0xff]
        %v1885 = vadd.f32 %v1870, %v1881
        %v1886 = vadd.f32 %v1873, %v1882
        %v1887 = vadd.f32 %v1876, %v1883
        %v1888 = vadd.f32 %v1879, %v1884
        %vm1889 = vcmask 523264
        %v1890 = vsel %vm1889, %v1885, -inf
        %1891 = vmax.xlane.f32.xlu0 %v1890
        %v1892 = vpop.xlane.xlu0 %1891
        %v1893 = vsel %vm1889, %v1886, -inf
        %1894 = vmax.xlane.f32.xlu0 %v1893
        %v1895 = vpop.xlane.xlu0 %1894
        %v1896 = vsel %vm1889, %v1887, -inf
        %1897 = vmax.xlane.f32.xlu0 %v1896
        %v1898 = vpop.xlane.xlu0 %1897
        %v1899 = vsel %vm1889, %v1888, -inf
        %1900 = vmax.xlane.f32.xlu0 %v1899
        %v1901 = vpop.xlane.xlu0 %1900
        %v1902 = vsub.f32 %v1885, %v1892
        %v1903 = vsub.f32 %v1886, %v1895
        %v1904 = vsub.f32 %v1887, %v1898
        %v1905 = vsub.f32 %v1888, %v1901
        %v1906 = vmul.f32 %v1902, 1.442695
        %v1907 = vpow.pop %v1906
        %v1908 = vmul.f32 %v1903, 1.442695
        %v1909 = vpow.pop %v1908
        %v1910 = vmul.f32 %v1904, 1.442695
        %v1911 = vpow.pop %v1910
        %v1912 = vmul.f32 %v1905, 1.442695
        %v1913 = vpow.pop %v1912
        %v1914 = vmul.f32 %v1907, %v861
        %v1915 = vmul.f32 %v1909, %v861
        %v1916 = vmul.f32 %v1911, %v861
        %v1917 = vmul.f32 %v1913, %v861
        %v1918 = vsel %vm1889, %v1914, 0.0
        %1919 = vadd.xlane.f32.xlu0 %v1918
        %v1920 = vpop.xlane.xlu0 %1919
        %v1921 = vsel %vm1889, %v1915, 0.0
        %1922 = vadd.xlane.f32.xlu0 %v1921
        %v1923 = vpop.xlane.xlu0 %1922
        %v1924 = vsel %vm1889, %v1916, 0.0
        %1925 = vadd.xlane.f32.xlu0 %v1924
        %v1926 = vpop.xlane.xlu0 %1925
        %v1927 = vsel %vm1889, %v1917, 0.0
        %1928 = vadd.xlane.f32.xlu0 %v1927
        %v1929 = vpop.xlane.xlu0 %1928
        %v1930 = vmul.f32 %v1907, %v862
        %v1931 = vmul.f32 %v1909, %v862
        %v1932 = vmul.f32 %v1911, %v862
        %v1933 = vmul.f32 %v1913, %v862
        %v1934 = vsel %vm1889, %v1930, 0.0
        %1935 = vadd.xlane.f32.xlu0 %v1934
        %v1936 = vpop.xlane.xlu0 %1935
        %v1937 = vsel %vm1889, %v1931, 0.0
        %1938 = vadd.xlane.f32.xlu0 %v1937
        %v1939 = vpop.xlane.xlu0 %1938
        %v1940 = vsel %vm1889, %v1932, 0.0
        %1941 = vadd.xlane.f32.xlu0 %v1940
        %v1942 = vpop.xlane.xlu0 %1941
        %v1943 = vsel %vm1889, %v1933, 0.0
        %1944 = vadd.xlane.f32.xlu0 %v1943
        %v1945 = vpop.xlane.xlu0 %1944
        %v1946 = vrcp.pop %v1920
        %v1947 = vrcp.pop %v1923
        %v1948 = vrcp.pop %v1926
        %v1949 = vrcp.pop %v1929
        %v1950 = vmul.f32 %v1946, %v861
        %v1951 = vmul.f32 %v1947, %v861
        %v1952 = vmul.f32 %v1948, %v861
        %v1953 = vmul.f32 %v1949, %v861
        %v1954 = vrcp.pop %v1936
        %v1955 = vrcp.pop %v1939
        %v1956 = vrcp.pop %v1942
        %v1957 = vrcp.pop %v1945
        %v1958 = vmul.f32 %v1954, %v862
        %v1959 = vmul.f32 %v1955, %v862
        %v1960 = vmul.f32 %v1956, %v862
        %v1961 = vmul.f32 %v1957, %v862
        %v1962 = vadd.f32 %v1950, %v1958
        %v1963 = vadd.f32 %v1951, %v1959
        %v1964 = vadd.f32 %v1952, %v1960
        %v1965 = vadd.f32 %v1953, %v1961
        %v1966 = vmul.f32 %v1907, %v1962
        %v1967 = vmul.f32 %v1909, %v1963
        %v1968 = vmul.f32 %v1911, %v1964
        %v1969 = vmul.f32 %v1913, %v1965
        %1978 = vrot.lane.b32.xlu0 %v962, 96
        %v1979 = vpop.permute.xlu0 %1978
        %1980 = vrot.lane.b32.xlu0 %v963, 96
        %v1981 = vpop.permute.xlu0 %1980
        %1982 = vrot.lane.b32.xlu0 %v964, 96
        %v1983 = vpop.permute.xlu0 %1982
        %1984 = vrot.lane.b32.xlu0 %v965, 96
        %v1985 = vpop.permute.xlu0 %1984
        %1986 = vrot.lane.b32.xlu0 %v970, 96
        %v1987 = vpop.permute.xlu0 %1986
        %1988 = vrot.lane.b32.xlu0 %v971, 96
        %v1989 = vpop.permute.xlu0 %1988
        %1990 = vrot.lane.b32.xlu0 %v972, 96
        %v1991 = vpop.permute.xlu0 %1990
        %1992 = vrot.lane.b32.xlu0 %v973, 96
        %v1993 = vpop.permute.xlu0 %1992
        %v2003 = vsel %vm1889, %v1966, 0
        %v2006 = vsel %vm1889, %v1967, 0
        %v2009 = vsel %vm1889, %v1968, 0
        %v2012 = vsel %vm1889, %v1969, 0
        %2014 = vmatpush.msra.mxu0 0.0
        %2015 = vmatpush.msra.mxu0 0.0
        %2016 = vmatpush.msra.mxu0 0.0
        %2017 = vmatpush.msra.mxu0 0.0
        %2018 = vmatpush.msra.mxu0 0.0
        %2019 = vmatpush.msra.mxu0 0.0
        %2020 = vmatpush.msra.mxu0 0.0
        %2021 = vmatpush.msra.mxu0 0.0
        %2022 = vmatpush.msra.mxu0 %v1993
        %2023 = vmatpush.msra.mxu0 %v1991
        %2024 = vmatpush.msra.mxu0 %v1989
        %2025 = vmatpush.msra.mxu0 %v1987
        %2026 = vmatpush.msra.mxu0 %v1985
        %2027 = vmatpush.msra.mxu0 %v1983
        %2028 = vmatpush.msra.mxu0 %v1981
        %2029 = vmatpush.msra.mxu0 %v1979
        %2030 = vmatmul.f32.gmra.mxu0 %v2003
        %v2031 = vpop.f32.mrf.mxu0
        %v2032 = vadd.f32 0.0, %v2031
        %2033 = vmatmul.f32.gmra.mxu0 %v2006
        %v2034 = vpop.f32.mrf.mxu0
        %v2035 = vadd.f32 0.0, %v2034
        %2036 = vmatmul.f32.gmra.mxu0 %v2009
        %v2037 = vpop.f32.mrf.mxu0
        %v2038 = vadd.f32 0.0, %v2037
        %2039 = vmatmul.f32.gmra.mxu0 %v2012
        %v2040 = vpop.f32.mrf.mxu0
        %v2041 = vadd.f32 0.0, %v2040
        %2042 = vdwg.mxu0
        %s2043 = sld [smem:[#allocation11]]
        %v2044 = vstv %s2043
        %v2045 = vmul.f32 %v2032, %v2044
        %v2046 = vmul.f32 %v2035, %v2044
        %v2047 = vmul.f32 %v2038, %v2044
        %v2048 = vmul.f32 %v2041, %v2044
        %v2049 = vadd.f32 %v849, %v2045
        %v2050 = vadd.f32 %v850, %v2046
        %v2051 = vadd.f32 %v851, %v2047
        %v2052 = vadd.f32 %v852, %v2048
        %v2053 = vld [vmem:[%s9] sm:$0x1]
        %v2054 = vld [vmem:[%s10] sm:$0x1]
        %v2055 = vsel %vm871, %v2049, 0.0
        %2056 = vadd.xlane.f32.xlu0 %v2055
        %v2057 = vpop.xlane.xlu0 %2056
        %v2058 = vsel %vm871, %v2050, 0.0
        %2059 = vadd.xlane.f32.xlu0 %v2058
        %v2060 = vpop.xlane.xlu0 %2059
        %v2061 = vsel %vm871, %v2051, 0.0
        %2062 = vadd.xlane.f32.xlu0 %v2061
        %v2063 = vpop.xlane.xlu0 %2062
        %v2064 = vsel %vm871, %v2052, 0.0
        %2065 = vadd.xlane.f32.xlu0 %v2064
        %v2066 = vpop.xlane.xlu0 %2065
        %v2067 = vrcp.pop 32.0
        %v2068 = vmul.f32 32.0, %v2067
        %v2069 = vsub.f32 1.0, %v2068
        %v2070 = vmul.f32 %v2067, %v2069
        %v2071 = vadd.f32 %v2067, %v2070
        %vm2072 = vweird.f32 %v2067
        %v2073 = vsel %vm2072, %v2067, %v2071
        %v2074 = vmul.f32 %v2057, %v2073
        %v2075 = vmul.f32 %v2060, %v2073
        %v2076 = vmul.f32 %v2063, %v2073
        %v2077 = vmul.f32 %v2066, %v2073
        %v2078 = vsub.f32 %v2049, %v2074
        %v2079 = vsub.f32 %v2050, %v2075
        %v2080 = vsub.f32 %v2051, %v2076
        %v2081 = vsub.f32 %v2052, %v2077
        %v2082 = vmul.f32 %v2078, %v2078
        %v2083 = vmul.f32 %v2079, %v2079
        %v2084 = vmul.f32 %v2080, %v2080
        %v2085 = vmul.f32 %v2081, %v2081
        %v2086 = vsel %vm871, %v2082, 0.0
        %2087 = vadd.xlane.f32.xlu0 %v2086
        %v2088 = vpop.xlane.xlu0 %2087
        %v2089 = vsel %vm871, %v2083, 0.0
        %2090 = vadd.xlane.f32.xlu0 %v2089
        %v2091 = vpop.xlane.xlu0 %2090
        %v2092 = vsel %vm871, %v2084, 0.0
        %2093 = vadd.xlane.f32.xlu0 %v2092
        %v2094 = vpop.xlane.xlu0 %2093
        %v2095 = vsel %vm871, %v2085, 0.0
        %2096 = vadd.xlane.f32.xlu0 %v2095
        %v2097 = vpop.xlane.xlu0 %2096
        %v2098 = vmul.f32 %v2088, %v2073
        %v2099 = vmul.f32 %v2091, %v2073
        %v2100 = vmul.f32 %v2094, %v2073
        %v2101 = vmul.f32 %v2097, %v2073
        %v2102 = vadd.f32 %v2098, 1e-05
        %v2103 = vadd.f32 %v2099, 1e-05
        %v2104 = vadd.f32 %v2100, 1e-05
        %v2105 = vadd.f32 %v2101, 1e-05
        %v2106 = vrsqrt.pop %v2102
        %v2107 = vmul.f32 %v2106, %v2102
        %v2108 = vmul.f32 %v2107, %v2106
        %v2109 = vmul.f32 0.5, %v2108
        %v2110 = vsub.f32 1.5, %v2109
        %v2111 = vmul.f32 %v2106, %v2110
        %vm2112 = vweird.f32 %v2102
        %vm2113 = vweird.f32 %v2106
        %vm2114 = vmor %vm2112, %vm2113
        %v2115 = vsel %vm2114, %v2106, %v2111
        %v2116 = vrsqrt.pop %v2103
        %v2117 = vmul.f32 %v2116, %v2103
        %v2118 = vmul.f32 %v2117, %v2116
        %v2119 = vmul.f32 0.5, %v2118
        %v2120 = vsub.f32 1.5, %v2119
        %v2121 = vmul.f32 %v2116, %v2120
        %vm2122 = vweird.f32 %v2103
        %vm2123 = vweird.f32 %v2116
        %vm2124 = vmor %vm2122, %vm2123
        %v2125 = vsel %vm2124, %v2116, %v2121
        %v2126 = vrsqrt.pop %v2104
        %v2127 = vmul.f32 %v2126, %v2104
        %v2128 = vmul.f32 %v2127, %v2126
        %v2129 = vmul.f32 0.5, %v2128
        %v2130 = vsub.f32 1.5, %v2129
        %v2131 = vmul.f32 %v2126, %v2130
        %vm2132 = vweird.f32 %v2104
        %vm2133 = vweird.f32 %v2126
        %vm2134 = vmor %vm2132, %vm2133
        %v2135 = vsel %vm2134, %v2126, %v2131
        %v2136 = vrsqrt.pop %v2105
        %v2137 = vmul.f32 %v2136, %v2105
        %v2138 = vmul.f32 %v2137, %v2136
        %v2139 = vmul.f32 0.5, %v2138
        %v2140 = vsub.f32 1.5, %v2139
        %v2141 = vmul.f32 %v2136, %v2140
        %vm2142 = vweird.f32 %v2105
        %vm2143 = vweird.f32 %v2136
        %vm2144 = vmor %vm2142, %vm2143
        %v2145 = vsel %vm2144, %v2136, %v2141
        %v2146 = vmul.f32 %v2078, %v2115
        %v2147 = vmul.f32 %v2079, %v2125
        %v2148 = vmul.f32 %v2080, %v2135
        %v2149 = vmul.f32 %v2081, %v2145
        %v2151 = vperm.slane %v2053, 0
        %v2153 = vmul.f32 %v2146, %v2151
        %v2154 = vmul.f32 %v2147, %v2151
        %v2155 = vmul.f32 %v2148, %v2151
        %v2156 = vmul.f32 %v2149, %v2151
        %v2158 = vperm.slane %v2054, 0
        %v2160 = vadd.f32 %v2153, %v2158
        %v2161 = vadd.f32 %v2154, %v2158
        %v2162 = vadd.f32 %v2155, %v2158
        %v2163 = vadd.f32 %v2156, %v2158
        %v2164 = vld [vmem:[#allocation9] sm:$0xff]
        %v2165 = vld [vmem:[#allocation9 + $0x8] sm:$0xff]
        %v2166 = vld [vmem:[#allocation9 + $0x10] sm:$0xff]
        %v2167 = vld [vmem:[#allocation9 + $0x18] sm:$0xff]
        %v2168 = vld [vmem:[%s12] sm:$0x1]
        %v2170 = vperm.slane %v2168, 0
        %v2173 = vsel %vm871, %v2160, 0
        %v2176 = vsel %vm871, %v2161, 0
        %v2179 = vsel %vm871, %v2162, 0
        %v2182 = vsel %vm871, %v2163, 0
        %2184 = vmatpush.msra.mxu0 0.0
        %2185 = vmatpush.msra.mxu0 0.0
        %2186 = vmatpush.msra.mxu0 0.0
        %2187 = vmatpush.msra.mxu0 0.0
        %2188 = vmatpush.msra.mxu0 0.0
        %2189 = vmatpush.msra.mxu0 0.0
        %2190 = vmatpush.msra.mxu0 0.0
        %2191 = vmatpush.msra.mxu0 0.0
        %2192 = vmatpush.msra.mxu0 0.0
        %2193 = vmatpush.msra.mxu0 0.0
        %2194 = vmatpush.msra.mxu0 0.0
        %2195 = vmatpush.msra.mxu0 0.0
        %2196 = vmatpush.msra.mxu0 %v2167
        %2197 = vmatpush.msra.mxu0 %v2166
        %2198 = vmatpush.msra.mxu0 %v2165
        %2199 = vmatpush.msra.mxu0 %v2164
        %2200 = vmatmul.f32.gmra.mxu0 %v2173
        %v2201 = vpop.f32.mrf.mxu0
        %v2202 = vadd.f32 %v2170, %v2201
        %2203 = vmatmul.f32.gmra.mxu0 %v2176
        %v2204 = vpop.f32.mrf.mxu0
        %v2205 = vadd.f32 %v2170, %v2204
        %2206 = vmatmul.f32.gmra.mxu0 %v2179
        %v2207 = vpop.f32.mrf.mxu0
        %v2208 = vadd.f32 %v2170, %v2207
        %2209 = vmatmul.f32.gmra.mxu0 %v2182
        %v2210 = vpop.f32.mrf.mxu0
        %v2211 = vadd.f32 %v2170, %v2210
        %2212 = vdwg.mxu0
        %v2213 = vmul.f32 %v2202, 0.5
        %v2214 = vmul.f32 %v2205, 0.5
        %v2215 = vmul.f32 %v2208, 0.5
        %v2216 = vmul.f32 %v2211, 0.5
        %v2217 = vmul.f32 %v2202, 0.044715
        %v2218 = vmul.f32 %v2205, 0.044715
        %v2219 = vmul.f32 %v2208, 0.044715
        %v2220 = vmul.f32 %v2211, 0.044715
        %v2221 = vmul.f32 %v2217, %v2202
        %v2222 = vmul.f32 %v2218, %v2205
        %v2223 = vmul.f32 %v2219, %v2208
        %v2224 = vmul.f32 %v2220, %v2211
        %v2225 = vmul.f32 %v2221, %v2202
        %v2226 = vmul.f32 %v2222, %v2205
        %v2227 = vmul.f32 %v2223, %v2208
        %v2228 = vmul.f32 %v2224, %v2211
        %v2229 = vadd.f32 %v2202, %v2225
        %v2230 = vadd.f32 %v2205, %v2226
        %v2231 = vadd.f32 %v2208, %v2227
        %v2232 = vadd.f32 %v2211, %v2228
        %v2233 = vmul.f32 %v2229, 0.7978846
        %v2234 = vmul.f32 %v2230, 0.7978846
        %v2235 = vmul.f32 %v2231, 0.7978846
        %v2236 = vmul.f32 %v2232, 0.7978846
        %v2237 = vtanh.pop %v2233
        %v2238 = vtanh.pop %v2234
        %v2239 = vtanh.pop %v2235
        %v2240 = vtanh.pop %v2236
        %v2241 = vadd.f32 %v2237, 1.0
        %v2242 = vadd.f32 %v2238, 1.0
        %v2243 = vadd.f32 %v2239, 1.0
        %v2244 = vadd.f32 %v2240, 1.0
        %v2245 = vmul.f32 %v2213, %v2241
        %v2246 = vmul.f32 %v2214, %v2242
        %v2247 = vmul.f32 %v2215, %v2243
        %v2248 = vmul.f32 %v2216, %v2244
        %v2249 = vld [vmem:[%s13] sm:$0xff]
        %v2250 = vld [vmem:[%s13 + $0x8] sm:$0xff]
        %v2251 = vld [vmem:[%s13 + $0x10] sm:$0xff]
        %v2252 = vld [vmem:[%s13 + $0x18] sm:$0xff]
        %v2253 = vld [vmem:[%s13 + $0x20] sm:$0xff]
        %v2254 = vld [vmem:[%s13 + $0x28] sm:$0xff]
        %v2255 = vld [vmem:[%s13 + $0x30] sm:$0xff]
        %v2256 = vld [vmem:[%s13 + $0x38] sm:$0xff]
        %v2257 = vld [vmem:[%s14] sm:$0x1]
        %v2259 = vperm.slane %v2257, 0
        %v2262 = vsel %vm1889, %v2245, 0
        %v2265 = vsel %vm1889, %v2246, 0
        %v2268 = vsel %vm1889, %v2247, 0
        %v2271 = vsel %vm1889, %v2248, 0
        %2273 = vmatpush.msra.mxu0 0.0
        %2274 = vmatpush.msra.mxu0 0.0
        %2275 = vmatpush.msra.mxu0 0.0
        %2276 = vmatpush.msra.mxu0 0.0
        %2277 = vmatpush.msra.mxu0 0.0
        %2278 = vmatpush.msra.mxu0 0.0
        %2279 = vmatpush.msra.mxu0 0.0
        %2280 = vmatpush.msra.mxu0 0.0
        %2281 = vmatpush.msra.mxu0 %v2256
        %2282 = vmatpush.msra.mxu0 %v2255
        %2283 = vmatpush.msra.mxu0 %v2254
        %2284 = vmatpush.msra.mxu0 %v2253
        %2285 = vmatpush.msra.mxu0 %v2252
        %2286 = vmatpush.msra.mxu0 %v2251
        %2287 = vmatpush.msra.mxu0 %v2250
        %2288 = vmatpush.msra.mxu0 %v2249
        %2289 = vmatmul.f32.gmra.mxu0 %v2262
        %v2290 = vpop.f32.mrf.mxu0
        %v2291 = vadd.f32 %v2259, %v2290
        %2292 = vmatmul.f32.gmra.mxu0 %v2265
        %v2293 = vpop.f32.mrf.mxu0
        %v2294 = vadd.f32 %v2259, %v2293
        %2295 = vmatmul.f32.gmra.mxu0 %v2268
        %v2296 = vpop.f32.mrf.mxu0
        %v2297 = vadd.f32 %v2259, %v2296
        %2298 = vmatmul.f32.gmra.mxu0 %v2271
        %v2299 = vpop.f32.mrf.mxu0
        %v2300 = vadd.f32 %v2259, %v2299
        %2301 = vdwg.mxu0
        %s2302 = sld [smem:[#allocation11 + $0x1]]
        %v2303 = vstv %s2302
        %v2304 = vmul.f32 %v2291, %v2303
        %v2305 = vmul.f32 %v2294, %v2303
        %v2306 = vmul.f32 %v2297, %v2303
        %v2307 = vmul.f32 %v2300, %v2303
        %v2308 = vadd.f32 %v2160, %v2304
        %v2309 = vadd.f32 %v2161, %v2305
        %v2310 = vadd.f32 %v2162, %v2306
        %v2311 = vadd.f32 %v2163, %v2307
        %v2312 = vld [vmem:[%s15] sm:$0x1]
        %v2313 = vld [vmem:[%s16] sm:$0x1]
        %v2314 = vsel %vm871, %v2308, 0.0
        %2315 = vadd.xlane.f32.xlu0 %v2314
        %v2316 = vpop.xlane.xlu0 %2315
        %v2317 = vsel %vm871, %v2309, 0.0
        %2318 = vadd.xlane.f32.xlu0 %v2317
        %v2319 = vpop.xlane.xlu0 %2318
        %v2320 = vsel %vm871, %v2310, 0.0
        %2321 = vadd.xlane.f32.xlu0 %v2320
        %v2322 = vpop.xlane.xlu0 %2321
        %v2323 = vsel %vm871, %v2311, 0.0
        %2324 = vadd.xlane.f32.xlu0 %v2323
        %v2325 = vpop.xlane.xlu0 %2324
        %v2326 = vmul.f32 %v2316, %v2073
        %v2327 = vmul.f32 %v2319, %v2073
        %v2328 = vmul.f32 %v2322, %v2073
        %v2329 = vmul.f32 %v2325, %v2073
        %v2330 = vsub.f32 %v2308, %v2326
        %v2331 = vsub.f32 %v2309, %v2327
        %v2332 = vsub.f32 %v2310, %v2328
        %v2333 = vsub.f32 %v2311, %v2329
        %v2334 = vmul.f32 %v2330, %v2330
        %v2335 = vmul.f32 %v2331, %v2331
        %v2336 = vmul.f32 %v2332, %v2332
        %v2337 = vmul.f32 %v2333, %v2333
        %v2338 = vsel %vm871, %v2334, 0.0
        %2339 = vadd.xlane.f32.xlu0 %v2338
        %v2340 = vpop.xlane.xlu0 %2339
        %v2341 = vsel %vm871, %v2335, 0.0
        %2342 = vadd.xlane.f32.xlu0 %v2341
        %v2343 = vpop.xlane.xlu0 %2342
        %v2344 = vsel %vm871, %v2336, 0.0
        %2345 = vadd.xlane.f32.xlu0 %v2344
        %v2346 = vpop.xlane.xlu0 %2345
        %v2347 = vsel %vm871, %v2337, 0.0
        %2348 = vadd.xlane.f32.xlu0 %v2347
        %v2349 = vpop.xlane.xlu0 %2348
        %v2350 = vmul.f32 %v2340, %v2073
        %v2351 = vmul.f32 %v2343, %v2073
        %v2352 = vmul.f32 %v2346, %v2073
        %v2353 = vmul.f32 %v2349, %v2073
        %v2354 = vadd.f32 %v2350, 1e-05
        %v2355 = vadd.f32 %v2351, 1e-05
        %v2356 = vadd.f32 %v2352, 1e-05
        %v2357 = vadd.f32 %v2353, 1e-05
        %v2358 = vrsqrt.pop %v2354
        %v2359 = vmul.f32 %v2358, %v2354
        %v2360 = vmul.f32 %v2359, %v2358
        %v2361 = vmul.f32 0.5, %v2360
        %v2362 = vsub.f32 1.5, %v2361
        %v2363 = vmul.f32 %v2358, %v2362
        %vm2364 = vweird.f32 %v2354
        %vm2365 = vweird.f32 %v2358
        %vm2366 = vmor %vm2364, %vm2365
        %v2367 = vsel %vm2366, %v2358, %v2363
        %v2368 = vrsqrt.pop %v2355
        %v2369 = vmul.f32 %v2368, %v2355
        %v2370 = vmul.f32 %v2369, %v2368
        %v2371 = vmul.f32 0.5, %v2370
        %v2372 = vsub.f32 1.5, %v2371
        %v2373 = vmul.f32 %v2368, %v2372
        %vm2374 = vweird.f32 %v2355
        %vm2375 = vweird.f32 %v2368
        %vm2376 = vmor %vm2374, %vm2375
        %v2377 = vsel %vm2376, %v2368, %v2373
        %v2378 = vrsqrt.pop %v2356
        %v2379 = vmul.f32 %v2378, %v2356
        %v2380 = vmul.f32 %v2379, %v2378
        %v2381 = vmul.f32 0.5, %v2380
        %v2382 = vsub.f32 1.5, %v2381
        %v2383 = vmul.f32 %v2378, %v2382
        %vm2384 = vweird.f32 %v2356
        %vm2385 = vweird.f32 %v2378
        %vm2386 = vmor %vm2384, %vm2385
        %v2387 = vsel %vm2386, %v2378, %v2383
        %v2388 = vrsqrt.pop %v2357
        %v2389 = vmul.f32 %v2388, %v2357
        %v2390 = vmul.f32 %v2389, %v2388
        %v2391 = vmul.f32 0.5, %v2390
        %v2392 = vsub.f32 1.5, %v2391
        %v2393 = vmul.f32 %v2388, %v2392
        %vm2394 = vweird.f32 %v2357
        %vm2395 = vweird.f32 %v2388
        %vm2396 = vmor %vm2394, %vm2395
        %v2397 = vsel %vm2396, %v2388, %v2393
        %v2398 = vmul.f32 %v2330, %v2367
        %v2399 = vmul.f32 %v2331, %v2377
        %v2400 = vmul.f32 %v2332, %v2387
        %v2401 = vmul.f32 %v2333, %v2397
        %v2403 = vperm.slane %v2312, 0
        %v2405 = vmul.f32 %v2398, %v2403
        %v2406 = vmul.f32 %v2399, %v2403
        %v2407 = vmul.f32 %v2400, %v2403
        %v2408 = vmul.f32 %v2401, %v2403
        %v2410 = vperm.slane %v2313, 0
        %v2412 = vadd.f32 %v2405, %v2410
        %v2413 = vadd.f32 %v2406, %v2410
        %v2414 = vadd.f32 %v2407, %v2410
        %v2415 = vadd.f32 %v2408, %v2410
        %s2416 = scalar_lea.vmem %s5, 32
        %v2417 = vld [vmem:[%s2416] sm:$0xff]
        %v2418 = vld [vmem:[%s2416 + $0x8] sm:$0xff]
        %v2419 = vld [vmem:[%s2416 + $0x10] sm:$0xff]
        %v2420 = vld [vmem:[%s2416 + $0x18] sm:$0xff]
        %s2421 = scalar_lea.vmem %s6, 1
        %v2422 = vld [vmem:[%s2421] sm:$0x1]
        %v2424 = vperm.slane %v2422, 0
        %v2427 = vsel %vm871, %v2412, 0
        %v2430 = vsel %vm871, %v2413, 0
        %v2433 = vsel %vm871, %v2414, 0
        %v2436 = vsel %vm871, %v2415, 0
        %2438 = vmatpush.msra.mxu0 0.0
        %2439 = vmatpush.msra.mxu0 0.0
        %2440 = vmatpush.msra.mxu0 0.0
        %2441 = vmatpush.msra.mxu0 0.0
        %2442 = vmatpush.msra.mxu0 0.0
        %2443 = vmatpush.msra.mxu0 0.0
        %2444 = vmatpush.msra.mxu0 0.0
        %2445 = vmatpush.msra.mxu0 0.0
        %2446 = vmatpush.msra.mxu0 0.0
        %2447 = vmatpush.msra.mxu0 0.0
        %2448 = vmatpush.msra.mxu0 0.0
        %2449 = vmatpush.msra.mxu0 0.0
        %2450 = vmatpush.msra.mxu0 %v2420
        %2451 = vmatpush.msra.mxu0 %v2419
        %2452 = vmatpush.msra.mxu0 %v2418
        %2453 = vmatpush.msra.mxu0 %v2417
        %2454 = vmatmul.f32.gmra.mxu0 %v2427
        %v2455 = vpop.f32.mrf.mxu0
        %v2456 = vadd.f32 %v2424, %v2455
        %2457 = vmatmul.f32.gmra.mxu0 %v2430
        %v2458 = vpop.f32.mrf.mxu0
        %v2459 = vadd.f32 %v2424, %v2458
        %2460 = vmatmul.f32.gmra.mxu0 %v2433
        %v2461 = vpop.f32.mrf.mxu0
        %v2462 = vadd.f32 %v2424, %v2461
        %2463 = vmatmul.f32.gmra.mxu0 %v2436
        %v2464 = vpop.f32.mrf.mxu0
        %v2465 = vadd.f32 %v2424, %v2464
        %2466 = vdwg.mxu0
        %s2467 = scalar_lea.vmem [#allocation8], 32
        %v2468 = vld [vmem:[%s2467] sm:$0xff]
        %v2469 = vld [vmem:[%s2467 + $0x8] sm:$0xff]
        %v2470 = vld [vmem:[%s2467 + $0x10] sm:$0xff]
        %v2471 = vld [vmem:[%s2467 + $0x18] sm:$0xff]
        %s2472 = scalar_lea.vmem %s8, 1
        %v2473 = vld [vmem:[%s2472] sm:$0x1]
        %v2475 = vperm.slane %v2473, 0
        %2477 = vmatpush.msra.mxu0 0.0
        %2478 = vmatpush.msra.mxu0 0.0
        %2479 = vmatpush.msra.mxu0 0.0
        %2480 = vmatpush.msra.mxu0 0.0
        %2481 = vmatpush.msra.mxu0 0.0
        %2482 = vmatpush.msra.mxu0 0.0
        %2483 = vmatpush.msra.mxu0 0.0
        %2484 = vmatpush.msra.mxu0 0.0
        %2485 = vmatpush.msra.mxu0 0.0
        %2486 = vmatpush.msra.mxu0 0.0
        %2487 = vmatpush.msra.mxu0 0.0
        %2488 = vmatpush.msra.mxu0 0.0
        %2489 = vmatpush.msra.mxu0 %v2471
        %2490 = vmatpush.msra.mxu0 %v2470
        %2491 = vmatpush.msra.mxu0 %v2469
        %2492 = vmatpush.msra.mxu0 %v2468
        %2493 = vmatmul.f32.gmra.mxu0 %v2427
        %v2494 = vpop.f32.mrf.mxu0
        %v2495 = vadd.f32 %v2475, %v2494
        %2496 = vmatmul.f32.gmra.mxu0 %v2430
        %v2497 = vpop.f32.mrf.mxu0
        %v2498 = vadd.f32 %v2475, %v2497
        %2499 = vmatmul.f32.gmra.mxu0 %v2433
        %v2500 = vpop.f32.mrf.mxu0
        %v2501 = vadd.f32 %v2475, %v2500
        %2502 = vmatmul.f32.gmra.mxu0 %v2436
        %v2503 = vpop.f32.mrf.mxu0
        %v2504 = vadd.f32 %v2475, %v2503
        %2505 = vdwg.mxu0
        %v2506 = vmul.f32 %v2495, %v857
        %v2507 = vmul.f32 %v2498, %v857
        %v2508 = vmul.f32 %v2501, %v857
        %v2509 = vmul.f32 %v2504, %v857
        %v2510 = vmul.f32 %v2495, %v858
        %v2511 = vmul.f32 %v2498, %v858
        %v2512 = vmul.f32 %v2501, %v858
        %v2513 = vmul.f32 %v2504, %v858
        %v2514 = vmul.f32 %v2495, %v960
        %v2515 = vmul.f32 %v2498, %v960
        %v2516 = vmul.f32 %v2501, %v960
        %v2517 = vmul.f32 %v2504, %v960
        %v2518 = vmul.f32 %v2495, %v968
        %v2519 = vmul.f32 %v2498, %v968
        %v2520 = vmul.f32 %v2501, %v968
        %v2521 = vmul.f32 %v2504, %v968
        %s2522 = scalar_lea.vmem %s740, 256 [#allocation3]
        %v2523 = vld [vmem:[%s2522] sm:$0xff]
        %v2524 = vld [vmem:[%s2522 + $0x8] sm:$0xff]
        %v2525 = vld [vmem:[%s2522 + $0x10] sm:$0xff]
        %v2526 = vld [vmem:[%s2522 + $0x18] sm:$0xff]
        %v2527 = vld [vmem:[%s2522 + $0x20] sm:$0xff]
        %v2528 = vld [vmem:[%s2522 + $0x28] sm:$0xff]
        %v2529 = vld [vmem:[%s2522 + $0x30] sm:$0xff]
        %v2530 = vld [vmem:[%s2522 + $0x38] sm:$0xff]
        %v2531 = vld [vmem:[%s2522 + $0x40] sm:$0xff]
        %v2532 = vld [vmem:[%s2522 + $0x48] sm:$0xff]
        %v2533 = vld [vmem:[%s2522 + $0x50] sm:$0xff]
        %v2534 = vld [vmem:[%s2522 + $0x58] sm:$0xff]
        %v2535 = vld [vmem:[%s2522 + $0x60] sm:$0xff]
        %v2536 = vld [vmem:[%s2522 + $0x68] sm:$0xff]
        %v2537 = vld [vmem:[%s2522 + $0x70] sm:$0xff]
        %v2538 = vld [vmem:[%s2522 + $0x78] sm:$0xff]
        %v2539 = vld [vmem:[%s2522 + $0x80] sm:$0xff]
        %v2540 = vld [vmem:[%s2522 + $0x88] sm:$0xff]
        %v2541 = vld [vmem:[%s2522 + $0x90] sm:$0xff]
        %v2542 = vld [vmem:[%s2522 + $0x98] sm:$0xff]
        %v2543 = vld [vmem:[%s2522 + $0xa0] sm:$0xff]
        %v2544 = vld [vmem:[%s2522 + $0xa8] sm:$0xff]
        %v2545 = vld [vmem:[%s2522 + $0xb0] sm:$0xff]
        %v2546 = vld [vmem:[%s2522 + $0xb8] sm:$0xff]
        %v2547 = vld [vmem:[%s2522 + $0xc0] sm:$0xff]
        %v2548 = vld [vmem:[%s2522 + $0xc8] sm:$0xff]
        %v2549 = vld [vmem:[%s2522 + $0xd0] sm:$0xff]
        %v2550 = vld [vmem:[%s2522 + $0xd8] sm:$0xff]
        %v2551 = vld [vmem:[%s2522 + $0xe0] sm:$0xff]
        %v2552 = vld [vmem:[%s2522 + $0xe8] sm:$0xff]
        %v2553 = vld [vmem:[%s2522 + $0xf0] sm:$0xff]
        %v2554 = vld [vmem:[%s2522 + $0xf8] sm:$0xff]
        %v2559 = vrot.slane %v2456, 1
        %v2560 = vrot.slane %v2456, 2
        %v2561 = vrot.slane %v2456, 3
        %v2562 = vrot.slane %v2456, 4
        %v2563 = vrot.slane %v2456, 5
        %v2564 = vrot.slane %v2456, 6
        %v2565 = vrot.slane %v2456, 7
        %v2566 = vrot.slane %v2459, 1
        %v2567 = vrot.slane %v2459, 2
        %v2568 = vrot.slane %v2459, 3
        %v2569 = vrot.slane %v2459, 4
        %v2570 = vrot.slane %v2459, 5
        %v2571 = vrot.slane %v2459, 6
        %v2572 = vrot.slane %v2459, 7
        %v2573 = vrot.slane %v2462, 1
        %v2574 = vrot.slane %v2462, 2
        %v2575 = vrot.slane %v2462, 3
        %v2576 = vrot.slane %v2462, 4
        %v2577 = vrot.slane %v2462, 5
        %v2578 = vrot.slane %v2462, 6
        %v2579 = vrot.slane %v2462, 7
        %v2580 = vrot.slane %v2465, 1
        %v2581 = vrot.slane %v2465, 2
        %v2582 = vrot.slane %v2465, 3
        %v2583 = vrot.slane %v2465, 4
        %v2584 = vrot.slane %v2465, 5
        %v2585 = vrot.slane %v2465, 6
        %v2586 = vrot.slane %v2465, 7
        %v2587 = vperm.slane %v2456, 0
        %v2588 = vperm.slane %v2559, 0
        %v2589 = vperm.slane %v2560, 0
        %v2590 = vperm.slane %v2561, 0
        %v2591 = vperm.slane %v2562, 0
        %v2592 = vperm.slane %v2563, 0
        %v2593 = vperm.slane %v2564, 0
        %v2594 = vperm.slane %v2565, 0
        %v2595 = vperm.slane %v2459, 0
        %v2596 = vperm.slane %v2566, 0
        %v2597 = vperm.slane %v2567, 0
        %v2598 = vperm.slane %v2568, 0
        %v2599 = vperm.slane %v2569, 0
        %v2600 = vperm.slane %v2570, 0
        %v2601 = vperm.slane %v2571, 0
        %v2602 = vperm.slane %v2572, 0
        %v2603 = vperm.slane %v2462, 0
        %v2604 = vperm.slane %v2573, 0
        %v2605 = vperm.slane %v2574, 0
        %v2606 = vperm.slane %v2575, 0
        %v2607 = vperm.slane %v2576, 0
        %v2608 = vperm.slane %v2577, 0
        %v2609 = vperm.slane %v2578, 0
        %v2610 = vperm.slane %v2579, 0
        %v2611 = vperm.slane %v2465, 0
        %v2612 = vperm.slane %v2580, 0
        %v2613 = vperm.slane %v2581, 0
        %v2614 = vperm.slane %v2582, 0
        %v2615 = vperm.slane %v2583, 0
        %v2616 = vperm.slane %v2584, 0
        %v2617 = vperm.slane %v2585, 0
        %v2618 = vperm.slane %v2586, 0
        %v2651 = vmul.f32 %v2523, %v2587
        %v2652 = vmul.f32 %v2524, %v2588
        %v2653 = vmul.f32 %v2525, %v2589
        %v2654 = vmul.f32 %v2526, %v2590
        %v2655 = vmul.f32 %v2527, %v2591
        %v2656 = vmul.f32 %v2528, %v2592
        %v2657 = vmul.f32 %v2529, %v2593
        %v2658 = vmul.f32 %v2530, %v2594
        %v2659 = vmul.f32 %v2531, %v2595
        %v2660 = vmul.f32 %v2532, %v2596
        %v2661 = vmul.f32 %v2533, %v2597
        %v2662 = vmul.f32 %v2534, %v2598
        %v2663 = vmul.f32 %v2535, %v2599
        %v2664 = vmul.f32 %v2536, %v2600
        %v2665 = vmul.f32 %v2537, %v2601
        %v2666 = vmul.f32 %v2538, %v2602
        %v2667 = vmul.f32 %v2539, %v2603
        %v2668 = vmul.f32 %v2540, %v2604
        %v2669 = vmul.f32 %v2541, %v2605
        %v2670 = vmul.f32 %v2542, %v2606
        %v2671 = vmul.f32 %v2543, %v2607
        %v2672 = vmul.f32 %v2544, %v2608
        %v2673 = vmul.f32 %v2545, %v2609
        %v2674 = vmul.f32 %v2546, %v2610
        %v2675 = vmul.f32 %v2547, %v2611
        %v2676 = vmul.f32 %v2548, %v2612
        %v2677 = vmul.f32 %v2549, %v2613
        %v2678 = vmul.f32 %v2550, %v2614
        %v2679 = vmul.f32 %v2551, %v2615
        %v2680 = vmul.f32 %v2552, %v2616
        %v2681 = vmul.f32 %v2553, %v2617
        %v2682 = vmul.f32 %v2554, %v2618
        %s2683 = scalar_lea.vmem %s750, 256 [#allocation6]
        %v2684 = vld [vmem:[%s2683] sm:$0xff]
        %v2685 = vld [vmem:[%s2683 + $0x8] sm:$0xff]
        %v2686 = vld [vmem:[%s2683 + $0x10] sm:$0xff]
        %v2687 = vld [vmem:[%s2683 + $0x18] sm:$0xff]
        %v2688 = vld [vmem:[%s2683 + $0x20] sm:$0xff]
        %v2689 = vld [vmem:[%s2683 + $0x28] sm:$0xff]
        %v2690 = vld [vmem:[%s2683 + $0x30] sm:$0xff]
        %v2691 = vld [vmem:[%s2683 + $0x38] sm:$0xff]
        %v2692 = vld [vmem:[%s2683 + $0x40] sm:$0xff]
        %v2693 = vld [vmem:[%s2683 + $0x48] sm:$0xff]
        %v2694 = vld [vmem:[%s2683 + $0x50] sm:$0xff]
        %v2695 = vld [vmem:[%s2683 + $0x58] sm:$0xff]
        %v2696 = vld [vmem:[%s2683 + $0x60] sm:$0xff]
        %v2697 = vld [vmem:[%s2683 + $0x68] sm:$0xff]
        %v2698 = vld [vmem:[%s2683 + $0x70] sm:$0xff]
        %v2699 = vld [vmem:[%s2683 + $0x78] sm:$0xff]
        %v2700 = vld [vmem:[%s2683 + $0x80] sm:$0xff]
        %v2701 = vld [vmem:[%s2683 + $0x88] sm:$0xff]
        %v2702 = vld [vmem:[%s2683 + $0x90] sm:$0xff]
        %v2703 = vld [vmem:[%s2683 + $0x98] sm:$0xff]
        %v2704 = vld [vmem:[%s2683 + $0xa0] sm:$0xff]
        %v2705 = vld [vmem:[%s2683 + $0xa8] sm:$0xff]
        %v2706 = vld [vmem:[%s2683 + $0xb0] sm:$0xff]
        %v2707 = vld [vmem:[%s2683 + $0xb8] sm:$0xff]
        %v2708 = vld [vmem:[%s2683 + $0xc0] sm:$0xff]
        %v2709 = vld [vmem:[%s2683 + $0xc8] sm:$0xff]
        %v2710 = vld [vmem:[%s2683 + $0xd0] sm:$0xff]
        %v2711 = vld [vmem:[%s2683 + $0xd8] sm:$0xff]
        %v2712 = vld [vmem:[%s2683 + $0xe0] sm:$0xff]
        %v2713 = vld [vmem:[%s2683 + $0xe8] sm:$0xff]
        %v2714 = vld [vmem:[%s2683 + $0xf0] sm:$0xff]
        %v2715 = vld [vmem:[%s2683 + $0xf8] sm:$0xff]
        %v2716 = vmul.f32 %v2684, %v2495
        %v2717 = vmul.f32 %v2685, %v2495
        %v2718 = vmul.f32 %v2686, %v2495
        %v2719 = vmul.f32 %v2687, %v2495
        %v2720 = vmul.f32 %v2688, %v2495
        %v2721 = vmul.f32 %v2689, %v2495
        %v2722 = vmul.f32 %v2690, %v2495
        %v2723 = vmul.f32 %v2691, %v2495
        %v2724 = vmul.f32 %v2692, %v2498
        %v2725 = vmul.f32 %v2693, %v2498
        %v2726 = vmul.f32 %v2694, %v2498
        %v2727 = vmul.f32 %v2695, %v2498
        %v2728 = vmul.f32 %v2696, %v2498
        %v2729 = vmul.f32 %v2697, %v2498
        %v2730 = vmul.f32 %v2698, %v2498
        %v2731 = vmul.f32 %v2699, %v2498
        %v2732 = vmul.f32 %v2700, %v2501
        %v2733 = vmul.f32 %v2701, %v2501
        %v2734 = vmul.f32 %v2702, %v2501
        %v2735 = vmul.f32 %v2703, %v2501
        %v2736 = vmul.f32 %v2704, %v2501
        %v2737 = vmul.f32 %v2705, %v2501
        %v2738 = vmul.f32 %v2706, %v2501
        %v2739 = vmul.f32 %v2707, %v2501
        %v2740 = vmul.f32 %v2708, %v2504
        %v2741 = vmul.f32 %v2709, %v2504
        %v2742 = vmul.f32 %v2710, %v2504
        %v2743 = vmul.f32 %v2711, %v2504
        %v2744 = vmul.f32 %v2712, %v2504
        %v2745 = vmul.f32 %v2713, %v2504
        %v2746 = vmul.f32 %v2714, %v2504
        %v2747 = vmul.f32 %v2715, %v2504
        %v2748 = vadd.f32 %v2651, %v2716
        %v2749 = vadd.f32 %v2652, %v2717
        %v2750 = vadd.f32 %v2653, %v2718
        %v2751 = vadd.f32 %v2654, %v2719
        %v2752 = vadd.f32 %v2655, %v2720
        %v2753 = vadd.f32 %v2656, %v2721
        %v2754 = vadd.f32 %v2657, %v2722
        %v2755 = vadd.f32 %v2658, %v2723
        %v2756 = vadd.f32 %v2659, %v2724
        %v2757 = vadd.f32 %v2660, %v2725
        %v2758 = vadd.f32 %v2661, %v2726
        %v2759 = vadd.f32 %v2662, %v2727
        %v2760 = vadd.f32 %v2663, %v2728
        %v2761 = vadd.f32 %v2664, %v2729
        %v2762 = vadd.f32 %v2665, %v2730
        %v2763 = vadd.f32 %v2666, %v2731
        %v2764 = vadd.f32 %v2667, %v2732
        %v2765 = vadd.f32 %v2668, %v2733
        %v2766 = vadd.f32 %v2669, %v2734
        %v2767 = vadd.f32 %v2670, %v2735
        %v2768 = vadd.f32 %v2671, %v2736
        %v2769 = vadd.f32 %v2672, %v2737
        %v2770 = vadd.f32 %v2673, %v2738
        %v2771 = vadd.f32 %v2674, %v2739
        %v2772 = vadd.f32 %v2675, %v2740
        %v2773 = vadd.f32 %v2676, %v2741
        %v2774 = vadd.f32 %v2677, %v2742
        %v2775 = vadd.f32 %v2678, %v2743
        %v2776 = vadd.f32 %v2679, %v2744
        %v2777 = vadd.f32 %v2680, %v2745
        %v2778 = vadd.f32 %v2681, %v2746
        %v2779 = vadd.f32 %v2682, %v2747
        %v2780 = vsel %vm1230, %v2748, 0.0
        %2781 = vadd.xlane.f32.xlu0 %v2780
        %v2782 = vpop.xlane.xlu0 %2781
        %v2783 = vsel %vm1230, %v2749, 0.0
        %2784 = vadd.xlane.f32.xlu0 %v2783
        %v2785 = vpop.xlane.xlu0 %2784
        %v2786 = vsel %vm1230, %v2750, 0.0
        %2787 = vadd.xlane.f32.xlu0 %v2786
        %v2788 = vpop.xlane.xlu0 %2787
        %v2789 = vsel %vm1230, %v2751, 0.0
        %2790 = vadd.xlane.f32.xlu0 %v2789
        %v2791 = vpop.xlane.xlu0 %2790
        %v2792 = vsel %vm1230, %v2752, 0.0
        %2793 = vadd.xlane.f32.xlu0 %v2792
        %v2794 = vpop.xlane.xlu0 %2793
        %v2795 = vsel %vm1230, %v2753, 0.0
        %2796 = vadd.xlane.f32.xlu0 %v2795
        %v2797 = vpop.xlane.xlu0 %2796
        %v2798 = vsel %vm1230, %v2754, 0.0
        %2799 = vadd.xlane.f32.xlu0 %v2798
        %v2800 = vpop.xlane.xlu0 %2799
        %v2801 = vsel %vm1230, %v2755, 0.0
        %2802 = vadd.xlane.f32.xlu0 %v2801
        %v2803 = vpop.xlane.xlu0 %2802
        %v2804 = vsel %vm1230, %v2756, 0.0
        %2805 = vadd.xlane.f32.xlu0 %v2804
        %v2806 = vpop.xlane.xlu0 %2805
        %v2807 = vsel %vm1230, %v2757, 0.0
        %2808 = vadd.xlane.f32.xlu0 %v2807
        %v2809 = vpop.xlane.xlu0 %2808
        %v2810 = vsel %vm1230, %v2758, 0.0
        %2811 = vadd.xlane.f32.xlu0 %v2810
        %v2812 = vpop.xlane.xlu0 %2811
        %v2813 = vsel %vm1230, %v2759, 0.0
        %2814 = vadd.xlane.f32.xlu0 %v2813
        %v2815 = vpop.xlane.xlu0 %2814
        %v2816 = vsel %vm1230, %v2760, 0.0
        %2817 = vadd.xlane.f32.xlu0 %v2816
        %v2818 = vpop.xlane.xlu0 %2817
        %v2819 = vsel %vm1230, %v2761, 0.0
        %2820 = vadd.xlane.f32.xlu0 %v2819
        %v2821 = vpop.xlane.xlu0 %2820
        %v2822 = vsel %vm1230, %v2762, 0.0
        %2823 = vadd.xlane.f32.xlu0 %v2822
        %v2824 = vpop.xlane.xlu0 %2823
        %v2825 = vsel %vm1230, %v2763, 0.0
        %2826 = vadd.xlane.f32.xlu0 %v2825
        %v2827 = vpop.xlane.xlu0 %2826
        %v2828 = vsel %vm1230, %v2764, 0.0
        %2829 = vadd.xlane.f32.xlu0 %v2828
        %v2830 = vpop.xlane.xlu0 %2829
        %v2831 = vsel %vm1230, %v2765, 0.0
        %2832 = vadd.xlane.f32.xlu0 %v2831
        %v2833 = vpop.xlane.xlu0 %2832
        %v2834 = vsel %vm1230, %v2766, 0.0
        %2835 = vadd.xlane.f32.xlu0 %v2834
        %v2836 = vpop.xlane.xlu0 %2835
        %v2837 = vsel %vm1230, %v2767, 0.0
        %2838 = vadd.xlane.f32.xlu0 %v2837
        %v2839 = vpop.xlane.xlu0 %2838
        %v2840 = vsel %vm1230, %v2768, 0.0
        %2841 = vadd.xlane.f32.xlu0 %v2840
        %v2842 = vpop.xlane.xlu0 %2841
        %v2843 = vsel %vm1230, %v2769, 0.0
        %2844 = vadd.xlane.f32.xlu0 %v2843
        %v2845 = vpop.xlane.xlu0 %2844
        %v2846 = vsel %vm1230, %v2770, 0.0
        %2847 = vadd.xlane.f32.xlu0 %v2846
        %v2848 = vpop.xlane.xlu0 %2847
        %v2849 = vsel %vm1230, %v2771, 0.0
        %2850 = vadd.xlane.f32.xlu0 %v2849
        %v2851 = vpop.xlane.xlu0 %2850
        %v2852 = vsel %vm1230, %v2772, 0.0
        %2853 = vadd.xlane.f32.xlu0 %v2852
        %v2854 = vpop.xlane.xlu0 %2853
        %v2855 = vsel %vm1230, %v2773, 0.0
        %2856 = vadd.xlane.f32.xlu0 %v2855
        %v2857 = vpop.xlane.xlu0 %2856
        %v2858 = vsel %vm1230, %v2774, 0.0
        %2859 = vadd.xlane.f32.xlu0 %v2858
        %v2860 = vpop.xlane.xlu0 %2859
        %v2861 = vsel %vm1230, %v2775, 0.0
        %2862 = vadd.xlane.f32.xlu0 %v2861
        %v2863 = vpop.xlane.xlu0 %2862
        %v2864 = vsel %vm1230, %v2776, 0.0
        %2865 = vadd.xlane.f32.xlu0 %v2864
        %v2866 = vpop.xlane.xlu0 %2865
        %v2867 = vsel %vm1230, %v2777, 0.0
        %2868 = vadd.xlane.f32.xlu0 %v2867
        %v2869 = vpop.xlane.xlu0 %2868
        %v2870 = vsel %vm1230, %v2778, 0.0
        %2871 = vadd.xlane.f32.xlu0 %v2870
        %v2872 = vpop.xlane.xlu0 %2871
        %v2873 = vsel %vm1230, %v2779, 0.0
        %2874 = vadd.xlane.f32.xlu0 %v2873
        %v2875 = vpop.xlane.xlu0 %2874
        %2908 = vrot.lane.b32.xlu0 %v2748, 112
        %v2909 = vpop.permute.xlu0 %2908
        %2910 = vrot.lane.b32.xlu0 %v2749, 112
        %v2911 = vpop.permute.xlu0 %2910
        %2912 = vrot.lane.b32.xlu0 %v2750, 112
        %v2913 = vpop.permute.xlu0 %2912
        %2914 = vrot.lane.b32.xlu0 %v2751, 112
        %v2915 = vpop.permute.xlu0 %2914
        %2916 = vrot.lane.b32.xlu0 %v2752, 112
        %v2917 = vpop.permute.xlu0 %2916
        %2918 = vrot.lane.b32.xlu0 %v2753, 112
        %v2919 = vpop.permute.xlu0 %2918
        %2920 = vrot.lane.b32.xlu0 %v2754, 112
        %v2921 = vpop.permute.xlu0 %2920
        %2922 = vrot.lane.b32.xlu0 %v2755, 112
        %v2923 = vpop.permute.xlu0 %2922
        %2924 = vrot.lane.b32.xlu0 %v2756, 112
        %v2925 = vpop.permute.xlu0 %2924
        %2926 = vrot.lane.b32.xlu0 %v2757, 112
        %v2927 = vpop.permute.xlu0 %2926
        %2928 = vrot.lane.b32.xlu0 %v2758, 112
        %v2929 = vpop.permute.xlu0 %2928
        %2930 = vrot.lane.b32.xlu0 %v2759, 112
        %v2931 = vpop.permute.xlu0 %2930
        %2932 = vrot.lane.b32.xlu0 %v2760, 112
        %v2933 = vpop.permute.xlu0 %2932
        %2934 = vrot.lane.b32.xlu0 %v2761, 112
        %v2935 = vpop.permute.xlu0 %2934
        %2936 = vrot.lane.b32.xlu0 %v2762, 112
        %v2937 = vpop.permute.xlu0 %2936
        %2938 = vrot.lane.b32.xlu0 %v2763, 112
        %v2939 = vpop.permute.xlu0 %2938
        %2940 = vrot.lane.b32.xlu0 %v2764, 112
        %v2941 = vpop.permute.xlu0 %2940
        %2942 = vrot.lane.b32.xlu0 %v2765, 112
        %v2943 = vpop.permute.xlu0 %2942
        %2944 = vrot.lane.b32.xlu0 %v2766, 112
        %v2945 = vpop.permute.xlu0 %2944
        %2946 = vrot.lane.b32.xlu0 %v2767, 112
        %v2947 = vpop.permute.xlu0 %2946
        %2948 = vrot.lane.b32.xlu0 %v2768, 112
        %v2949 = vpop.permute.xlu0 %2948
        %2950 = vrot.lane.b32.xlu0 %v2769, 112
        %v2951 = vpop.permute.xlu0 %2950
        %2952 = vrot.lane.b32.xlu0 %v2770, 112
        %v2953 = vpop.permute.xlu0 %2952
        %2954 = vrot.lane.b32.xlu0 %v2771, 112
        %v2955 = vpop.permute.xlu0 %2954
        %2956 = vrot.lane.b32.xlu0 %v2772, 112
        %v2957 = vpop.permute.xlu0 %2956
        %2958 = vrot.lane.b32.xlu0 %v2773, 112
        %v2959 = vpop.permute.xlu0 %2958
        %2960 = vrot.lane.b32.xlu0 %v2774, 112
        %v2961 = vpop.permute.xlu0 %2960
        %2962 = vrot.lane.b32.xlu0 %v2775, 112
        %v2963 = vpop.permute.xlu0 %2962
        %2964 = vrot.lane.b32.xlu0 %v2776, 112
        %v2965 = vpop.permute.xlu0 %2964
        %2966 = vrot.lane.b32.xlu0 %v2777, 112
        %v2967 = vpop.permute.xlu0 %2966
        %2968 = vrot.lane.b32.xlu0 %v2778, 112
        %v2969 = vpop.permute.xlu0 %2968
        %2970 = vrot.lane.b32.xlu0 %v2779, 112
        %v2971 = vpop.permute.xlu0 %2970
        %v3004 = vsel %vm1230, %v2909, 0.0
        %3005 = vadd.xlane.f32.xlu0 %v3004
        %v3006 = vpop.xlane.xlu0 %3005
        %v3007 = vsel %vm1230, %v2911, 0.0
        %3008 = vadd.xlane.f32.xlu0 %v3007
        %v3009 = vpop.xlane.xlu0 %3008
        %v3010 = vsel %vm1230, %v2913, 0.0
        %3011 = vadd.xlane.f32.xlu0 %v3010
        %v3012 = vpop.xlane.xlu0 %3011
        %v3013 = vsel %vm1230, %v2915, 0.0
        %3014 = vadd.xlane.f32.xlu0 %v3013
        %v3015 = vpop.xlane.xlu0 %3014
        %v3016 = vsel %vm1230, %v2917, 0.0
        %3017 = vadd.xlane.f32.xlu0 %v3016
        %v3018 = vpop.xlane.xlu0 %3017
        %v3019 = vsel %vm1230, %v2919, 0.0
        %3020 = vadd.xlane.f32.xlu0 %v3019
        %v3021 = vpop.xlane.xlu0 %3020
        %v3022 = vsel %vm1230, %v2921, 0.0
        %3023 = vadd.xlane.f32.xlu0 %v3022
        %v3024 = vpop.xlane.xlu0 %3023
        %v3025 = vsel %vm1230, %v2923, 0.0
        %3026 = vadd.xlane.f32.xlu0 %v3025
        %v3027 = vpop.xlane.xlu0 %3026
        %v3028 = vsel %vm1230, %v2925, 0.0
        %3029 = vadd.xlane.f32.xlu0 %v3028
        %v3030 = vpop.xlane.xlu0 %3029
        %v3031 = vsel %vm1230, %v2927, 0.0
        %3032 = vadd.xlane.f32.xlu0 %v3031
        %v3033 = vpop.xlane.xlu0 %3032
        %v3034 = vsel %vm1230, %v2929, 0.0
        %3035 = vadd.xlane.f32.xlu0 %v3034
        %v3036 = vpop.xlane.xlu0 %3035
        %v3037 = vsel %vm1230, %v2931, 0.0
        %3038 = vadd.xlane.f32.xlu0 %v3037
        %v3039 = vpop.xlane.xlu0 %3038
        %v3040 = vsel %vm1230, %v2933, 0.0
        %3041 = vadd.xlane.f32.xlu0 %v3040
        %v3042 = vpop.xlane.xlu0 %3041
        %v3043 = vsel %vm1230, %v2935, 0.0
        %3044 = vadd.xlane.f32.xlu0 %v3043
        %v3045 = vpop.xlane.xlu0 %3044
        %v3046 = vsel %vm1230, %v2937, 0.0
        %3047 = vadd.xlane.f32.xlu0 %v3046
        %v3048 = vpop.xlane.xlu0 %3047
        %v3049 = vsel %vm1230, %v2939, 0.0
        %3050 = vadd.xlane.f32.xlu0 %v3049
        %v3051 = vpop.xlane.xlu0 %3050
        %v3052 = vsel %vm1230, %v2941, 0.0
        %3053 = vadd.xlane.f32.xlu0 %v3052
        %v3054 = vpop.xlane.xlu0 %3053
        %v3055 = vsel %vm1230, %v2943, 0.0
        %3056 = vadd.xlane.f32.xlu0 %v3055
        %v3057 = vpop.xlane.xlu0 %3056
        %v3058 = vsel %vm1230, %v2945, 0.0
        %3059 = vadd.xlane.f32.xlu0 %v3058
        %v3060 = vpop.xlane.xlu0 %3059
        %v3061 = vsel %vm1230, %v2947, 0.0
        %3062 = vadd.xlane.f32.xlu0 %v3061
        %v3063 = vpop.xlane.xlu0 %3062
        %v3064 = vsel %vm1230, %v2949, 0.0
        %3065 = vadd.xlane.f32.xlu0 %v3064
        %v3066 = vpop.xlane.xlu0 %3065
        %v3067 = vsel %vm1230, %v2951, 0.0
        %3068 = vadd.xlane.f32.xlu0 %v3067
        %v3069 = vpop.xlane.xlu0 %3068
        %v3070 = vsel %vm1230, %v2953, 0.0
        %3071 = vadd.xlane.f32.xlu0 %v3070
        %v3072 = vpop.xlane.xlu0 %3071
        %v3073 = vsel %vm1230, %v2955, 0.0
        %3074 = vadd.xlane.f32.xlu0 %v3073
        %v3075 = vpop.xlane.xlu0 %3074
        %v3076 = vsel %vm1230, %v2957, 0.0
        %3077 = vadd.xlane.f32.xlu0 %v3076
        %v3078 = vpop.xlane.xlu0 %3077
        %v3079 = vsel %vm1230, %v2959, 0.0
        %3080 = vadd.xlane.f32.xlu0 %v3079
        %v3081 = vpop.xlane.xlu0 %3080
        %v3082 = vsel %vm1230, %v2961, 0.0
        %3083 = vadd.xlane.f32.xlu0 %v3082
        %v3084 = vpop.xlane.xlu0 %3083
        %v3085 = vsel %vm1230, %v2963, 0.0
        %3086 = vadd.xlane.f32.xlu0 %v3085
        %v3087 = vpop.xlane.xlu0 %3086
        %v3088 = vsel %vm1230, %v2965, 0.0
        %3089 = vadd.xlane.f32.xlu0 %v3088
        %v3090 = vpop.xlane.xlu0 %3089
        %v3091 = vsel %vm1230, %v2967, 0.0
        %3092 = vadd.xlane.f32.xlu0 %v3091
        %v3093 = vpop.xlane.xlu0 %3092
        %v3094 = vsel %vm1230, %v2969, 0.0
        %3095 = vadd.xlane.f32.xlu0 %v3094
        %v3096 = vpop.xlane.xlu0 %3095
        %v3097 = vsel %vm1230, %v2971, 0.0
        %3098 = vadd.xlane.f32.xlu0 %v3097
        %v3099 = vpop.xlane.xlu0 %3098
        %v3132 = vperm.slane %v3006, %v854
        %v3133 = vperm.slane %v3009, %v854
        %v3134 = vperm.slane %v3012, %v854
        %v3135 = vperm.slane %v3015, %v854
        %v3136 = vperm.slane %v3018, %v854
        %v3137 = vperm.slane %v3021, %v854
        %v3138 = vperm.slane %v3024, %v854
        %v3139 = vperm.slane %v3027, %v854
        %v3140 = vperm.slane %v3030, %v854
        %v3141 = vperm.slane %v3033, %v854
        %v3142 = vperm.slane %v3036, %v854
        %v3143 = vperm.slane %v3039, %v854
        %v3144 = vperm.slane %v3042, %v854
        %v3145 = vperm.slane %v3045, %v854
        %v3146 = vperm.slane %v3048, %v854
        %v3147 = vperm.slane %v3051, %v854
        %v3148 = vperm.slane %v3054, %v854
        %v3149 = vperm.slane %v3057, %v854
        %v3150 = vperm.slane %v3060, %v854
        %v3151 = vperm.slane %v3063, %v854
        %v3152 = vperm.slane %v3066, %v854
        %v3153 = vperm.slane %v3069, %v854
        %v3154 = vperm.slane %v3072, %v854
        %v3155 = vperm.slane %v3075, %v854
        %v3156 = vperm.slane %v3078, %v854
        %v3157 = vperm.slane %v3081, %v854
        %v3158 = vperm.slane %v3084, %v854
        %v3159 = vperm.slane %v3087, %v854
        %v3160 = vperm.slane %v3090, %v854
        %v3161 = vperm.slane %v3093, %v854
        %v3162 = vperm.slane %v3096, %v854
        %v3163 = vperm.slane %v3099, %v854
        %v3164 = vsel %vm1618, %v3133, %v3132
        %v3165 = vsel %vm1620, %v3134, %v3164
        %v3166 = vsel %vm1622, %v3135, %v3165
        %v3167 = vsel %vm1624, %v3136, %v3166
        %v3168 = vsel %vm1626, %v3137, %v3167
        %v3169 = vsel %vm1628, %v3138, %v3168
        %v3170 = vsel %vm1630, %v3139, %v3169
        %v3171 = vsel %vm1618, %v3141, %v3140
        %v3172 = vsel %vm1620, %v3142, %v3171
        %v3173 = vsel %vm1622, %v3143, %v3172
        %v3174 = vsel %vm1624, %v3144, %v3173
        %v3175 = vsel %vm1626, %v3145, %v3174
        %v3176 = vsel %vm1628, %v3146, %v3175
        %v3177 = vsel %vm1630, %v3147, %v3176
        %v3178 = vsel %vm1618, %v3149, %v3148
        %v3179 = vsel %vm1620, %v3150, %v3178
        %v3180 = vsel %vm1622, %v3151, %v3179
        %v3181 = vsel %vm1624, %v3152, %v3180
        %v3182 = vsel %vm1626, %v3153, %v3181
        %v3183 = vsel %vm1628, %v3154, %v3182
        %v3184 = vsel %vm1630, %v3155, %v3183
        %v3185 = vsel %vm1618, %v3157, %v3156
        %v3186 = vsel %vm1620, %v3158, %v3185
        %v3187 = vsel %vm1622, %v3159, %v3186
        %v3188 = vsel %vm1624, %v3160, %v3187
        %v3189 = vsel %vm1626, %v3161, %v3188
        %v3190 = vsel %vm1628, %v3162, %v3189
        %v3191 = vsel %vm1630, %v3163, %v3190
        %v3192 = vsel %vm1653, %v3170, 0
        %v3194 = vsel %vm1653, %v3177, 0
        %v3196 = vsel %vm1653, %v3184, 0
        %v3198 = vsel %vm1653, %v3191, 0
        %3200 = vmatpush.msra.mxu0 0.0
        %3201 = vmatpush.msra.mxu0 0.0
        %3202 = vmatpush.msra.mxu0 0.0
        %3203 = vmatpush.msra.mxu0 0.0
        %3204 = vmatpush.msra.mxu0 0.0
        %3205 = vmatpush.msra.mxu0 0.0
        %3206 = vmatpush.msra.mxu0 0.0
        %3207 = vmatpush.msra.mxu0 0.0
        %3208 = vmatpush.msra.mxu0 0.0
        %3209 = vmatpush.msra.mxu0 0.0
        %3210 = vmatpush.msra.mxu0 0.0
        %3211 = vmatpush.msra.mxu0 0.0
        %3212 = vmatpush.msra.mxu0 0.0
        %3213 = vmatpush.msra.mxu0 0.0
        %3214 = vmatpush.msra.mxu0 0.0
        %3215 = vmatpush.msra.mxu0 %v1553
        %3216 = vmatmul.f32.gmra.mxu0 %v3192
        %v3217 = vpop.f32.mrf.mxu0
        %v3218 = vadd.f32 0.0, %v3217
        %3219 = vmatmul.f32.gmra.mxu0 %v3194
        %v3220 = vpop.f32.mrf.mxu0
        %v3221 = vadd.f32 0.0, %v3220
        %3222 = vmatmul.f32.gmra.mxu0 %v3196
        %v3223 = vpop.f32.mrf.mxu0
        %v3224 = vadd.f32 0.0, %v3223
        %3225 = vmatmul.f32.gmra.mxu0 %v3198
        %v3226 = vpop.f32.mrf.mxu0
        %v3227 = vadd.f32 0.0, %v3226
        %3228 = vdwg.mxu0
        %v3261 = vperm.slane %v2782, %v854
        %v3262 = vperm.slane %v2785, %v854
        %v3263 = vperm.slane %v2788, %v854
        %v3264 = vperm.slane %v2791, %v854
        %v3265 = vperm.slane %v2794, %v854
        %v3266 = vperm.slane %v2797, %v854
        %v3267 = vperm.slane %v2800, %v854
        %v3268 = vperm.slane %v2803, %v854
        %v3269 = vperm.slane %v2806, %v854
        %v3270 = vperm.slane %v2809, %v854
        %v3271 = vperm.slane %v2812, %v854
        %v3272 = vperm.slane %v2815, %v854
        %v3273 = vperm.slane %v2818, %v854
        %v3274 = vperm.slane %v2821, %v854
        %v3275 = vperm.slane %v2824, %v854
        %v3276 = vperm.slane %v2827, %v854
        %v3277 = vperm.slane %v2830, %v854
        %v3278 = vperm.slane %v2833, %v854
        %v3279 = vperm.slane %v2836, %v854
        %v3280 = vperm.slane %v2839, %v854
        %v3281 = vperm.slane %v2842, %v854
        %v3282 = vperm.slane %v2845, %v854
        %v3283 = vperm.slane %v2848, %v854
        %v3284 = vperm.slane %v2851, %v854
        %v3285 = vperm.slane %v2854, %v854
        %v3286 = vperm.slane %v2857, %v854
        %v3287 = vperm.slane %v2860, %v854
        %v3288 = vperm.slane %v2863, %v854
        %v3289 = vperm.slane %v2866, %v854
        %v3290 = vperm.slane %v2869, %v854
        %v3291 = vperm.slane %v2872, %v854
        %v3292 = vperm.slane %v2875, %v854
        %v3293 = vsel %vm1618, %v3262, %v3261
        %v3294 = vsel %vm1620, %v3263, %v3293
        %v3295 = vsel %vm1622, %v3264, %v3294
        %v3296 = vsel %vm1624, %v3265, %v3295
        %v3297 = vsel %vm1626, %v3266, %v3296
        %v3298 = vsel %vm1628, %v3267, %v3297
        %v3299 = vsel %vm1630, %v3268, %v3298
        %v3300 = vsel %vm1618, %v3270, %v3269
        %v3301 = vsel %vm1620, %v3271, %v3300
        %v3302 = vsel %vm1622, %v3272, %v3301
        %v3303 = vsel %vm1624, %v3273, %v3302
        %v3304 = vsel %vm1626, %v3274, %v3303
        %v3305 = vsel %vm1628, %v3275, %v3304
        %v3306 = vsel %vm1630, %v3276, %v3305
        %v3307 = vsel %vm1618, %v3278, %v3277
        %v3308 = vsel %vm1620, %v3279, %v3307
        %v3309 = vsel %vm1622, %v3280, %v3308
        %v3310 = vsel %vm1624, %v3281, %v3309
        %v3311 = vsel %vm1626, %v3282, %v3310
        %v3312 = vsel %vm1628, %v3283, %v3311
        %v3313 = vsel %vm1630, %v3284, %v3312
        %v3314 = vsel %vm1618, %v3286, %v3285
        %v3315 = vsel %vm1620, %v3287, %v3314
        %v3316 = vsel %vm1622, %v3288, %v3315
        %v3317 = vsel %vm1624, %v3289, %v3316
        %v3318 = vsel %vm1626, %v3290, %v3317
        %v3319 = vsel %vm1628, %v3291, %v3318
        %v3320 = vsel %vm1630, %v3292, %v3319
        %v3321 = vsel %vm1653, %v3299, 0
        %v3323 = vsel %vm1653, %v3306, 0
        %v3325 = vsel %vm1653, %v3313, 0
        %v3327 = vsel %vm1653, %v3320, 0
        %3329 = vmatpush.msra.mxu0 0.0
        %3330 = vmatpush.msra.mxu0 0.0
        %3331 = vmatpush.msra.mxu0 0.0
        %3332 = vmatpush.msra.mxu0 0.0
        %3333 = vmatpush.msra.mxu0 0.0
        %3334 = vmatpush.msra.mxu0 0.0
        %3335 = vmatpush.msra.mxu0 0.0
        %3336 = vmatpush.msra.mxu0 0.0
        %3337 = vmatpush.msra.mxu0 0.0
        %3338 = vmatpush.msra.mxu0 0.0
        %3339 = vmatpush.msra.mxu0 0.0
        %3340 = vmatpush.msra.mxu0 0.0
        %3341 = vmatpush.msra.mxu0 0.0
        %3342 = vmatpush.msra.mxu0 0.0
        %3343 = vmatpush.msra.mxu0 0.0
        %3344 = vmatpush.msra.mxu0 %v1551
        %3345 = vmatmul.f32.gmra.mxu0 %v3321
        %v3346 = vpop.f32.mrf.mxu0
        %v3347 = vadd.f32 %v3218, %v3346
        %3348 = vmatmul.f32.gmra.mxu0 %v3323
        %v3349 = vpop.f32.mrf.mxu0
        %v3350 = vadd.f32 %v3221, %v3349
        %3351 = vmatmul.f32.gmra.mxu0 %v3325
        %v3352 = vpop.f32.mrf.mxu0
        %v3353 = vadd.f32 %v3224, %v3352
        %3354 = vmatmul.f32.gmra.mxu0 %v3327
        %v3355 = vpop.f32.mrf.mxu0
        %v3356 = vadd.f32 %v3227, %v3355
        %3357 = vdwg.mxu0
        %v3358 = vsel %vm871, %v2456, 0
        %v3360 = vsel %vm871, %v2459, 0
        %v3362 = vsel %vm871, %v2462, 0
        %v3364 = vsel %vm871, %v2465, 0
        %v3367 = vsel %vm871, %v2506, 0
        %v3370 = vsel %vm871, %v2507, 0
        %v3373 = vsel %vm871, %v2508, 0
        %v3376 = vsel %vm871, %v2509, 0
        %v3379 = vsel %vm871, %v2510, 0
        %v3382 = vsel %vm871, %v2511, 0
        %v3385 = vsel %vm871, %v2512, 0
        %v3388 = vsel %vm871, %v2513, 0
        %3390 = vmatpush.xpose.msra.mxu0 0.0
        %3391 = vmatpush.xpose.msra.mxu0 0.0
        %3392 = vmatpush.xpose.msra.mxu0 0.0
        %3393 = vmatpush.xpose.msra.mxu0 0.0
        %3394 = vmatpush.xpose.msra.mxu0 0.0
        %3395 = vmatpush.xpose.msra.mxu0 0.0
        %3396 = vmatpush.xpose.msra.mxu0 0.0
        %3397 = vmatpush.xpose.msra.mxu0 0.0
        %3398 = vmatpush.xpose.msra.mxu0 %v3388
        %3399 = vmatpush.xpose.msra.mxu0 %v3385
        %3400 = vmatpush.xpose.msra.mxu0 %v3382
        %3401 = vmatpush.xpose.msra.mxu0 %v3379
        %3402 = vmatpush.xpose.msra.mxu0 %v3376
        %3403 = vmatpush.xpose.msra.mxu0 %v3373
        %3404 = vmatpush.xpose.msra.mxu0 %v3370
        %3405 = vmatpush.xpose.msra.mxu0 %v3367
        %3406 = vmatmul.f32.gmra.mxu0 %v3358
        %v3407 = vpop.f32.mrf.mxu0
        %v3408 = vadd.f32 %v3347, %v3407
        %3409 = vmatmul.f32.gmra.mxu0 %v3360
        %v3410 = vpop.f32.mrf.mxu0
        %v3411 = vadd.f32 %v3350, %v3410
        %3412 = vmatmul.f32.gmra.mxu0 %v3362
        %v3413 = vpop.f32.mrf.mxu0
        %v3414 = vadd.f32 %v3353, %v3413
        %3415 = vmatmul.f32.gmra.mxu0 %v3364
        %v3416 = vpop.f32.mrf.mxu0
        %v3417 = vadd.f32 %v3356, %v3416
        %3418 = vdwg.mxu0
        %s3419 = scalar_lea.vmem %s732, 32 [#allocation2]
        %v3420 = vld [vmem:[%s3419] sm:$0xff]
        %v3421 = vld [vmem:[%s3419 + $0x8] sm:$0xff]
        %v3422 = vld [vmem:[%s3419 + $0x10] sm:$0xff]
        %v3423 = vld [vmem:[%s3419 + $0x18] sm:$0xff]
        %v3424 = vadd.f32 %v3408, %v3420
        %v3425 = vadd.f32 %v3411, %v3421
        %v3426 = vadd.f32 %v3414, %v3422
        %v3427 = vadd.f32 %v3417, %v3423
        %v3428 = vsel %vm1889, %v3424, -inf
        %3429 = vmax.xlane.f32.xlu0 %v3428
        %v3430 = vpop.xlane.xlu0 %3429
        %v3431 = vsel %vm1889, %v3425, -inf
        %3432 = vmax.xlane.f32.xlu0 %v3431
        %v3433 = vpop.xlane.xlu0 %3432
        %v3434 = vsel %vm1889, %v3426, -inf
        %3435 = vmax.xlane.f32.xlu0 %v3434
        %v3436 = vpop.xlane.xlu0 %3435
        %v3437 = vsel %vm1889, %v3427, -inf
        %3438 = vmax.xlane.f32.xlu0 %v3437
        %v3439 = vpop.xlane.xlu0 %3438
        %v3440 = vsub.f32 %v3424, %v3430
        %v3441 = vsub.f32 %v3425, %v3433
        %v3442 = vsub.f32 %v3426, %v3436
        %v3443 = vsub.f32 %v3427, %v3439
        %v3444 = vmul.f32 %v3440, 1.442695
        %v3445 = vpow.pop %v3444
        %v3446 = vmul.f32 %v3441, 1.442695
        %v3447 = vpow.pop %v3446
        %v3448 = vmul.f32 %v3442, 1.442695
        %v3449 = vpow.pop %v3448
        %v3450 = vmul.f32 %v3443, 1.442695
        %v3451 = vpow.pop %v3450
        %v3452 = vmul.f32 %v3445, %v861
        %v3453 = vmul.f32 %v3447, %v861
        %v3454 = vmul.f32 %v3449, %v861
        %v3455 = vmul.f32 %v3451, %v861
        %v3456 = vsel %vm1889, %v3452, 0.0
        %3457 = vadd.xlane.f32.xlu0 %v3456
        %v3458 = vpop.xlane.xlu0 %3457
        %v3459 = vsel %vm1889, %v3453, 0.0
        %3460 = vadd.xlane.f32.xlu0 %v3459
        %v3461 = vpop.xlane.xlu0 %3460
        %v3462 = vsel %vm1889, %v3454, 0.0
        %3463 = vadd.xlane.f32.xlu0 %v3462
        %v3464 = vpop.xlane.xlu0 %3463
        %v3465 = vsel %vm1889, %v3455, 0.0
        %3466 = vadd.xlane.f32.xlu0 %v3465
        %v3467 = vpop.xlane.xlu0 %3466
        %v3468 = vmul.f32 %v3445, %v862
        %v3469 = vmul.f32 %v3447, %v862
        %v3470 = vmul.f32 %v3449, %v862
        %v3471 = vmul.f32 %v3451, %v862
        %v3472 = vsel %vm1889, %v3468, 0.0
        %3473 = vadd.xlane.f32.xlu0 %v3472
        %v3474 = vpop.xlane.xlu0 %3473
        %v3475 = vsel %vm1889, %v3469, 0.0
        %3476 = vadd.xlane.f32.xlu0 %v3475
        %v3477 = vpop.xlane.xlu0 %3476
        %v3478 = vsel %vm1889, %v3470, 0.0
        %3479 = vadd.xlane.f32.xlu0 %v3478
        %v3480 = vpop.xlane.xlu0 %3479
        %v3481 = vsel %vm1889, %v3471, 0.0
        %3482 = vadd.xlane.f32.xlu0 %v3481
        %v3483 = vpop.xlane.xlu0 %3482
        %v3484 = vrcp.pop %v3458
        %v3485 = vrcp.pop %v3461
        %v3486 = vrcp.pop %v3464
        %v3487 = vrcp.pop %v3467
        %v3488 = vmul.f32 %v3484, %v861
        %v3489 = vmul.f32 %v3485, %v861
        %v3490 = vmul.f32 %v3486, %v861
        %v3491 = vmul.f32 %v3487, %v861
        %v3492 = vrcp.pop %v3474
        %v3493 = vrcp.pop %v3477
        %v3494 = vrcp.pop %v3480
        %v3495 = vrcp.pop %v3483
        %v3496 = vmul.f32 %v3492, %v862
        %v3497 = vmul.f32 %v3493, %v862
        %v3498 = vmul.f32 %v3494, %v862
        %v3499 = vmul.f32 %v3495, %v862
        %v3500 = vadd.f32 %v3488, %v3496
        %v3501 = vadd.f32 %v3489, %v3497
        %v3502 = vadd.f32 %v3490, %v3498
        %v3503 = vadd.f32 %v3491, %v3499
        %v3504 = vmul.f32 %v3445, %v3500
        %v3505 = vmul.f32 %v3447, %v3501
        %v3506 = vmul.f32 %v3449, %v3502
        %v3507 = vmul.f32 %v3451, %v3503
        %3516 = vrot.lane.b32.xlu0 %v2514, 96
        %v3517 = vpop.permute.xlu0 %3516
        %3518 = vrot.lane.b32.xlu0 %v2515, 96
        %v3519 = vpop.permute.xlu0 %3518
        %3520 = vrot.lane.b32.xlu0 %v2516, 96
        %v3521 = vpop.permute.xlu0 %3520
        %3522 = vrot.lane.b32.xlu0 %v2517, 96
        %v3523 = vpop.permute.xlu0 %3522
        %3524 = vrot.lane.b32.xlu0 %v2518, 96
        %v3525 = vpop.permute.xlu0 %3524
        %3526 = vrot.lane.b32.xlu0 %v2519, 96
        %v3527 = vpop.permute.xlu0 %3526
        %3528 = vrot.lane.b32.xlu0 %v2520, 96
        %v3529 = vpop.permute.xlu0 %3528
        %3530 = vrot.lane.b32.xlu0 %v2521, 96
        %v3531 = vpop.permute.xlu0 %3530
        %v3541 = vsel %vm1889, %v3504, 0
        %v3544 = vsel %vm1889, %v3505, 0
        %v3547 = vsel %vm1889, %v3506, 0
        %v3550 = vsel %vm1889, %v3507, 0
        %3552 = vmatpush.msra.mxu0 0.0
        %3553 = vmatpush.msra.mxu0 0.0
        %3554 = vmatpush.msra.mxu0 0.0
        %3555 = vmatpush.msra.mxu0 0.0
        %3556 = vmatpush.msra.mxu0 0.0
        %3557 = vmatpush.msra.mxu0 0.0
        %3558 = vmatpush.msra.mxu0 0.0
        %3559 = vmatpush.msra.mxu0 0.0
        %3560 = vmatpush.msra.mxu0 %v3531
        %3561 = vmatpush.msra.mxu0 %v3529
        %3562 = vmatpush.msra.mxu0 %v3527
        %3563 = vmatpush.msra.mxu0 %v3525
        %3564 = vmatpush.msra.mxu0 %v3523
        %3565 = vmatpush.msra.mxu0 %v3521
        %3566 = vmatpush.msra.mxu0 %v3519
        %3567 = vmatpush.msra.mxu0 %v3517
        %3568 = vmatmul.f32.gmra.mxu0 %v3541
        %v3569 = vpop.f32.mrf.mxu0
        %v3570 = vadd.f32 0.0, %v3569
        %3571 = vmatmul.f32.gmra.mxu0 %v3544
        %v3572 = vpop.f32.mrf.mxu0
        %v3573 = vadd.f32 0.0, %v3572
        %3574 = vmatmul.f32.gmra.mxu0 %v3547
        %v3575 = vpop.f32.mrf.mxu0
        %v3576 = vadd.f32 0.0, %v3575
        %3577 = vmatmul.f32.gmra.mxu0 %v3550
        %v3578 = vpop.f32.mrf.mxu0
        %v3579 = vadd.f32 0.0, %v3578
        %3580 = vdwg.mxu0
        %s3581 = sld [smem:[#allocation11 + $0x80]]
        %v3582 = vstv %s3581
        %v3583 = vmul.f32 %v3570, %v3582
        %v3584 = vmul.f32 %v3573, %v3582
        %v3585 = vmul.f32 %v3576, %v3582
        %v3586 = vmul.f32 %v3579, %v3582
        %v3587 = vadd.f32 %v2412, %v3583
        %v3588 = vadd.f32 %v2413, %v3584
        %v3589 = vadd.f32 %v2414, %v3585
        %v3590 = vadd.f32 %v2415, %v3586
        %s3591 = scalar_lea.vmem %s9, 1
        %v3592 = vld [vmem:[%s3591] sm:$0x1]
        %s3593 = scalar_lea.vmem %s10, 1
        %v3594 = vld [vmem:[%s3593] sm:$0x1]
        %v3595 = vsel %vm871, %v3587, 0.0
        %3596 = vadd.xlane.f32.xlu0 %v3595
        %v3597 = vpop.xlane.xlu0 %3596
        %v3598 = vsel %vm871, %v3588, 0.0
        %3599 = vadd.xlane.f32.xlu0 %v3598
        %v3600 = vpop.xlane.xlu0 %3599
        %v3601 = vsel %vm871, %v3589, 0.0
        %3602 = vadd.xlane.f32.xlu0 %v3601
        %v3603 = vpop.xlane.xlu0 %3602
        %v3604 = vsel %vm871, %v3590, 0.0
        %3605 = vadd.xlane.f32.xlu0 %v3604
        %v3606 = vpop.xlane.xlu0 %3605
        %v3607 = vmul.f32 %v3597, %v2073
        %v3608 = vmul.f32 %v3600, %v2073
        %v3609 = vmul.f32 %v3603, %v2073
        %v3610 = vmul.f32 %v3606, %v2073
        %v3611 = vsub.f32 %v3587, %v3607
        %v3612 = vsub.f32 %v3588, %v3608
        %v3613 = vsub.f32 %v3589, %v3609
        %v3614 = vsub.f32 %v3590, %v3610
        %v3615 = vmul.f32 %v3611, %v3611
        %v3616 = vmul.f32 %v3612, %v3612
        %v3617 = vmul.f32 %v3613, %v3613
        %v3618 = vmul.f32 %v3614, %v3614
        %v3619 = vsel %vm871, %v3615, 0.0
        %3620 = vadd.xlane.f32.xlu0 %v3619
        %v3621 = vpop.xlane.xlu0 %3620
        %v3622 = vsel %vm871, %v3616, 0.0
        %3623 = vadd.xlane.f32.xlu0 %v3622
        %v3624 = vpop.xlane.xlu0 %3623
        %v3625 = vsel %vm871, %v3617, 0.0
        %3626 = vadd.xlane.f32.xlu0 %v3625
        %v3627 = vpop.xlane.xlu0 %3626
        %v3628 = vsel %vm871, %v3618, 0.0
        %3629 = vadd.xlane.f32.xlu0 %v3628
        %v3630 = vpop.xlane.xlu0 %3629
        %v3631 = vmul.f32 %v3621, %v2073
        %v3632 = vmul.f32 %v3624, %v2073
        %v3633 = vmul.f32 %v3627, %v2073
        %v3634 = vmul.f32 %v3630, %v2073
        %v3635 = vadd.f32 %v3631, 1e-05
        %v3636 = vadd.f32 %v3632, 1e-05
        %v3637 = vadd.f32 %v3633, 1e-05
        %v3638 = vadd.f32 %v3634, 1e-05
        %v3639 = vrsqrt.pop %v3635
        %v3640 = vmul.f32 %v3639, %v3635
        %v3641 = vmul.f32 %v3640, %v3639
        %v3642 = vmul.f32 0.5, %v3641
        %v3643 = vsub.f32 1.5, %v3642
        %v3644 = vmul.f32 %v3639, %v3643
        %vm3645 = vweird.f32 %v3635
        %vm3646 = vweird.f32 %v3639
        %vm3647 = vmor %vm3645, %vm3646
        %v3648 = vsel %vm3647, %v3639, %v3644
        %v3649 = vrsqrt.pop %v3636
        %v3650 = vmul.f32 %v3649, %v3636
        %v3651 = vmul.f32 %v3650, %v3649
        %v3652 = vmul.f32 0.5, %v3651
        %v3653 = vsub.f32 1.5, %v3652
        %v3654 = vmul.f32 %v3649, %v3653
        %vm3655 = vweird.f32 %v3636
        %vm3656 = vweird.f32 %v3649
        %vm3657 = vmor %vm3655, %vm3656
        %v3658 = vsel %vm3657, %v3649, %v3654
        %v3659 = vrsqrt.pop %v3637
        %v3660 = vmul.f32 %v3659, %v3637
        %v3661 = vmul.f32 %v3660, %v3659
        %v3662 = vmul.f32 0.5, %v3661
        %v3663 = vsub.f32 1.5, %v3662
        %v3664 = vmul.f32 %v3659, %v3663
        %vm3665 = vweird.f32 %v3637
        %vm3666 = vweird.f32 %v3659
        %vm3667 = vmor %vm3665, %vm3666
        %v3668 = vsel %vm3667, %v3659, %v3664
        %v3669 = vrsqrt.pop %v3638
        %v3670 = vmul.f32 %v3669, %v3638
        %v3671 = vmul.f32 %v3670, %v3669
        %v3672 = vmul.f32 0.5, %v3671
        %v3673 = vsub.f32 1.5, %v3672
        %v3674 = vmul.f32 %v3669, %v3673
        %vm3675 = vweird.f32 %v3638
        %vm3676 = vweird.f32 %v3669
        %vm3677 = vmor %vm3675, %vm3676
        %v3678 = vsel %vm3677, %v3669, %v3674
        %v3679 = vmul.f32 %v3611, %v3648
        %v3680 = vmul.f32 %v3612, %v3658
        %v3681 = vmul.f32 %v3613, %v3668
        %v3682 = vmul.f32 %v3614, %v3678
        %v3684 = vperm.slane %v3592, 0
        %v3686 = vmul.f32 %v3679, %v3684
        %v3687 = vmul.f32 %v3680, %v3684
        %v3688 = vmul.f32 %v3681, %v3684
        %v3689 = vmul.f32 %v3682, %v3684
        %v3691 = vperm.slane %v3594, 0
        %v3693 = vadd.f32 %v3686, %v3691
        %v3694 = vadd.f32 %v3687, %v3691
        %v3695 = vadd.f32 %v3688, %v3691
        %v3696 = vadd.f32 %v3689, %v3691
        %s3697 = scalar_lea.vmem [#allocation9], 32
        %v3698 = vld [vmem:[%s3697] sm:$0xff]
        %v3699 = vld [vmem:[%s3697 + $0x8] sm:$0xff]
        %v3700 = vld [vmem:[%s3697 + $0x10] sm:$0xff]
        %v3701 = vld [vmem:[%s3697 + $0x18] sm:$0xff]
        %s3702 = scalar_lea.vmem %s12, 1
        %v3703 = vld [vmem:[%s3702] sm:$0x1]
        %v3705 = vperm.slane %v3703, 0
        %v3708 = vsel %vm871, %v3693, 0
        %v3711 = vsel %vm871, %v3694, 0
        %v3714 = vsel %vm871, %v3695, 0
        %v3717 = vsel %vm871, %v3696, 0
        %3719 = vmatpush.msra.mxu0 0.0
        %3720 = vmatpush.msra.mxu0 0.0
        %3721 = vmatpush.msra.mxu0 0.0
        %3722 = vmatpush.msra.mxu0 0.0
        %3723 = vmatpush.msra.mxu0 0.0
        %3724 = vmatpush.msra.mxu0 0.0
        %3725 = vmatpush.msra.mxu0 0.0
        %3726 = vmatpush.msra.mxu0 0.0
        %3727 = vmatpush.msra.mxu0 0.0
        %3728 = vmatpush.msra.mxu0 0.0
        %3729 = vmatpush.msra.mxu0 0.0
        %3730 = vmatpush.msra.mxu0 0.0
        %3731 = vmatpush.msra.mxu0 %v3701
        %3732 = vmatpush.msra.mxu0 %v3700
        %3733 = vmatpush.msra.mxu0 %v3699
        %3734 = vmatpush.msra.mxu0 %v3698
        %3735 = vmatmul.f32.gmra.mxu0 %v3708
        %v3736 = vpop.f32.mrf.mxu0
        %v3737 = vadd.f32 %v3705, %v3736
        %3738 = vmatmul.f32.gmra.mxu0 %v3711
        %v3739 = vpop.f32.mrf.mxu0
        %v3740 = vadd.f32 %v3705, %v3739
        %3741 = vmatmul.f32.gmra.mxu0 %v3714
        %v3742 = vpop.f32.mrf.mxu0
        %v3743 = vadd.f32 %v3705, %v3742
        %3744 = vmatmul.f32.gmra.mxu0 %v3717
        %v3745 = vpop.f32.mrf.mxu0
        %v3746 = vadd.f32 %v3705, %v3745
        %3747 = vdwg.mxu0
        %v3748 = vmul.f32 %v3737, 0.5
        %v3749 = vmul.f32 %v3740, 0.5
        %v3750 = vmul.f32 %v3743, 0.5
        %v3751 = vmul.f32 %v3746, 0.5
        %v3752 = vmul.f32 %v3737, 0.044715
        %v3753 = vmul.f32 %v3740, 0.044715
        %v3754 = vmul.f32 %v3743, 0.044715
        %v3755 = vmul.f32 %v3746, 0.044715
        %v3756 = vmul.f32 %v3752, %v3737
        %v3757 = vmul.f32 %v3753, %v3740
        %v3758 = vmul.f32 %v3754, %v3743
        %v3759 = vmul.f32 %v3755, %v3746
        %v3760 = vmul.f32 %v3756, %v3737
        %v3761 = vmul.f32 %v3757, %v3740
        %v3762 = vmul.f32 %v3758, %v3743
        %v3763 = vmul.f32 %v3759, %v3746
        %v3764 = vadd.f32 %v3737, %v3760
        %v3765 = vadd.f32 %v3740, %v3761
        %v3766 = vadd.f32 %v3743, %v3762
        %v3767 = vadd.f32 %v3746, %v3763
        %v3768 = vmul.f32 %v3764, 0.7978846
        %v3769 = vmul.f32 %v3765, 0.7978846
        %v3770 = vmul.f32 %v3766, 0.7978846
        %v3771 = vmul.f32 %v3767, 0.7978846
        %v3772 = vtanh.pop %v3768
        %v3773 = vtanh.pop %v3769
        %v3774 = vtanh.pop %v3770
        %v3775 = vtanh.pop %v3771
        %v3776 = vadd.f32 %v3772, 1.0
        %v3777 = vadd.f32 %v3773, 1.0
        %v3778 = vadd.f32 %v3774, 1.0
        %v3779 = vadd.f32 %v3775, 1.0
        %v3780 = vmul.f32 %v3748, %v3776
        %v3781 = vmul.f32 %v3749, %v3777
        %v3782 = vmul.f32 %v3750, %v3778
        %v3783 = vmul.f32 %v3751, %v3779
        %s3784 = scalar_lea.vmem %s13, 64
        %v3785 = vld [vmem:[%s3784] sm:$0xff]
        %v3786 = vld [vmem:[%s3784 + $0x8] sm:$0xff]
        %v3787 = vld [vmem:[%s3784 + $0x10] sm:$0xff]
        %v3788 = vld [vmem:[%s3784 + $0x18] sm:$0xff]
        %v3789 = vld [vmem:[%s3784 + $0x20] sm:$0xff]
        %v3790 = vld [vmem:[%s3784 + $0x28] sm:$0xff]
        %v3791 = vld [vmem:[%s3784 + $0x30] sm:$0xff]
        %v3792 = vld [vmem:[%s3784 + $0x38] sm:$0xff]
        %s3793 = scalar_lea.vmem %s14, 1
        %v3794 = vld [vmem:[%s3793] sm:$0x1]
        %v3796 = vperm.slane %v3794, 0
        %v3799 = vsel %vm1889, %v3780, 0
        %v3802 = vsel %vm1889, %v3781, 0
        %v3805 = vsel %vm1889, %v3782, 0
        %v3808 = vsel %vm1889, %v3783, 0
        %3810 = vmatpush.msra.mxu0 0.0
        %3811 = vmatpush.msra.mxu0 0.0
        %3812 = vmatpush.msra.mxu0 0.0
        %3813 = vmatpush.msra.mxu0 0.0
        %3814 = vmatpush.msra.mxu0 0.0
        %3815 = vmatpush.msra.mxu0 0.0
        %3816 = vmatpush.msra.mxu0 0.0
        %3817 = vmatpush.msra.mxu0 0.0
        %3818 = vmatpush.msra.mxu0 %v3792
        %3819 = vmatpush.msra.mxu0 %v3791
        %3820 = vmatpush.msra.mxu0 %v3790
        %3821 = vmatpush.msra.mxu0 %v3789
        %3822 = vmatpush.msra.mxu0 %v3788
        %3823 = vmatpush.msra.mxu0 %v3787
        %3824 = vmatpush.msra.mxu0 %v3786
        %3825 = vmatpush.msra.mxu0 %v3785
        %3826 = vmatmul.f32.gmra.mxu0 %v3799
        %v3827 = vpop.f32.mrf.mxu0
        %v3828 = vadd.f32 %v3796, %v3827
        %3829 = vmatmul.f32.gmra.mxu0 %v3802
        %v3830 = vpop.f32.mrf.mxu0
        %v3831 = vadd.f32 %v3796, %v3830
        %3832 = vmatmul.f32.gmra.mxu0 %v3805
        %v3833 = vpop.f32.mrf.mxu0
        %v3834 = vadd.f32 %v3796, %v3833
        %3835 = vmatmul.f32.gmra.mxu0 %v3808
        %v3836 = vpop.f32.mrf.mxu0
        %v3837 = vadd.f32 %v3796, %v3836
        %3838 = vdwg.mxu0
        %s3839 = sld [smem:[#allocation11 + $0x81]]
        %v3840 = vstv %s3839
        %v3841 = vmul.f32 %v3828, %v3840
        %v3842 = vmul.f32 %v3831, %v3840
        %v3843 = vmul.f32 %v3834, %v3840
        %v3844 = vmul.f32 %v3837, %v3840
        %v3845 = vadd.f32 %v3693, %v3841
        %v3846 = vadd.f32 %v3694, %v3842
        %v3847 = vadd.f32 %v3695, %v3843
        %v3848 = vadd.f32 %v3696, %v3844
        %s3849 = scalar_lea.vmem %s15, 1
        %v3850 = vld [vmem:[%s3849] sm:$0x1]
        %s3851 = scalar_lea.vmem %s16, 1
        %v3852 = vld [vmem:[%s3851] sm:$0x1]
        %v3853 = vsel %vm871, %v3845, 0.0
        %3854 = vadd.xlane.f32.xlu0 %v3853
        %v3855 = vpop.xlane.xlu0 %3854
        %v3856 = vsel %vm871, %v3846, 0.0
        %3857 = vadd.xlane.f32.xlu0 %v3856
        %v3858 = vpop.xlane.xlu0 %3857
        %v3859 = vsel %vm871, %v3847, 0.0
        %3860 = vadd.xlane.f32.xlu0 %v3859
        %v3861 = vpop.xlane.xlu0 %3860
        %v3862 = vsel %vm871, %v3848, 0.0
        %3863 = vadd.xlane.f32.xlu0 %v3862
        %v3864 = vpop.xlane.xlu0 %3863
        %v3865 = vmul.f32 %v3855, %v2073
        %v3866 = vmul.f32 %v3858, %v2073
        %v3867 = vmul.f32 %v3861, %v2073
        %v3868 = vmul.f32 %v3864, %v2073
        %v3869 = vsub.f32 %v3845, %v3865
        %v3870 = vsub.f32 %v3846, %v3866
        %v3871 = vsub.f32 %v3847, %v3867
        %v3872 = vsub.f32 %v3848, %v3868
        %v3873 = vmul.f32 %v3869, %v3869
        %v3874 = vmul.f32 %v3870, %v3870
        %v3875 = vmul.f32 %v3871, %v3871
        %v3876 = vmul.f32 %v3872, %v3872
        %v3877 = vsel %vm871, %v3873, 0.0
        %3878 = vadd.xlane.f32.xlu0 %v3877
        %v3879 = vpop.xlane.xlu0 %3878
        %v3880 = vsel %vm871, %v3874, 0.0
        %3881 = vadd.xlane.f32.xlu0 %v3880
        %v3882 = vpop.xlane.xlu0 %3881
        %v3883 = vsel %vm871, %v3875, 0.0
        %3884 = vadd.xlane.f32.xlu0 %v3883
        %v3885 = vpop.xlane.xlu0 %3884
        %v3886 = vsel %vm871, %v3876, 0.0
        %3887 = vadd.xlane.f32.xlu0 %v3886
        %v3888 = vpop.xlane.xlu0 %3887
        %v3889 = vmul.f32 %v3879, %v2073
        %v3890 = vmul.f32 %v3882, %v2073
        %v3891 = vmul.f32 %v3885, %v2073
        %v3892 = vmul.f32 %v3888, %v2073
        %v3893 = vadd.f32 %v3889, 1e-05
        %v3894 = vadd.f32 %v3890, 1e-05
        %v3895 = vadd.f32 %v3891, 1e-05
        %v3896 = vadd.f32 %v3892, 1e-05
        %v3897 = vrsqrt.pop %v3893
        %v3898 = vmul.f32 %v3897, %v3893
        %v3899 = vmul.f32 %v3898, %v3897
        %v3900 = vmul.f32 0.5, %v3899
        %v3901 = vsub.f32 1.5, %v3900
        %v3902 = vmul.f32 %v3897, %v3901
        %vm3903 = vweird.f32 %v3893
        %vm3904 = vweird.f32 %v3897
        %vm3905 = vmor %vm3903, %vm3904
        %v3906 = vsel %vm3905, %v3897, %v3902
        %v3907 = vrsqrt.pop %v3894
        %v3908 = vmul.f32 %v3907, %v3894
        %v3909 = vmul.f32 %v3908, %v3907
        %v3910 = vmul.f32 0.5, %v3909
        %v3911 = vsub.f32 1.5, %v3910
        %v3912 = vmul.f32 %v3907, %v3911
        %vm3913 = vweird.f32 %v3894
        %vm3914 = vweird.f32 %v3907
        %vm3915 = vmor %vm3913, %vm3914
        %v3916 = vsel %vm3915, %v3907, %v3912
        %v3917 = vrsqrt.pop %v3895
        %v3918 = vmul.f32 %v3917, %v3895
        %v3919 = vmul.f32 %v3918, %v3917
        %v3920 = vmul.f32 0.5, %v3919
        %v3921 = vsub.f32 1.5, %v3920
        %v3922 = vmul.f32 %v3917, %v3921
        %vm3923 = vweird.f32 %v3895
        %vm3924 = vweird.f32 %v3917
        %vm3925 = vmor %vm3923, %vm3924
        %v3926 = vsel %vm3925, %v3917, %v3922
        %v3927 = vrsqrt.pop %v3896
        %v3928 = vmul.f32 %v3927, %v3896
        %v3929 = vmul.f32 %v3928, %v3927
        %v3930 = vmul.f32 0.5, %v3929
        %v3931 = vsub.f32 1.5, %v3930
        %v3932 = vmul.f32 %v3927, %v3931
        %vm3933 = vweird.f32 %v3896
        %vm3934 = vweird.f32 %v3927
        %vm3935 = vmor %vm3933, %vm3934
        %v3936 = vsel %vm3935, %v3927, %v3932
        %v3937 = vmul.f32 %v3869, %v3906
        %v3938 = vmul.f32 %v3870, %v3916
        %v3939 = vmul.f32 %v3871, %v3926
        %v3940 = vmul.f32 %v3872, %v3936
        %v3942 = vperm.slane %v3850, 0
        %v3944 = vmul.f32 %v3937, %v3942
        %v3945 = vmul.f32 %v3938, %v3942
        %v3946 = vmul.f32 %v3939, %v3942
        %v3947 = vmul.f32 %v3940, %v3942
        %v3949 = vperm.slane %v3852, 0
        %v3951 = vadd.f32 %v3944, %v3949
        %v3952 = vadd.f32 %v3945, %v3949
        %v3953 = vadd.f32 %v3946, %v3949
        %v3954 = vadd.f32 %v3947, %v3949
        %3955 = vst.msk [vmem:[%s847] sm:$0xff] %vm871, %v3951
        %3956 = vst.msk [vmem:[%s847 + $0x8] sm:$0xff] %vm871, %v3952
        %3957 = vst.msk [vmem:[%s847 + $0x10] sm:$0xff] %vm871, %v3953
        %3958 = vst.msk [vmem:[%s847 + $0x18] sm:$0xff] %vm871, %v3954
        %s3959 = smul.u32 4, %s37
        %p3960 = scmp.lt.s32.totalorder %s3959, 7
        %s3961 = scalar_select %p3960, %s3959, 7
        %s3962 = smul.addr %s3961, 8
        %s3963 = scalar_lea.vmem %s18, %s3962
        // Predicated region
        $region151: #{tpu_custom_call.1} parent=125 // pred_check
          %p3964 = pneg %p453
        $region152: #{tpu_custom_call.1} parent=125 // pred_check_branch
          %3966 = sbr.rel (%p3964) target = $region154
        $region153: #{tpu_custom_call.1} parent=125 // pred_region
          %s3967 = smul.u32 4, %s37
        $region154: #{tpu_custom_call.1} parent=125 // pred_fallthru
          _
      $region126: #{tpu_custom_call.1} parent=5 // pred_fallthru
        _
      %p3968 = scmp.le.s32.totalorder 2, %s32
      // Predicated region
      $region155: #{tpu_custom_call.1} parent=5 // pred_check
        %p3969 = pneg %p3968
      $region156: #{tpu_custom_call.1} parent=5 // pred_check_branch
        %3971 = sbr.rel (%p3969) target = $region158
      $region157: #{tpu_custom_call.1} parent=5 // pred_region
        %s3972 = ssub.s32 %s32, 2
        // Predicated region
        $region159: #{tpu_custom_call.1} parent=157 // pred_check
          %p3973 = pneg %p459
        $region160: #{tpu_custom_call.1} parent=157 // pred_check_branch
          %3975 = sbr.rel (%p3973) target = $region162
        $region161: #{tpu_custom_call.1} parent=157 // pred_region
          %s3976 = smul.u32 4, %s38
          %p3977 = scmp.lt.s32.totalorder %s3976, 7
          %s3978 = scalar_select %p3977, %s3976, 7
          %s3979 = smul.addr %s3978, 8
          %s3980 = scalar_lea.vmem %s18, %s3979
        $region162: #{tpu_custom_call.1} parent=157 // pred_fallthru
          _
      $region158: #{tpu_custom_call.1} parent=5 // pred_fallthru
        _
    $region6: #{tpu_custom_call.1} parent=1 // loop_footer
      %s36 = sadd.s32 1, %s32
    $region7: #{tpu_custom_call.1} parent=1 // loop_footer_branch
      %31 = sbr.rel target = $region3
    $region8: #{tpu_custom_call.1} parent=1 // loop_exit
      _
    %3981 = vsyncpa [#allocation4], 1
    %s3982 = scalar_lea.sflag [#allocation4], 1
    %3983 = vsyncpa %s3982, 1
    %3984 = vsyncpa [#allocation7], 1
    %s3985 = scalar_lea.sflag [#allocation7], 1
    %3986 = vsyncpa %s3985, 1
    %3987 = vsyncpa [#allocation10], 1
    %3988 = vsyncpa [#allocation5], 1
    %s3989 = scalar_lea.sflag [#allocation5], 1
    %3990 = vsyncpa %s3989, 1

</llo_original>
